<compile_context>
chip_gen: v5e
topology: v5e:2x2
jax: 0.10.0
libtpu: 0.0.40
codegen_flags: <defaults>
</compile_context>

<pallas_src>
import functools

import jax
import jax.numpy as jnp
from jax.experimental import pallas as pl
from jax.experimental.pallas import tpu as pltpu

BN_EPS = 1e-5


# ---------------------------------------------------------------------------
# Pallas kernel: fused 3x3 stride-2 conv + folded BatchNorm for one
# (batch element, output-row tile).
# ---------------------------------------------------------------------------
def _conv3x3s2_bn_kernel(p0e_ref, p0o_ref, p1e_ref, p1o_ref, p2e_ref, p2o_ref,
                         w_ref, shift_ref, o_ref, *, t_oh, wout, cout):
  # p<dh><e|o>_ref : (t_oh, wout + 1, Cin) bf16 parity plane: row offset dh,
  #                  even/odd column parity (column halo included).
  # w_ref          : (3, 3, Cin, Cout) bf16, BN scale already folded in.
  # shift_ref      : (1, Cout) f32, fused BN shift + conv bias.
  # o_ref          : (t_oh, wout, Cout)
  planes = (p0e_ref, p0o_ref, p1e_ref, p1o_ref, p2e_ref, p2o_ref)
  rows = t_oh * wout
  acc = jnp.zeros((rows, cout), jnp.float32)
  for dh in range(3):
    for dw in range(3):
      pref = planes[2 * dh + (dw % 2)]
      cw = dw // 2
      patch = pref[:, cw:cw + wout, :]                   # (t_oh, wout, Cin)
      cin = patch.shape[-1]
      acc = acc + jnp.dot(patch.reshape(rows, cin),
                          w_ref[dh, dw, :, :],
                          preferred_element_type=jnp.float32)
  y = acc + shift_ref[...]                               # conv bias + BN, fused
  o_ref[...] = y.reshape(t_oh, wout, cout).astype(o_ref.dtype)


# ---------------------------------------------------------------------------
# Wrapper for one DownSampling layer
# ---------------------------------------------------------------------------
def _choose_row_tile(hout, wout, cin, cout, out_bytes,
                     budget=16 * 1024 * 1024):
  """Largest divisor of hout whose double-buffered block fits the budget."""
  best = 1
  for t in range(1, hout + 1):
    if hout % t:
      continue
    in_b = 6 * t * (wout + 1) * cin * 2                  # bf16 parity planes
    out_b = t * wout * cout * out_bytes
    acc_b = t * wout * cout * 4                          # f32 accumulator
    if t == 1 or 2 * (in_b + out_b) + acc_b <= budget:
      best = t
  return best


def downsample(x_nhwc, p, *, out_dtype=jnp.float32):
  """Conv2d(3x3, stride 2, pad 1) + inference BatchNorm, fully fused."""
  bsz, h, w, cin = x_nhwc.shape
  assert h % 2 == 0 and w % 2 == 0, "StemConv expects even spatial dims"
  wt, bias, bn = p["w"], p["b"], p["bn"]                 # wt: (3, 3, Cin, Cout)
  cout = wt.shape[-1]
  hout, wout = h // 2, w // 2

  # Fold inference BatchNorm (+ conv bias) into weights / a single shift.
  s = bn["gamma"] * jax.lax.rsqrt(bn["var"] + BN_EPS)    # (Cout,)
  shift = (bn["beta"] + (bias - bn["mean"]) * s).reshape(1, cout)
  shift = shift.astype(jnp.float32)
  w_f = (wt * s).astype(jnp.bfloat16)

  # Parity planes of the zero-padded input: 3 row offsets x 2 column parities.
  # Plane (dh, cp) row i / col j holds padded pixel (2*i + dh, 2*j + cp), so
  # tap (dh, dw) of output (oh, ow) is plane[2*dh + dw%2][oh, ow + dw//2] --
  # a contiguous slice, no stride-2 access and no per-tile halo restack.
  xp = jnp.pad(x_nhwc.astype(jnp.bfloat16), ((0, 0), (1, 1), (1, 1), (0, 0)))
  planes = []
  for dh in range(3):
    rplane = xp[:, dh:dh + 2 * hout:2]                   # (B, hout, 2*wout+2, Cin)
    for cp in (0, 1):
      planes.append(rplane[:, :, cp::2, :])              # (B, hout, wout+1, Cin)

  out_bytes = jnp.dtype(out_dtype).itemsize
  t_oh = _choose_row_tile(hout, wout, cin, cout, out_bytes)
  n_t = hout // t_oh

  plane_spec = pl.BlockSpec((None, t_oh, wout + 1, cin),
                            lambda bi, ri: (bi, ri, 0, 0))
  return pl.pallas_call(
      functools.partial(_conv3x3s2_bn_kernel, t_oh=t_oh, wout=wout, cout=cout),
      out_shape=jax.ShapeDtypeStruct((bsz, hout, wout, cout), out_dtype),
      grid=(bsz, n_t),
      in_specs=[plane_spec] * 6 + [
          pl.BlockSpec((3, 3, cin, cout), lambda bi, ri: (0, 0, 0, 0)),
          pl.BlockSpec((1, cout), lambda bi, ri: (0, 0)),
      ],
      out_specs=pl.BlockSpec((None, t_oh, wout, cout),
                             lambda bi, ri: (bi, ri, 0, 0)),
      compiler_params=pltpu.CompilerParams(
          dimension_semantics=("parallel", "parallel"),
          vmem_limit_bytes=32 * 1024 * 1024),
  )(*planes, w_f, shift)


# ---------------------------------------------------------------------------
# StemConv forward (NCHW in -> NCHW out)
# ---------------------------------------------------------------------------
def stem_conv_forward(x_nchw, params):
  x = jnp.transpose(x_nchw, (0, 2, 3, 1)).astype(jnp.float32)   # NCHW -> NHWC
  layers = params["down"]
  for li, p in enumerate(layers):
    last = li == len(layers) - 1
    # bf16 intermediate between the two downsample layers (it is consumed as
    # bf16 by the next conv anyway); final output stays f32.
    x = downsample(x, p, out_dtype=jnp.float32 if last else jnp.bfloat16)
  return jnp.transpose(x, (0, 3, 1, 2))                         # back to NCHW


# ---------------------------------------------------------------------------
# Pure-JAX reference (f32) for an in-script correctness check
# ---------------------------------------------------------------------------
def _downsample_reference(x_nhwc, p):
  y = jax.lax.conv_general_dilated(
      x_nhwc, p["w"], window_strides=(2, 2), padding=((1, 1), (1, 1)),
      dimension_numbers=("NHWC", "HWIO", "NHWC"),
      precision=jax.lax.Precision.HIGHEST)
  y = y + p["b"]
  bn = p["bn"]
  s = bn["gamma"] * jax.lax.rsqrt(bn["var"] + BN_EPS)
  return (y - bn["mean"]) * s + bn["beta"]


def stem_conv_reference(x_nchw, params):
  x = jnp.transpose(x_nchw, (0, 2, 3, 1)).astype(jnp.float32)
  for p in params["down"]:
    x = _downsample_reference(x, p)
  return jnp.transpose(x, (0, 3, 1, 2))


# ---------------------------------------------------------------------------
# Deterministic synthetic parameter initialization
# ---------------------------------------------------------------------------
def init_params(key, in_channels, out_channels):
  keys = iter(jax.random.split(key, 16))

  def nrm(shape, scale=0.1):
    return scale * jax.random.normal(next(keys), shape, jnp.float32)

  def bn_params(c):
    return dict(gamma=1.0 + nrm((c,)), beta=nrm((c,)), mean=nrm((c,)),
                var=0.5 + jax.random.uniform(next(keys), (c,), jnp.float32))

  def down_params(cin, cout):
    return dict(w=nrm((3, 3, cin, cout)), b=nrm((cout,)), bn=bn_params(cout))

  mid = out_channels // 2
  return dict(down=[down_params(in_channels, mid),
                    down_params(mid, out_channels)])


if __name__ == "__main__":
  key = jax.random.PRNGKey(0)
  kp, kx = jax.random.split(key)

  # StemConv(in_channels=3, out_channels=32): 3 -> 16 -> 32, spatial / 4.
  B, CIN, H, W = 2, 3, 32, 32
  OUT_C = 32

  params = init_params(kp, CIN, OUT_C)
  x = jax.random.normal(kx, (B, CIN, H, W), jnp.float32)

  out = jax.block_until_ready(jax.jit(stem_conv_forward)(x, params))
  assert out.shape == (B, OUT_C, H // 4, W // 4), out.shape
  assert bool(jnp.all(jnp.isfinite(out)))

  ref = jax.block_until_ready(jax.jit(stem_conv_reference)(x, params))
  max_err = float(jnp.max(jnp.abs(out - ref)))
  assert max_err < 5e-2, f"max |pallas - reference| = {max_err}"

  print("KERNEL_OK")
</pallas_src>

<mosaic_0001>
module attributes {stable_mosaic.version = 11 : i64} {
  func.func @_conv3x3s2_bn_kernel(%arg0: i32, %arg1: i32, %arg2: memref<1x16x17x3xbf16, #tpu.memory_space<vmem>>, %arg3: memref<1x16x17x3xbf16, #tpu.memory_space<vmem>>, %arg4: memref<1x16x17x3xbf16, #tpu.memory_space<vmem>>, %arg5: memref<1x16x17x3xbf16, #tpu.memory_space<vmem>>, %arg6: memref<1x16x17x3xbf16, #tpu.memory_space<vmem>>, %arg7: memref<1x16x17x3xbf16, #tpu.memory_space<vmem>>, %arg8: memref<3x3x3x16xbf16, #tpu.memory_space<vmem>>, %arg9: memref<1x16xf32, #tpu.memory_space<vmem>>, %arg10: memref<1x16x16x16xbf16, #tpu.memory_space<vmem>>) attributes {dimension_semantics = [#tpu.dimension_semantics<parallel>, #tpu.dimension_semantics<parallel>], iteration_bounds = array<i64: 2, 1>, scalar_prefetch = 0 : i64, scratch_operands = 0 : i64, tpu.core_type = #tpu.core_type<tc>, window_params = [{transform_indices = @transform_0, window_bounds = array<i64: 1, 16, 17, 3>}, {transform_indices = @transform_1, window_bounds = array<i64: 1, 16, 17, 3>}, {transform_indices = @transform_2, window_bounds = array<i64: 1, 16, 17, 3>}, {transform_indices = @transform_3, window_bounds = array<i64: 1, 16, 17, 3>}, {transform_indices = @transform_4, window_bounds = array<i64: 1, 16, 17, 3>}, {transform_indices = @transform_5, window_bounds = array<i64: 1, 16, 17, 3>}, {pipeline_mode = #tpu.pipeline_mode<synchronous>, transform_indices = @transform_6, window_bounds = array<i64: 3, 3, 3, 16>}, {pipeline_mode = #tpu.pipeline_mode<synchronous>, transform_indices = @transform_7, window_bounds = array<i64: 1, 16>}, {transform_indices = @transform_8, window_bounds = array<i64: 1, 16, 16, 16>}]} {
    %cst = arith.constant 0.000000e+00 : f32
    %0 = vector.broadcast %cst : f32 to vector<256x16xf32>
    %c0 = arith.constant 0 : index
    %c0_0 = arith.constant 0 : index
    %c0_1 = arith.constant 0 : index
    %c0_2 = arith.constant 0 : index
    %1 = vector.load %arg2[%c0, %c0_0, %c0_1, %c0_2] : memref<1x16x17x3xbf16, #tpu.memory_space<vmem>>, vector<1x16x16x3xbf16>
    %2 = vector.shape_cast %1 : vector<1x16x16x3xbf16> to vector<16x16x3xbf16>
    %3 = vector.shape_cast %2 : vector<16x16x3xbf16> to vector<256x3xbf16>
    %c0_3 = arith.constant 0 : index
    %c0_4 = arith.constant 0 : index
    %c0_5 = arith.constant 0 : index
    %c0_6 = arith.constant 0 : index
    %4 = vector.load %arg8[%c0_3, %c0_4, %c0_5, %c0_6] : memref<3x3x3x16xbf16, #tpu.memory_space<vmem>>, vector<1x1x3x16xbf16>
    %5 = vector.shape_cast %4 : vector<1x1x3x16xbf16> to vector<3x16xbf16>
    %cst_7 = arith.constant dense<0.000000e+00> : vector<256x16xf32>
    %6 = tpu.matmul %3, %5, %cst_7 {dimension_numbers = #tpu.dot_dimension_numbers<[1], [0], [0], [1], [0, 0, 1, 1], [], []>} : vector<256x3xbf16>, vector<3x16xbf16>, vector<256x16xf32> -> vector<256x16xf32>
    %7 = arith.addf %0, %6 : vector<256x16xf32>
    %c0_8 = arith.constant 0 : index
    %c0_9 = arith.constant 0 : index
    %c0_10 = arith.constant 0 : index
    %c0_11 = arith.constant 0 : index
    %8 = vector.load %arg3[%c0_8, %c0_9, %c0_10, %c0_11] : memref<1x16x17x3xbf16, #tpu.memory_space<vmem>>, vector<1x16x16x3xbf16>
    %9 = vector.shape_cast %8 : vector<1x16x16x3xbf16> to vector<16x16x3xbf16>
    %10 = vector.shape_cast %9 : vector<16x16x3xbf16> to vector<256x3xbf16>
    %c0_12 = arith.constant 0 : index
    %c1 = arith.constant 1 : index
    %c0_13 = arith.constant 0 : index
    %c0_14 = arith.constant 0 : index
    %11 = vector.load %arg8[%c0_12, %c1, %c0_13, %c0_14] : memref<3x3x3x16xbf16, #tpu.memory_space<vmem>>, vector<1x1x3x16xbf16>
    %12 = vector.shape_cast %11 : vector<1x1x3x16xbf16> to vector<3x16xbf16>
    %cst_15 = arith.constant dense<0.000000e+00> : vector<256x16xf32>
    %13 = tpu.matmul %10, %12, %cst_15 {dimension_numbers = #tpu.dot_dimension_numbers<[1], [0], [0], [1], [0, 0, 1, 1], [], []>} : vector<256x3xbf16>, vector<3x16xbf16>, vector<256x16xf32> -> vector<256x16xf32>
    %14 = arith.addf %7, %13 : vector<256x16xf32>
    %c0_16 = arith.constant 0 : index
    %c0_17 = arith.constant 0 : index
    %c1_18 = arith.constant 1 : index
    %c0_19 = arith.constant 0 : index
    %15 = vector.load %arg2[%c0_16, %c0_17, %c1_18, %c0_19] : memref<1x16x17x3xbf16, #tpu.memory_space<vmem>>, vector<1x16x16x3xbf16>
    %16 = vector.shape_cast %15 : vector<1x16x16x3xbf16> to vector<16x16x3xbf16>
    %17 = vector.shape_cast %16 : vector<16x16x3xbf16> to vector<256x3xbf16>
    %c0_20 = arith.constant 0 : index
    %c2 = arith.constant 2 : index
    %c0_21 = arith.constant 0 : index
    %c0_22 = arith.constant 0 : index
    %18 = vector.load %arg8[%c0_20, %c2, %c0_21, %c0_22] : memref<3x3x3x16xbf16, #tpu.memory_space<vmem>>, vector<1x1x3x16xbf16>
    %19 = vector.shape_cast %18 : vector<1x1x3x16xbf16> to vector<3x16xbf16>
    %cst_23 = arith.constant dense<0.000000e+00> : vector<256x16xf32>
    %20 = tpu.matmul %17, %19, %cst_23 {dimension_numbers = #tpu.dot_dimension_numbers<[1], [0], [0], [1], [0, 0, 1, 1], [], []>} : vector<256x3xbf16>, vector<3x16xbf16>, vector<256x16xf32> -> vector<256x16xf32>
    %21 = arith.addf %14, %20 : vector<256x16xf32>
    %c0_24 = arith.constant 0 : index
    %c0_25 = arith.constant 0 : index
    %c0_26 = arith.constant 0 : index
    %c0_27 = arith.constant 0 : index
    %22 = vector.load %arg4[%c0_24, %c0_25, %c0_26, %c0_27] : memref<1x16x17x3xbf16, #tpu.memory_space<vmem>>, vector<1x16x16x3xbf16>
    %23 = vector.shape_cast %22 : vector<1x16x16x3xbf16> to vector<16x16x3xbf16>
    %24 = vector.shape_cast %23 : vector<16x16x3xbf16> to vector<256x3xbf16>
    %c1_28 = arith.constant 1 : index
    %c0_29 = arith.constant 0 : index
    %c0_30 = arith.constant 0 : index
    %c0_31 = arith.constant 0 : index
    %25 = vector.load %arg8[%c1_28, %c0_29, %c0_30, %c0_31] : memref<3x3x3x16xbf16, #tpu.memory_space<vmem>>, vector<1x1x3x16xbf16>
    %26 = vector.shape_cast %25 : vector<1x1x3x16xbf16> to vector<3x16xbf16>
    %cst_32 = arith.constant dense<0.000000e+00> : vector<256x16xf32>
    %27 = tpu.matmul %24, %26, %cst_32 {dimension_numbers = #tpu.dot_dimension_numbers<[1], [0], [0], [1], [0, 0, 1, 1], [], []>} : vector<256x3xbf16>, vector<3x16xbf16>, vector<256x16xf32> -> vector<256x16xf32>
    %28 = arith.addf %21, %27 : vector<256x16xf32>
    %c0_33 = arith.constant 0 : index
    %c0_34 = arith.constant 0 : index
    %c0_35 = arith.constant 0 : index
    %c0_36 = arith.constant 0 : index
    %29 = vector.load %arg5[%c0_33, %c0_34, %c0_35, %c0_36] : memref<1x16x17x3xbf16, #tpu.memory_space<vmem>>, vector<1x16x16x3xbf16>
    %30 = vector.shape_cast %29 : vector<1x16x16x3xbf16> to vector<16x16x3xbf16>
    %31 = vector.shape_cast %30 : vector<16x16x3xbf16> to vector<256x3xbf16>
    %c1_37 = arith.constant 1 : index
    %c1_38 = arith.constant 1 : index
    %c0_39 = arith.constant 0 : index
    %c0_40 = arith.constant 0 : index
    %32 = vector.load %arg8[%c1_37, %c1_38, %c0_39, %c0_40] : memref<3x3x3x16xbf16, #tpu.memory_space<vmem>>, vector<1x1x3x16xbf16>
    %33 = vector.shape_cast %32 : vector<1x1x3x16xbf16> to vector<3x16xbf16>
    %cst_41 = arith.constant dense<0.000000e+00> : vector<256x16xf32>
    %34 = tpu.matmul %31, %33, %cst_41 {dimension_numbers = #tpu.dot_dimension_numbers<[1], [0], [0], [1], [0, 0, 1, 1], [], []>} : vector<256x3xbf16>, vector<3x16xbf16>, vector<256x16xf32> -> vector<256x16xf32>
    %35 = arith.addf %28, %34 : vector<256x16xf32>
    %c0_42 = arith.constant 0 : index
    %c0_43 = arith.constant 0 : index
    %c1_44 = arith.constant 1 : index
    %c0_45 = arith.constant 0 : index
    %36 = vector.load %arg4[%c0_42, %c0_43, %c1_44, %c0_45] : memref<1x16x17x3xbf16, #tpu.memory_space<vmem>>, vector<1x16x16x3xbf16>
    %37 = vector.shape_cast %36 : vector<1x16x16x3xbf16> to vector<16x16x3xbf16>
    %38 = vector.shape_cast %37 : vector<16x16x3xbf16> to vector<256x3xbf16>
    %c1_46 = arith.constant 1 : index
    %c2_47 = arith.constant 2 : index
    %c0_48 = arith.constant 0 : index
    %c0_49 = arith.constant 0 : index
    %39 = vector.load %arg8[%c1_46, %c2_47, %c0_48, %c0_49] : memref<3x3x3x16xbf16, #tpu.memory_space<vmem>>, vector<1x1x3x16xbf16>
    %40 = vector.shape_cast %39 : vector<1x1x3x16xbf16> to vector<3x16xbf16>
    %cst_50 = arith.constant dense<0.000000e+00> : vector<256x16xf32>
    %41 = tpu.matmul %38, %40, %cst_50 {dimension_numbers = #tpu.dot_dimension_numbers<[1], [0], [0], [1], [0, 0, 1, 1], [], []>} : vector<256x3xbf16>, vector<3x16xbf16>, vector<256x16xf32> -> vector<256x16xf32>
    %42 = arith.addf %35, %41 : vector<256x16xf32>
    %c0_51 = arith.constant 0 : index
    %c0_52 = arith.constant 0 : index
    %c0_53 = arith.constant 0 : index
    %c0_54 = arith.constant 0 : index
    %43 = vector.load %arg6[%c0_51, %c0_52, %c0_53, %c0_54] : memref<1x16x17x3xbf16, #tpu.memory_space<vmem>>, vector<1x16x16x3xbf16>
    %44 = vector.shape_cast %43 : vector<1x16x16x3xbf16> to vector<16x16x3xbf16>
    %45 = vector.shape_cast %44 : vector<16x16x3xbf16> to vector<256x3xbf16>
    %c2_55 = arith.constant 2 : index
    %c0_56 = arith.constant 0 : index
    %c0_57 = arith.constant 0 : index
    %c0_58 = arith.constant 0 : index
    %46 = vector.load %arg8[%c2_55, %c0_56, %c0_57, %c0_58] : memref<3x3x3x16xbf16, #tpu.memory_space<vmem>>, vector<1x1x3x16xbf16>
    %47 = vector.shape_cast %46 : vector<1x1x3x16xbf16> to vector<3x16xbf16>
    %cst_59 = arith.constant dense<0.000000e+00> : vector<256x16xf32>
    %48 = tpu.matmul %45, %47, %cst_59 {dimension_numbers = #tpu.dot_dimension_numbers<[1], [0], [0], [1], [0, 0, 1, 1], [], []>} : vector<256x3xbf16>, vector<3x16xbf16>, vector<256x16xf32> -> vector<256x16xf32>
    %49 = arith.addf %42, %48 : vector<256x16xf32>
    %c0_60 = arith.constant 0 : index
    %c0_61 = arith.constant 0 : index
    %c0_62 = arith.constant 0 : index
    %c0_63 = arith.constant 0 : index
    %50 = vector.load %arg7[%c0_60, %c0_61, %c0_62, %c0_63] : memref<1x16x17x3xbf16, #tpu.memory_space<vmem>>, vector<1x16x16x3xbf16>
    %51 = vector.shape_cast %50 : vector<1x16x16x3xbf16> to vector<16x16x3xbf16>
    %52 = vector.shape_cast %51 : vector<16x16x3xbf16> to vector<256x3xbf16>
    %c2_64 = arith.constant 2 : index
    %c1_65 = arith.constant 1 : index
    %c0_66 = arith.constant 0 : index
    %c0_67 = arith.constant 0 : index
    %53 = vector.load %arg8[%c2_64, %c1_65, %c0_66, %c0_67] : memref<3x3x3x16xbf16, #tpu.memory_space<vmem>>, vector<1x1x3x16xbf16>
    %54 = vector.shape_cast %53 : vector<1x1x3x16xbf16> to vector<3x16xbf16>
    %cst_68 = arith.constant dense<0.000000e+00> : vector<256x16xf32>
    %55 = tpu.matmul %52, %54, %cst_68 {dimension_numbers = #tpu.dot_dimension_numbers<[1], [0], [0], [1], [0, 0, 1, 1], [], []>} : vector<256x3xbf16>, vector<3x16xbf16>, vector<256x16xf32> -> vector<256x16xf32>
    %56 = arith.addf %49, %55 : vector<256x16xf32>
    %c0_69 = arith.constant 0 : index
    %c0_70 = arith.constant 0 : index
    %c1_71 = arith.constant 1 : index
    %c0_72 = arith.constant 0 : index
    %57 = vector.load %arg6[%c0_69, %c0_70, %c1_71, %c0_72] : memref<1x16x17x3xbf16, #tpu.memory_space<vmem>>, vector<1x16x16x3xbf16>
    %58 = vector.shape_cast %57 : vector<1x16x16x3xbf16> to vector<16x16x3xbf16>
    %59 = vector.shape_cast %58 : vector<16x16x3xbf16> to vector<256x3xbf16>
    %c2_73 = arith.constant 2 : index
    %c2_74 = arith.constant 2 : index
    %c0_75 = arith.constant 0 : index
    %c0_76 = arith.constant 0 : index
    %60 = vector.load %arg8[%c2_73, %c2_74, %c0_75, %c0_76] : memref<3x3x3x16xbf16, #tpu.memory_space<vmem>>, vector<1x1x3x16xbf16>
    %61 = vector.shape_cast %60 : vector<1x1x3x16xbf16> to vector<3x16xbf16>
    %cst_77 = arith.constant dense<0.000000e+00> : vector<256x16xf32>
    %62 = tpu.matmul %59, %61, %cst_77 {dimension_numbers = #tpu.dot_dimension_numbers<[1], [0], [0], [1], [0, 0, 1, 1], [], []>} : vector<256x3xbf16>, vector<3x16xbf16>, vector<256x16xf32> -> vector<256x16xf32>
    %63 = arith.addf %56, %62 : vector<256x16xf32>
    %c0_78 = arith.constant 0 : index
    %c0_79 = arith.constant 0 : index
    %64 = vector.load %arg9[%c0_78, %c0_79] : memref<1x16xf32, #tpu.memory_space<vmem>>, vector<1x16xf32>
    %65 = vector.broadcast %64 : vector<1x16xf32> to vector<256x16xf32>
    %66 = arith.addf %63, %65 : vector<256x16xf32>
    %67 = vector.shape_cast %66 : vector<256x16xf32> to vector<16x16x16xf32>
    %68 = arith.truncf %67 : vector<16x16x16xf32> to vector<16x16x16xbf16>
    %c0_80 = arith.constant 0 : index
    %c0_81 = arith.constant 0 : index
    %c0_82 = arith.constant 0 : index
    %c0_83 = arith.constant 0 : index
    %69 = vector.load %arg10[%c0_80, %c0_81, %c0_82, %c0_83] : memref<1x16x16x16xbf16, #tpu.memory_space<vmem>>, vector<1x16x16x16xbf16>
    %70 = vector.shape_cast %69 : vector<1x16x16x16xbf16> to vector<16x16x16xbf16>
    %71 = vector.shape_cast %68 : vector<16x16x16xbf16> to vector<1x16x16x16xbf16>
    tpu.vector_store %arg10[%c0_80, %c0_81, %c0_82, %c0_83], %71 {strides = array<i32>} : memref<1x16x16x16xbf16, #tpu.memory_space<vmem>>, vector<1x16x16x16xbf16>,
    return
  }
  func.func @transform_0(%arg0: i32, %arg1: i32) -> (i32, i32, i32, i32) {
    %c0_i32 = arith.constant 0 : i32
    %c0_i32_0 = arith.constant 0 : i32
    %c0_i32_1 = arith.constant 0 : i32
    return %arg0, %arg1, %c0_i32, %c0_i32_0 : i32, i32, i32, i32
  }
  func.func @transform_1(%arg0: i32, %arg1: i32) -> (i32, i32, i32, i32) {
    %c0_i32 = arith.constant 0 : i32
    %c0_i32_0 = arith.constant 0 : i32
    %c0_i32_1 = arith.constant 0 : i32
    return %arg0, %arg1, %c0_i32, %c0_i32_0 : i32, i32, i32, i32
  }
  func.func @transform_2(%arg0: i32, %arg1: i32) -> (i32, i32, i32, i32) {
    %c0_i32 = arith.constant 0 : i32
    %c0_i32_0 = arith.constant 0 : i32
    %c0_i32_1 = arith.constant 0 : i32
    return %arg0, %arg1, %c0_i32, %c0_i32_0 : i32, i32, i32, i32
  }
  func.func @transform_3(%arg0: i32, %arg1: i32) -> (i32, i32, i32, i32) {
    %c0_i32 = arith.constant 0 : i32
    %c0_i32_0 = arith.constant 0 : i32
    %c0_i32_1 = arith.constant 0 : i32
    return %arg0, %arg1, %c0_i32, %c0_i32_0 : i32, i32, i32, i32
  }
  func.func @transform_4(%arg0: i32, %arg1: i32) -> (i32, i32, i32, i32) {
    %c0_i32 = arith.constant 0 : i32
    %c0_i32_0 = arith.constant 0 : i32
    %c0_i32_1 = arith.constant 0 : i32
    return %arg0, %arg1, %c0_i32, %c0_i32_0 : i32, i32, i32, i32
  }
  func.func @transform_5(%arg0: i32, %arg1: i32) -> (i32, i32, i32, i32) {
    %c0_i32 = arith.constant 0 : i32
    %c0_i32_0 = arith.constant 0 : i32
    %c0_i32_1 = arith.constant 0 : i32
    return %arg0, %arg1, %c0_i32, %c0_i32_0 : i32, i32, i32, i32
  }
  func.func @transform_6(%arg0: i32, %arg1: i32) -> (i32, i32, i32, i32) {
    %c0_i32 = arith.constant 0 : i32
    %c0_i32_0 = arith.constant 0 : i32
    %c0_i32_1 = arith.constant 0 : i32
    %c0_i32_2 = arith.constant 0 : i32
    %c0_i32_3 = arith.constant 0 : i32
    return %c0_i32, %c0_i32_0, %c0_i32_1, %c0_i32_2 : i32, i32, i32, i32
  }
  func.func @transform_7(%arg0: i32, %arg1: i32) -> (i32, i32) {
    %c0_i32 = arith.constant 0 : i32
    %c0_i32_0 = arith.constant 0 : i32
    %c0_i32_1 = arith.constant 0 : i32
    return %c0_i32, %c0_i32_0 : i32, i32
  }
  func.func @transform_8(%arg0: i32, %arg1: i32) -> (i32, i32, i32, i32) {
    %c0_i32 = arith.constant 0 : i32
    %c0_i32_0 = arith.constant 0 : i32
    %c0_i32_1 = arith.constant 0 : i32
    return %arg0, %arg1, %c0_i32, %c0_i32_0 : i32, i32, i32, i32
  }
}

module attributes {stable_mosaic.version = 11 : i64} {
  func.func @_conv3x3s2_bn_kernel(%arg0: i32, %arg1: i32, %arg2: memref<1x8x9x16xbf16, #tpu.memory_space<vmem>>, %arg3: memref<1x8x9x16xbf16, #tpu.memory_space<vmem>>, %arg4: memref<1x8x9x16xbf16, #tpu.memory_space<vmem>>, %arg5: memref<1x8x9x16xbf16, #tpu.memory_space<vmem>>, %arg6: memref<1x8x9x16xbf16, #tpu.memory_space<vmem>>, %arg7: memref<1x8x9x16xbf16, #tpu.memory_space<vmem>>, %arg8: memref<3x3x16x32xbf16, #tpu.memory_space<vmem>>, %arg9: memref<1x32xf32, #tpu.memory_space<vmem>>, %arg10: memref<1x8x8x32xf32, #tpu.memory_space<vmem>>) attributes {dimension_semantics = [#tpu.dimension_semantics<parallel>, #tpu.dimension_semantics<parallel>], iteration_bounds = array<i64: 2, 1>, scalar_prefetch = 0 : i64, scratch_operands = 0 : i64, tpu.core_type = #tpu.core_type<tc>, window_params = [{transform_indices = @transform_0, window_bounds = array<i64: 1, 8, 9, 16>}, {transform_indices = @transform_1, window_bounds = array<i64: 1, 8, 9, 16>}, {transform_indices = @transform_2, window_bounds = array<i64: 1, 8, 9, 16>}, {transform_indices = @transform_3, window_bounds = array<i64: 1, 8, 9, 16>}, {transform_indices = @transform_4, window_bounds = array<i64: 1, 8, 9, 16>}, {transform_indices = @transform_5, window_bounds = array<i64: 1, 8, 9, 16>}, {pipeline_mode = #tpu.pipeline_mode<synchronous>, transform_indices = @transform_6, window_bounds = array<i64: 3, 3, 16, 32>}, {pipeline_mode = #tpu.pipeline_mode<synchronous>, transform_indices = @transform_7, window_bounds = array<i64: 1, 32>}, {transform_indices = @transform_8, window_bounds = array<i64: 1, 8, 8, 32>}]} {
    %cst = arith.constant 0.000000e+00 : f32
    %0 = vector.broadcast %cst : f32 to vector<64x32xf32>
    %c0 = arith.constant 0 : index
    %c0_0 = arith.constant 0 : index
    %c0_1 = arith.constant 0 : index
    %c0_2 = arith.constant 0 : index
    %1 = vector.load %arg2[%c0, %c0_0, %c0_1, %c0_2] : memref<1x8x9x16xbf16, #tpu.memory_space<vmem>>, vector<1x8x8x16xbf16>
    %2 = vector.shape_cast %1 : vector<1x8x8x16xbf16> to vector<8x8x16xbf16>
    %3 = vector.shape_cast %2 : vector<8x8x16xbf16> to vector<64x16xbf16>
    %c0_3 = arith.constant 0 : index
    %c0_4 = arith.constant 0 : index
    %c0_5 = arith.constant 0 : index
    %c0_6 = arith.constant 0 : index
    %4 = vector.load %arg8[%c0_3, %c0_4, %c0_5, %c0_6] : memref<3x3x16x32xbf16, #tpu.memory_space<vmem>>, vector<1x1x16x32xbf16>
    %5 = vector.shape_cast %4 : vector<1x1x16x32xbf16> to vector<16x32xbf16>
    %cst_7 = arith.constant dense<0.000000e+00> : vector<64x32xf32>
    %6 = tpu.matmul %3, %5, %cst_7 {dimension_numbers = #tpu.dot_dimension_numbers<[1], [0], [0], [1], [0, 0, 1, 1], [], []>} : vector<64x16xbf16>, vector<16x32xbf16>, vector<64x32xf32> -> vector<64x32xf32>
    %7 = arith.addf %0, %6 : vector<64x32xf32>
    %c0_8 = arith.constant 0 : index
    %c0_9 = arith.constant 0 : index
    %c0_10 = arith.constant 0 : index
    %c0_11 = arith.constant 0 : index
    %8 = vector.load %arg3[%c0_8, %c0_9, %c0_10, %c0_11] : memref<1x8x9x16xbf16, #tpu.memory_space<vmem>>, vector<1x8x8x16xbf16>
    %9 = vector.shape_cast %8 : vector<1x8x8x16xbf16> to vector<8x8x16xbf16>
    %10 = vector.shape_cast %9 : vector<8x8x16xbf16> to vector<64x16xbf16>
    %c0_12 = arith.constant 0 : index
    %c1 = arith.constant 1 : index
    %c0_13 = arith.constant 0 : index
    %c0_14 = arith.constant 0 : index
    %11 = vector.load %arg8[%c0_12, %c1, %c0_13, %c0_14] : memref<3x3x16x32xbf16, #tpu.memory_space<vmem>>, vector<1x1x16x32xbf16>
    %12 = vector.shape_cast %11 : vector<1x1x16x32xbf16> to vector<16x32xbf16>
    %cst_15 = arith.constant dense<0.000000e+00> : vector<64x32xf32>
    %13 = tpu.matmul %10, %12, %cst_15 {dimension_numbers = #tpu.dot_dimension_numbers<[1], [0], [0], [1], [0, 0, 1, 1], [], []>} : vector<64x16xbf16>, vector<16x32xbf16>, vector<64x32xf32> -> vector<64x32xf32>
    %14 = arith.addf %7, %13 : vector<64x32xf32>
    %c0_16 = arith.constant 0 : index
    %c0_17 = arith.constant 0 : index
    %c1_18 = arith.constant 1 : index
    %c0_19 = arith.constant 0 : index
    %15 = vector.load %arg2[%c0_16, %c0_17, %c1_18, %c0_19] : memref<1x8x9x16xbf16, #tpu.memory_space<vmem>>, vector<1x8x8x16xbf16>
    %16 = vector.shape_cast %15 : vector<1x8x8x16xbf16> to vector<8x8x16xbf16>
    %17 = vector.shape_cast %16 : vector<8x8x16xbf16> to vector<64x16xbf16>
    %c0_20 = arith.constant 0 : index
    %c2 = arith.constant 2 : index
    %c0_21 = arith.constant 0 : index
    %c0_22 = arith.constant 0 : index
    %18 = vector.load %arg8[%c0_20, %c2, %c0_21, %c0_22] : memref<3x3x16x32xbf16, #tpu.memory_space<vmem>>, vector<1x1x16x32xbf16>
    %19 = vector.shape_cast %18 : vector<1x1x16x32xbf16> to vector<16x32xbf16>
    %cst_23 = arith.constant dense<0.000000e+00> : vector<64x32xf32>
    %20 = tpu.matmul %17, %19, %cst_23 {dimension_numbers = #tpu.dot_dimension_numbers<[1], [0], [0], [1], [0, 0, 1, 1], [], []>} : vector<64x16xbf16>, vector<16x32xbf16>, vector<64x32xf32> -> vector<64x32xf32>
    %21 = arith.addf %14, %20 : vector<64x32xf32>
    %c0_24 = arith.constant 0 : index
    %c0_25 = arith.constant 0 : index
    %c0_26 = arith.constant 0 : index
    %c0_27 = arith.constant 0 : index
    %22 = vector.load %arg4[%c0_24, %c0_25, %c0_26, %c0_27] : memref<1x8x9x16xbf16, #tpu.memory_space<vmem>>, vector<1x8x8x16xbf16>
    %23 = vector.shape_cast %22 : vector<1x8x8x16xbf16> to vector<8x8x16xbf16>
    %24 = vector.shape_cast %23 : vector<8x8x16xbf16> to vector<64x16xbf16>
    %c1_28 = arith.constant 1 : index
    %c0_29 = arith.constant 0 : index
    %c0_30 = arith.constant 0 : index
    %c0_31 = arith.constant 0 : index
    %25 = vector.load %arg8[%c1_28, %c0_29, %c0_30, %c0_31] : memref<3x3x16x32xbf16, #tpu.memory_space<vmem>>, vector<1x1x16x32xbf16>
    %26 = vector.shape_cast %25 : vector<1x1x16x32xbf16> to vector<16x32xbf16>
    %cst_32 = arith.constant dense<0.000000e+00> : vector<64x32xf32>
    %27 = tpu.matmul %24, %26, %cst_32 {dimension_numbers = #tpu.dot_dimension_numbers<[1], [0], [0], [1], [0, 0, 1, 1], [], []>} : vector<64x16xbf16>, vector<16x32xbf16>, vector<64x32xf32> -> vector<64x32xf32>
    %28 = arith.addf %21, %27 : vector<64x32xf32>
    %c0_33 = arith.constant 0 : index
    %c0_34 = arith.constant 0 : index
    %c0_35 = arith.constant 0 : index
    %c0_36 = arith.constant 0 : index
    %29 = vector.load %arg5[%c0_33, %c0_34, %c0_35, %c0_36] : memref<1x8x9x16xbf16, #tpu.memory_space<vmem>>, vector<1x8x8x16xbf16>
    %30 = vector.shape_cast %29 : vector<1x8x8x16xbf16> to vector<8x8x16xbf16>
    %31 = vector.shape_cast %30 : vector<8x8x16xbf16> to vector<64x16xbf16>
    %c1_37 = arith.constant 1 : index
    %c1_38 = arith.constant 1 : index
    %c0_39 = arith.constant 0 : index
    %c0_40 = arith.constant 0 : index
    %32 = vector.load %arg8[%c1_37, %c1_38, %c0_39, %c0_40] : memref<3x3x16x32xbf16, #tpu.memory_space<vmem>>, vector<1x1x16x32xbf16>
    %33 = vector.shape_cast %32 : vector<1x1x16x32xbf16> to vector<16x32xbf16>
    %cst_41 = arith.constant dense<0.000000e+00> : vector<64x32xf32>
    %34 = tpu.matmul %31, %33, %cst_41 {dimension_numbers = #tpu.dot_dimension_numbers<[1], [0], [0], [1], [0, 0, 1, 1], [], []>} : vector<64x16xbf16>, vector<16x32xbf16>, vector<64x32xf32> -> vector<64x32xf32>
    %35 = arith.addf %28, %34 : vector<64x32xf32>
    %c0_42 = arith.constant 0 : index
    %c0_43 = arith.constant 0 : index
    %c1_44 = arith.constant 1 : index
    %c0_45 = arith.constant 0 : index
    %36 = vector.load %arg4[%c0_42, %c0_43, %c1_44, %c0_45] : memref<1x8x9x16xbf16, #tpu.memory_space<vmem>>, vector<1x8x8x16xbf16>
    %37 = vector.shape_cast %36 : vector<1x8x8x16xbf16> to vector<8x8x16xbf16>
    %38 = vector.shape_cast %37 : vector<8x8x16xbf16> to vector<64x16xbf16>
    %c1_46 = arith.constant 1 : index
    %c2_47 = arith.constant 2 : index
    %c0_48 = arith.constant 0 : index
    %c0_49 = arith.constant 0 : index
    %39 = vector.load %arg8[%c1_46, %c2_47, %c0_48, %c0_49] : memref<3x3x16x32xbf16, #tpu.memory_space<vmem>>, vector<1x1x16x32xbf16>
    %40 = vector.shape_cast %39 : vector<1x1x16x32xbf16> to vector<16x32xbf16>
    %cst_50 = arith.constant dense<0.000000e+00> : vector<64x32xf32>
    %41 = tpu.matmul %38, %40, %cst_50 {dimension_numbers = #tpu.dot_dimension_numbers<[1], [0], [0], [1], [0, 0, 1, 1], [], []>} : vector<64x16xbf16>, vector<16x32xbf16>, vector<64x32xf32> -> vector<64x32xf32>
    %42 = arith.addf %35, %41 : vector<64x32xf32>
    %c0_51 = arith.constant 0 : index
    %c0_52 = arith.constant 0 : index
    %c0_53 = arith.constant 0 : index
    %c0_54 = arith.constant 0 : index
    %43 = vector.load %arg6[%c0_51, %c0_52, %c0_53, %c0_54] : memref<1x8x9x16xbf16, #tpu.memory_space<vmem>>, vector<1x8x8x16xbf16>
    %44 = vector.shape_cast %43 : vector<1x8x8x16xbf16> to vector<8x8x16xbf16>
    %45 = vector.shape_cast %44 : vector<8x8x16xbf16> to vector<64x16xbf16>
    %c2_55 = arith.constant 2 : index
    %c0_56 = arith.constant 0 : index
    %c0_57 = arith.constant 0 : index
    %c0_58 = arith.constant 0 : index
    %46 = vector.load %arg8[%c2_55, %c0_56, %c0_57, %c0_58] : memref<3x3x16x32xbf16, #tpu.memory_space<vmem>>, vector<1x1x16x32xbf16>
    %47 = vector.shape_cast %46 : vector<1x1x16x32xbf16> to vector<16x32xbf16>
    %cst_59 = arith.constant dense<0.000000e+00> : vector<64x32xf32>
    %48 = tpu.matmul %45, %47, %cst_59 {dimension_numbers = #tpu.dot_dimension_numbers<[1], [0], [0], [1], [0, 0, 1, 1], [], []>} : vector<64x16xbf16>, vector<16x32xbf16>, vector<64x32xf32> -> vector<64x32xf32>
    %49 = arith.addf %42, %48 : vector<64x32xf32>
    %c0_60 = arith.constant 0 : index
    %c0_61 = arith.constant 0 : index
    %c0_62 = arith.constant 0 : index
    %c0_63 = arith.constant 0 : index
    %50 = vector.load %arg7[%c0_60, %c0_61, %c0_62, %c0_63] : memref<1x8x9x16xbf16, #tpu.memory_space<vmem>>, vector<1x8x8x16xbf16>
    %51 = vector.shape_cast %50 : vector<1x8x8x16xbf16> to vector<8x8x16xbf16>
    %52 = vector.shape_cast %51 : vector<8x8x16xbf16> to vector<64x16xbf16>
    %c2_64 = arith.constant 2 : index
    %c1_65 = arith.constant 1 : index
    %c0_66 = arith.constant 0 : index
    %c0_67 = arith.constant 0 : index
    %53 = vector.load %arg8[%c2_64, %c1_65, %c0_66, %c0_67] : memref<3x3x16x32xbf16, #tpu.memory_space<vmem>>, vector<1x1x16x32xbf16>
    %54 = vector.shape_cast %53 : vector<1x1x16x32xbf16> to vector<16x32xbf16>
    %cst_68 = arith.constant dense<0.000000e+00> : vector<64x32xf32>
    %55 = tpu.matmul %52, %54, %cst_68 {dimension_numbers = #tpu.dot_dimension_numbers<[1], [0], [0], [1], [0, 0, 1, 1], [], []>} : vector<64x16xbf16>, vector<16x32xbf16>, vector<64x32xf32> -> vector<64x32xf32>
    %56 = arith.addf %49, %55 : vector<64x32xf32>
    %c0_69 = arith.constant 0 : index
    %c0_70 = arith.constant 0 : index
    %c1_71 = arith.constant 1 : index
    %c0_72 = arith.constant 0 : index
    %57 = vector.load %arg6[%c0_69, %c0_70, %c1_71, %c0_72] : memref<1x8x9x16xbf16, #tpu.memory_space<vmem>>, vector<1x8x8x16xbf16>
    %58 = vector.shape_cast %57 : vector<1x8x8x16xbf16> to vector<8x8x16xbf16>
    %59 = vector.shape_cast %58 : vector<8x8x16xbf16> to vector<64x16xbf16>
    %c2_73 = arith.constant 2 : index
    %c2_74 = arith.constant 2 : index
    %c0_75 = arith.constant 0 : index
    %c0_76 = arith.constant 0 : index
    %60 = vector.load %arg8[%c2_73, %c2_74, %c0_75, %c0_76] : memref<3x3x16x32xbf16, #tpu.memory_space<vmem>>, vector<1x1x16x32xbf16>
    %61 = vector.shape_cast %60 : vector<1x1x16x32xbf16> to vector<16x32xbf16>
    %cst_77 = arith.constant dense<0.000000e+00> : vector<64x32xf32>
    %62 = tpu.matmul %59, %61, %cst_77 {dimension_numbers = #tpu.dot_dimension_numbers<[1], [0], [0], [1], [0, 0, 1, 1], [], []>} : vector<64x16xbf16>, vector<16x32xbf16>, vector<64x32xf32> -> vector<64x32xf32>
    %63 = arith.addf %56, %62 : vector<64x32xf32>
    %c0_78 = arith.constant 0 : index
    %c0_79 = arith.constant 0 : index
    %64 = vector.load %arg9[%c0_78, %c0_79] : memref<1x32xf32, #tpu.memory_space<vmem>>, vector<1x32xf32>
    %65 = vector.broadcast %64 : vector<1x32xf32> to vector<64x32xf32>
    %66 = arith.addf %63, %65 : vector<64x32xf32>
    %67 = vector.shape_cast %66 : vector<64x32xf32> to vector<8x8x32xf32>
    %c0_80 = arith.constant 0 : index
    %c0_81 = arith.constant 0 : index
    %c0_82 = arith.constant 0 : index
    %c0_83 = arith.constant 0 : index
    %68 = vector.load %arg10[%c0_80, %c0_81, %c0_82, %c0_83] : memref<1x8x8x32xf32, #tpu.memory_space<vmem>>, vector<1x8x8x32xf32>
    %69 = vector.shape_cast %68 : vector<1x8x8x32xf32> to vector<8x8x32xf32>
    %70 = vector.shape_cast %67 : vector<8x8x32xf32> to vector<1x8x8x32xf32>
    tpu.vector_store %arg10[%c0_80, %c0_81, %c0_82, %c0_83], %70 {strides = array<i32>} : memref<1x8x8x32xf32, #tpu.memory_space<vmem>>, vector<1x8x8x32xf32>,
    return
  }
  func.func @transform_0(%arg0: i32, %arg1: i32) -> (i32, i32, i32, i32) {
    %c0_i32 = arith.constant 0 : i32
    %c0_i32_0 = arith.constant 0 : i32
    %c0_i32_1 = arith.constant 0 : i32
    return %arg0, %arg1, %c0_i32, %c0_i32_0 : i32, i32, i32, i32
  }
  func.func @transform_1(%arg0: i32, %arg1: i32) -> (i32, i32, i32, i32) {
    %c0_i32 = arith.constant 0 : i32
    %c0_i32_0 = arith.constant 0 : i32
    %c0_i32_1 = arith.constant 0 : i32
    return %arg0, %arg1, %c0_i32, %c0_i32_0 : i32, i32, i32, i32
  }
  func.func @transform_2(%arg0: i32, %arg1: i32) -> (i32, i32, i32, i32) {
    %c0_i32 = arith.constant 0 : i32
    %c0_i32_0 = arith.constant 0 : i32
    %c0_i32_1 = arith.constant 0 : i32
    return %arg0, %arg1, %c0_i32, %c0_i32_0 : i32, i32, i32, i32
  }
  func.func @transform_3(%arg0: i32, %arg1: i32) -> (i32, i32, i32, i32) {
    %c0_i32 = arith.constant 0 : i32
    %c0_i32_0 = arith.constant 0 : i32
    %c0_i32_1 = arith.constant 0 : i32
    return %arg0, %arg1, %c0_i32, %c0_i32_0 : i32, i32, i32, i32
  }
  func.func @transform_4(%arg0: i32, %arg1: i32) -> (i32, i32, i32, i32) {
    %c0_i32 = arith.constant 0 : i32
    %c0_i32_0 = arith.constant 0 : i32
    %c0_i32_1 = arith.constant 0 : i32
    return %arg0, %arg1, %c0_i32, %c0_i32_0 : i32, i32, i32, i32
  }
  func.func @transform_5(%arg0: i32, %arg1: i32) -> (i32, i32, i32, i32) {
    %c0_i32 = arith.constant 0 : i32
    %c0_i32_0 = arith.constant 0 : i32
    %c0_i32_1 = arith.constant 0 : i32
    return %arg0, %arg1, %c0_i32, %c0_i32_0 : i32, i32, i32, i32
  }
  func.func @transform_6(%arg0: i32, %arg1: i32) -> (i32, i32, i32, i32) {
    %c0_i32 = arith.constant 0 : i32
    %c0_i32_0 = arith.constant 0 : i32
    %c0_i32_1 = arith.constant 0 : i32
    %c0_i32_2 = arith.constant 0 : i32
    %c0_i32_3 = arith.constant 0 : i32
    return %c0_i32, %c0_i32_0, %c0_i32_1, %c0_i32_2 : i32, i32, i32, i32
  }
  func.func @transform_7(%arg0: i32, %arg1: i32) -> (i32, i32) {
    %c0_i32 = arith.constant 0 : i32
    %c0_i32_0 = arith.constant 0 : i32
    %c0_i32_1 = arith.constant 0 : i32
    return %c0_i32, %c0_i32_0 : i32, i32
  }
  func.func @transform_8(%arg0: i32, %arg1: i32) -> (i32, i32, i32, i32) {
    %c0_i32 = arith.constant 0 : i32
    %c0_i32_0 = arith.constant 0 : i32
    %c0_i32_1 = arith.constant 0 : i32
    return %arg0, %arg1, %c0_i32, %c0_i32_0 : i32, i32, i32, i32
  }
}

</mosaic_0001>

<llo_original>
// kernel: stem_conv_forward.3
$region0: #{stem_conv_forward.3}
  #allocation0 [shape = 'u32[]', space=smem, size = 0x4, offset = 0x4, fixed_abs, tag = 'smem constant byte address 0x4 - core index']
  #allocation1 [shape = 'u32[72,128]{1,0:T(1,128)}', space=vmem, size = 0x9000, scoped, tag = 'internal scratch']
  %s0 = inlined_call_operand.vmem [shape: bf16[2,8,9,16], index: 0, kind: input, shape index: {}]
  %s1 = inlined_call_operand.vmem [shape: bf16[2,8,9,16], index: 1, kind: input, shape index: {}]
  %s2 = inlined_call_operand.vmem [shape: bf16[2,8,9,16], index: 2, kind: input, shape index: {}]
  %s3 = inlined_call_operand.vmem [shape: bf16[2,8,9,16], index: 3, kind: input, shape index: {}]
  %s4 = inlined_call_operand.vmem [shape: bf16[2,8,9,16], index: 4, kind: input, shape index: {}]
  %s5 = inlined_call_operand.vmem [shape: bf16[2,8,9,16], index: 5, kind: input, shape index: {}]
  %s6 = inlined_call_operand.vmem [shape: bf16[3,3,16,32], index: 6, kind: input, shape index: {}]
  %s7 = inlined_call_operand.vmem [shape: f32[1,32], index: 7, kind: input, shape index: {}]
  %s8 = inlined_call_operand.hbm [shape: f32[2,8,8,32], index: 8, kind: output, shape index: {}]
  %s9 = sld [smem:[#allocation0]]
  $region65: #{stem_conv_forward.3} parent=0
    _
  %s11 = ssub.s32 1, %s9
  %s12 = scalar_select 0, %s11, %s9
  $region1: #{stem_conv_forward.3} parent=0
    #allocation2 [shape = 'u8[65536]{0}', space=vmem, size = 0x10000, scoped, tag = 'output window, operand 0']
    #allocation3 [shape = 's32[2]{0}', space=sflag, size = 0x8, scoped, tag = 'scoped memory for stem_conv_forward.3']
    %13 = vsyncpa [#allocation3], 0
    %s14 = scalar_lea.sflag [#allocation3], 1
    %15 = vsyncpa %s14, 0
    loop: start=0, step=1, limit=4
    $region2: #{stem_conv_forward.3} parent=1 // loop_pre_header
      _
    $region3: #{stem_conv_forward.3} parent=1 // loop_header
      %s17 = sphi 0, %s21
      %p18 = scmp.ge.s32.totalorder %s17, 4
      %s24 = sphi 0, %s36
      %s25 = sphi 0, %s32
      %s26 = sphi 0, %s24
      %s27 = sphi 0, %s25
      %s28 = sphi 0, %s26
      %s29 = sphi 0, %s27
      %s41 = sphi 0, %s43
      %s44 = sphi 0, %s41
      %s45 = sphi 0, %s44
      %s61 = sphi 0, %s45
      %s69 = sphi 0, %s71
      %s72 = sphi 0, %s69
      %s73 = sphi 0, %s72
      %s89 = sphi 0, %s73
      %s97 = sphi 0, %s99
      %s100 = sphi 0, %s97
      %s101 = sphi 0, %s100
      %s117 = sphi 0, %s101
      %s125 = sphi 0, %s127
      %s128 = sphi 0, %s125
      %s129 = sphi 0, %s128
      %s145 = sphi 0, %s129
      %s153 = sphi 0, %s155
      %s156 = sphi 0, %s153
      %s157 = sphi 0, %s156
      %s173 = sphi 0, %s157
      %s181 = sphi 0, %s183
      %s184 = sphi 0, %s181
      %s185 = sphi 0, %s184
      %s201 = sphi 0, %s185
      %s205 = sphi 0, %s205
      %s207 = sphi 0, %s205
      %s208 = sphi 0, %s207
      %s222 = sphi 0, %s208
      %s226 = sphi 0, %s226
      %s228 = sphi 0, %s226
      %s229 = sphi 0, %s228
      %s243 = sphi 0, %s229
      %s251 = sphi 0, %s253
      %s254 = sphi 0, %s251
      %s255 = sphi 0, %s254
      %s271 = sphi 0, %s255
    $region4: #{stem_conv_forward.3} parent=1 // loop_header_branch
      %20 = sbr.rel (%p18) target = $region8
    $region5: #{stem_conv_forward.3} parent=1 // loop_body
      %s22 = ssub.s32 %s17, 1
      %s23 = ssub.s32 %s17, 2
      %s30 = sadd.s32 1, %s25
      %p31 = scmp.ge.s32.totalorder %s30, 1
      %s32 = scalar_select %p31, 0, %s30
      %s33 = sadd.s32 1, %s24
      %s34 = scalar_select %p31, %s33, %s24
      %p35 = scmp.ge.s32.totalorder %s34, 2
      %s36 = scalar_select %p35, 0, %s34
      %s37 = ssub.s32 %s24, %s36
      %s38 = ssub.s32 %s25, %s32
      %s39 = sor.u32 %s37, %s38
      %p40 = scmp.eq.s32.totalorder %s39, 0
      %s42 = sadd.s32 %s41, 1
      %s43 = scalar_select %p40, %s41, %s42
      %p46 = pneg %p40
      %p47 = scmp.eq.s32.totalorder %s17, 1
      %p48 = por %p46, %p47
      %p49 = scmp.ne.s32.totalorder %s41, %s44
      %p50 = scmp.eq.s32.totalorder %s17, 0
      %p51 = por %p49, %p50
      %p52 = scmp.ne.s32.totalorder %s41, %s44
      %p53 = scmp.eq.s32.totalorder %s22, 1
      %p54 = por %p52, %p53
      %p55 = scmp.ne.s32.totalorder %s44, %s45
      %p56 = scmp.eq.s32.totalorder %s22, 0
      %p57 = por %p55, %p56
      %p58 = scmp.ne.s32.totalorder %s44, %s45
      %p59 = scmp.eq.s32.totalorder %s23, 1
      %p60 = por %p58, %p59
      %p62 = scmp.ne.s32.totalorder %s45, %s61
      %p63 = scmp.eq.s32.totalorder %s23, 0
      %p64 = por %p62, %p63
      %s65 = ssub.s32 %s24, %s36
      %s66 = ssub.s32 %s25, %s32
      %s67 = sor.u32 %s65, %s66
      %p68 = scmp.eq.s32.totalorder %s67, 0
      %s70 = sadd.s32 %s69, 1
      %s71 = scalar_select %p68, %s69, %s70
      %p74 = pneg %p68
      %p75 = scmp.eq.s32.totalorder %s17, 1
      %p76 = por %p74, %p75
      %p77 = scmp.ne.s32.totalorder %s69, %s72
      %p78 = scmp.eq.s32.totalorder %s17, 0
      %p79 = por %p77, %p78
      %p80 = scmp.ne.s32.totalorder %s69, %s72
      %p81 = scmp.eq.s32.totalorder %s22, 1
      %p82 = por %p80, %p81
      %p83 = scmp.ne.s32.totalorder %s72, %s73
      %p84 = scmp.eq.s32.totalorder %s22, 0
      %p85 = por %p83, %p84
      %p86 = scmp.ne.s32.totalorder %s72, %s73
      %p87 = scmp.eq.s32.totalorder %s23, 1
      %p88 = por %p86, %p87
      %p90 = scmp.ne.s32.totalorder %s73, %s89
      %p91 = scmp.eq.s32.totalorder %s23, 0
      %p92 = por %p90, %p91
      %s93 = ssub.s32 %s24, %s36
      %s94 = ssub.s32 %s25, %s32
      %s95 = sor.u32 %s93, %s94
      %p96 = scmp.eq.s32.totalorder %s95, 0
      %s98 = sadd.s32 %s97, 1
      %s99 = scalar_select %p96, %s97, %s98
      %p102 = pneg %p96
      %p103 = scmp.eq.s32.totalorder %s17, 1
      %p104 = por %p102, %p103
      %p105 = scmp.ne.s32.totalorder %s97, %s100
      %p106 = scmp.eq.s32.totalorder %s17, 0
      %p107 = por %p105, %p106
      %p108 = scmp.ne.s32.totalorder %s97, %s100
      %p109 = scmp.eq.s32.totalorder %s22, 1
      %p110 = por %p108, %p109
      %p111 = scmp.ne.s32.totalorder %s100, %s101
      %p112 = scmp.eq.s32.totalorder %s22, 0
      %p113 = por %p111, %p112
      %p114 = scmp.ne.s32.totalorder %s100, %s101
      %p115 = scmp.eq.s32.totalorder %s23, 1
      %p116 = por %p114, %p115
      %p118 = scmp.ne.s32.totalorder %s101, %s117
      %p119 = scmp.eq.s32.totalorder %s23, 0
      %p120 = por %p118, %p119
      %s121 = ssub.s32 %s24, %s36
      %s122 = ssub.s32 %s25, %s32
      %s123 = sor.u32 %s121, %s122
      %p124 = scmp.eq.s32.totalorder %s123, 0
      %s126 = sadd.s32 %s125, 1
      %s127 = scalar_select %p124, %s125, %s126
      %p130 = pneg %p124
      %p131 = scmp.eq.s32.totalorder %s17, 1
      %p132 = por %p130, %p131
      %p133 = scmp.ne.s32.totalorder %s125, %s128
      %p134 = scmp.eq.s32.totalorder %s17, 0
      %p135 = por %p133, %p134
      %p136 = scmp.ne.s32.totalorder %s125, %s128
      %p137 = scmp.eq.s32.totalorder %s22, 1
      %p138 = por %p136, %p137
      %p139 = scmp.ne.s32.totalorder %s128, %s129
      %p140 = scmp.eq.s32.totalorder %s22, 0
      %p141 = por %p139, %p140
      %p142 = scmp.ne.s32.totalorder %s128, %s129
      %p143 = scmp.eq.s32.totalorder %s23, 1
      %p144 = por %p142, %p143
      %p146 = scmp.ne.s32.totalorder %s129, %s145
      %p147 = scmp.eq.s32.totalorder %s23, 0
      %p148 = por %p146, %p147
      %s149 = ssub.s32 %s24, %s36
      %s150 = ssub.s32 %s25, %s32
      %s151 = sor.u32 %s149, %s150
      %p152 = scmp.eq.s32.totalorder %s151, 0
      %s154 = sadd.s32 %s153, 1
      %s155 = scalar_select %p152, %s153, %s154
      %p158 = pneg %p152
      %p159 = scmp.eq.s32.totalorder %s17, 1
      %p160 = por %p158, %p159
      %p161 = scmp.ne.s32.totalorder %s153, %s156
      %p162 = scmp.eq.s32.totalorder %s17, 0
      %p163 = por %p161, %p162
      %p164 = scmp.ne.s32.totalorder %s153, %s156
      %p165 = scmp.eq.s32.totalorder %s22, 1
      %p166 = por %p164, %p165
      %p167 = scmp.ne.s32.totalorder %s156, %s157
      %p168 = scmp.eq.s32.totalorder %s22, 0
      %p169 = por %p167, %p168
      %p170 = scmp.ne.s32.totalorder %s156, %s157
      %p171 = scmp.eq.s32.totalorder %s23, 1
      %p172 = por %p170, %p171
      %p174 = scmp.ne.s32.totalorder %s157, %s173
      %p175 = scmp.eq.s32.totalorder %s23, 0
      %p176 = por %p174, %p175
      %s177 = ssub.s32 %s24, %s36
      %s178 = ssub.s32 %s25, %s32
      %s179 = sor.u32 %s177, %s178
      %p180 = scmp.eq.s32.totalorder %s179, 0
      %s182 = sadd.s32 %s181, 1
      %s183 = scalar_select %p180, %s181, %s182
      %p186 = pneg %p180
      %p187 = scmp.eq.s32.totalorder %s17, 1
      %p188 = por %p186, %p187
      %p189 = scmp.ne.s32.totalorder %s181, %s184
      %p190 = scmp.eq.s32.totalorder %s17, 0
      %p191 = por %p189, %p190
      %p192 = scmp.ne.s32.totalorder %s181, %s184
      %p193 = scmp.eq.s32.totalorder %s22, 1
      %p194 = por %p192, %p193
      %p195 = scmp.ne.s32.totalorder %s184, %s185
      %p196 = scmp.eq.s32.totalorder %s22, 0
      %p197 = por %p195, %p196
      %p198 = scmp.ne.s32.totalorder %s184, %s185
      %p199 = scmp.eq.s32.totalorder %s23, 1
      %p200 = por %p198, %p199
      %p202 = scmp.ne.s32.totalorder %s185, %s201
      %p203 = scmp.eq.s32.totalorder %s23, 0
      %p204 = por %p202, %p203
      %s206 = sadd.s32 %s205, 1
      %p209 = scmp.eq.s32.totalorder %s17, 1
      %p210 = scmp.ne.s32.totalorder %s205, %s207
      %p211 = scmp.eq.s32.totalorder %s17, 0
      %p212 = por %p210, %p211
      %p213 = scmp.ne.s32.totalorder %s205, %s207
      %p214 = scmp.eq.s32.totalorder %s22, 1
      %p215 = por %p213, %p214
      %p216 = scmp.ne.s32.totalorder %s207, %s208
      %p217 = scmp.eq.s32.totalorder %s22, 0
      %p218 = por %p216, %p217
      %p219 = scmp.ne.s32.totalorder %s207, %s208
      %p220 = scmp.eq.s32.totalorder %s23, 1
      %p221 = por %p219, %p220
      %p223 = scmp.ne.s32.totalorder %s208, %s222
      %p224 = scmp.eq.s32.totalorder %s23, 0
      %p225 = por %p223, %p224
      %s227 = sadd.s32 %s226, 1
      %p230 = scmp.eq.s32.totalorder %s17, 1
      %p231 = scmp.ne.s32.totalorder %s226, %s228
      %p232 = scmp.eq.s32.totalorder %s17, 0
      %p233 = por %p231, %p232
      %p234 = scmp.ne.s32.totalorder %s226, %s228
      %p235 = scmp.eq.s32.totalorder %s22, 1
      %p236 = por %p234, %p235
      %p237 = scmp.ne.s32.totalorder %s228, %s229
      %p238 = scmp.eq.s32.totalorder %s22, 0
      %p239 = por %p237, %p238
      %p240 = scmp.ne.s32.totalorder %s228, %s229
      %p241 = scmp.eq.s32.totalorder %s23, 1
      %p242 = por %p240, %p241
      %p244 = scmp.ne.s32.totalorder %s229, %s243
      %p245 = scmp.eq.s32.totalorder %s23, 0
      %p246 = por %p244, %p245
      %s247 = ssub.s32 %s24, %s36
      %s248 = ssub.s32 %s25, %s32
      %s249 = sor.u32 %s247, %s248
      %p250 = scmp.eq.s32.totalorder %s249, 0
      %s252 = sadd.s32 %s251, 1
      %s253 = scalar_select %p250, %s251, %s252
      %p256 = pneg %p250
      %p257 = scmp.eq.s32.totalorder %s17, 1
      %p258 = por %p256, %p257
      %p259 = scmp.ne.s32.totalorder %s251, %s254
      %p260 = scmp.eq.s32.totalorder %s17, 0
      %p261 = por %p259, %p260
      %p262 = scmp.ne.s32.totalorder %s251, %s254
      %p263 = scmp.eq.s32.totalorder %s22, 1
      %p264 = por %p262, %p263
      %p265 = scmp.ne.s32.totalorder %s254, %s255
      %p266 = scmp.eq.s32.totalorder %s22, 0
      %p267 = por %p265, %p266
      %p268 = scmp.ne.s32.totalorder %s254, %s255
      %p269 = scmp.eq.s32.totalorder %s23, 1
      %p270 = por %p268, %p269
      %p272 = scmp.ne.s32.totalorder %s255, %s271
      %p273 = scmp.eq.s32.totalorder %s23, 0
      %p274 = por %p272, %p273
      %p275 = scmp.le.s32.totalorder 1, %s17
      %p276 = scmp.lt.s32.totalorder %s17, 3
      %p277 = pnand %p275, %p276
      %p278 = pneg %p277
      // Predicated region
      $region9: #{stem_conv_forward.3} parent=5 // pred_check
        _
      $region10: #{stem_conv_forward.3} parent=5 // pred_check_branch
        %280 = sbr.rel (%p277) target = $region12
      $region11: #{stem_conv_forward.3} parent=5 // pred_region
        %s281 = ssub.s32 %s17, 1
        // Predicated region
        $region13: #{stem_conv_forward.3} parent=11 // pred_check
          %p282 = pneg %p218
        $region14: #{stem_conv_forward.3} parent=11 // pred_check_branch
          %284 = sbr.rel (%p282) target = $region16
        $region15: #{stem_conv_forward.3} parent=11 // pred_region
          _
        $region16: #{stem_conv_forward.3} parent=11 // pred_fallthru
          _
        // Predicated region
        $region17: #{stem_conv_forward.3} parent=11 // pred_check
          %p285 = pneg %p239
        $region18: #{stem_conv_forward.3} parent=11 // pred_check_branch
          %287 = sbr.rel (%p285) target = $region20
        $region19: #{stem_conv_forward.3} parent=11 // pred_region
          _
        $region20: #{stem_conv_forward.3} parent=11 // pred_fallthru
          _
      $region12: #{stem_conv_forward.3} parent=5 // pred_fallthru
        _
      %p288 = scmp.lt.s32.totalorder %s17, 2
      // Predicated region
      $region21: #{stem_conv_forward.3} parent=5 // pred_check
        %p289 = pneg %p288
      $region22: #{stem_conv_forward.3} parent=5 // pred_check_branch
        %291 = sbr.rel (%p289) target = $region24
      $region23: #{stem_conv_forward.3} parent=5 // pred_region
        // Predicated region
        $region25: #{stem_conv_forward.3} parent=23 // pred_check
          %p292 = pneg %p51
        $region26: #{stem_conv_forward.3} parent=23 // pred_check_branch
          %294 = sbr.rel (%p292) target = $region28
        $region27: #{stem_conv_forward.3} parent=23 // pred_region
          %s295 = smul.u32 8, %s25
          %p296 = scmp.lt.s32.totalorder %s24, 1
          %s297 = scalar_select %p296, %s24, 1
          %p298 = scmp.lt.s32.totalorder %s295, 7
          %s299 = scalar_select %p298, %s295, 7
          %s300 = smul.addr %s299, 2
          %s301 = smul.addr %s297, 16
          %s302 = sadd.s32 %s300, %s301
          %s303 = smul.addr %s302, 4
          %s304 = scalar_lea.vmem %s0, %s303
          %s305 = smul.u32 8, %s25
        $region28: #{stem_conv_forward.3} parent=23 // pred_fallthru
          _
        // Predicated region
        $region29: #{stem_conv_forward.3} parent=23 // pred_check
          %p306 = pneg %p79
        $region30: #{stem_conv_forward.3} parent=23 // pred_check_branch
          %308 = sbr.rel (%p306) target = $region32
        $region31: #{stem_conv_forward.3} parent=23 // pred_region
          %s309 = smul.u32 8, %s25
          %p310 = scmp.lt.s32.totalorder %s24, 1
          %s311 = scalar_select %p310, %s24, 1
          %p312 = scmp.lt.s32.totalorder %s309, 7
          %s313 = scalar_select %p312, %s309, 7
          %s314 = smul.addr %s313, 2
          %s315 = smul.addr %s311, 16
          %s316 = sadd.s32 %s314, %s315
          %s317 = smul.addr %s316, 4
          %s318 = scalar_lea.vmem %s1, %s317
          %s319 = smul.u32 8, %s25
        $region32: #{stem_conv_forward.3} parent=23 // pred_fallthru
          _
        // Predicated region
        $region33: #{stem_conv_forward.3} parent=23 // pred_check
          %p320 = pneg %p107
        $region34: #{stem_conv_forward.3} parent=23 // pred_check_branch
          %322 = sbr.rel (%p320) target = $region36
        $region35: #{stem_conv_forward.3} parent=23 // pred_region
          %s323 = smul.u32 8, %s25
          %p324 = scmp.lt.s32.totalorder %s24, 1
          %s325 = scalar_select %p324, %s24, 1
          %p326 = scmp.lt.s32.totalorder %s323, 7
          %s327 = scalar_select %p326, %s323, 7
          %s328 = smul.addr %s327, 2
          %s329 = smul.addr %s325, 16
          %s330 = sadd.s32 %s328, %s329
          %s331 = smul.addr %s330, 4
          %s332 = scalar_lea.vmem %s2, %s331
          %s333 = smul.u32 8, %s25
        $region36: #{stem_conv_forward.3} parent=23 // pred_fallthru
          _
        // Predicated region
        $region37: #{stem_conv_forward.3} parent=23 // pred_check
          %p334 = pneg %p135
        $region38: #{stem_conv_forward.3} parent=23 // pred_check_branch
          %336 = sbr.rel (%p334) target = $region40
        $region39: #{stem_conv_forward.3} parent=23 // pred_region
          %s337 = smul.u32 8, %s25
          %p338 = scmp.lt.s32.totalorder %s24, 1
          %s339 = scalar_select %p338, %s24, 1
          %p340 = scmp.lt.s32.totalorder %s337, 7
          %s341 = scalar_select %p340, %s337, 7
          %s342 = smul.addr %s341, 2
          %s343 = smul.addr %s339, 16
          %s344 = sadd.s32 %s342, %s343
          %s345 = smul.addr %s344, 4
          %s346 = scalar_lea.vmem %s3, %s345
          %s347 = smul.u32 8, %s25
        $region40: #{stem_conv_forward.3} parent=23 // pred_fallthru
          _
        // Predicated region
        $region41: #{stem_conv_forward.3} parent=23 // pred_check
          %p348 = pneg %p163
        $region42: #{stem_conv_forward.3} parent=23 // pred_check_branch
          %350 = sbr.rel (%p348) target = $region44
        $region43: #{stem_conv_forward.3} parent=23 // pred_region
          %s351 = smul.u32 8, %s25
          %p352 = scmp.lt.s32.totalorder %s24, 1
          %s353 = scalar_select %p352, %s24, 1
          %p354 = scmp.lt.s32.totalorder %s351, 7
          %s355 = scalar_select %p354, %s351, 7
          %s356 = smul.addr %s355, 2
          %s357 = smul.addr %s353, 16
          %s358 = sadd.s32 %s356, %s357
          %s359 = smul.addr %s358, 4
          %s360 = scalar_lea.vmem %s4, %s359
          %s361 = smul.u32 8, %s25
        $region44: #{stem_conv_forward.3} parent=23 // pred_fallthru
          _
        // Predicated region
        $region45: #{stem_conv_forward.3} parent=23 // pred_check
          %p362 = pneg %p191
        $region46: #{stem_conv_forward.3} parent=23 // pred_check_branch
          %364 = sbr.rel (%p362) target = $region48
        $region47: #{stem_conv_forward.3} parent=23 // pred_region
          %s365 = smul.u32 8, %s25
          %p366 = scmp.lt.s32.totalorder %s24, 1
          %s367 = scalar_select %p366, %s24, 1
          %p368 = scmp.lt.s32.totalorder %s365, 7
          %s369 = scalar_select %p368, %s365, 7
          %s370 = smul.addr %s369, 2
          %s371 = smul.addr %s367, 16
          %s372 = sadd.s32 %s370, %s371
          %s373 = smul.addr %s372, 4
          %s374 = scalar_lea.vmem %s5, %s373
          %s375 = smul.u32 8, %s25
        $region48: #{stem_conv_forward.3} parent=23 // pred_fallthru
          _
      $region24: #{stem_conv_forward.3} parent=5 // pred_fallthru
        _
      %p376 = scmp.le.s32.totalorder 1, %s17
      %p377 = scmp.lt.s32.totalorder %s17, 3
      %p378 = pnand %p376, %p377
      %p379 = pneg %p378
      // Predicated region
      $region49: #{stem_conv_forward.3} parent=5 // pred_check
        _
      $region50: #{stem_conv_forward.3} parent=5 // pred_check_branch
        %381 = sbr.rel (%p378) target = $region52
      $region51: #{stem_conv_forward.3} parent=5 // pred_region
        %s382 = ssub.s32 %s17, 1
        %s383 = smul.u32 8, %s27
        %p384 = scmp.lt.s32.totalorder %s26, 1
        %s385 = scalar_select %p384, %s26, 1
        %p386 = scmp.lt.s32.totalorder %s383, 7
        %s387 = scalar_select %p386, %s383, 7
        %s388 = smul.addr %s387, 2
        %s389 = smul.addr %s385, 16
        %s390 = sadd.s32 %s388, %s389
        %s391 = smul.addr %s390, 4
        %s392 = scalar_lea.vmem %s0, %s391
        %p393 = pneg %p57
        %p394 = pneg %p54
        %s395 = smul.u32 8, %s27
        %p396 = scmp.lt.s32.totalorder %s26, 1
        %s397 = scalar_select %p396, %s26, 1
        %p398 = scmp.lt.s32.totalorder %s395, 7
        %s399 = scalar_select %p398, %s395, 7
        %s400 = smul.addr %s399, 2
        %s401 = smul.addr %s397, 16
        %s402 = sadd.s32 %s400, %s401
        %s403 = smul.addr %s402, 4
        %s404 = scalar_lea.vmem %s1, %s403
        %p405 = pneg %p85
        %p406 = pneg %p82
        %s407 = smul.u32 8, %s27
        %p408 = scmp.lt.s32.totalorder %s26, 1
        %s409 = scalar_select %p408, %s26, 1
        %p410 = scmp.lt.s32.totalorder %s407, 7
        %s411 = scalar_select %p410, %s407, 7
        %s412 = smul.addr %s411, 2
        %s413 = smul.addr %s409, 16
        %s414 = sadd.s32 %s412, %s413
        %s415 = smul.addr %s414, 4
        %s416 = scalar_lea.vmem %s2, %s415
        %p417 = pneg %p113
        %p418 = pneg %p110
        %s419 = smul.u32 8, %s27
        %p420 = scmp.lt.s32.totalorder %s26, 1
        %s421 = scalar_select %p420, %s26, 1
        %p422 = scmp.lt.s32.totalorder %s419, 7
        %s423 = scalar_select %p422, %s419, 7
        %s424 = smul.addr %s423, 2
        %s425 = smul.addr %s421, 16
        %s426 = sadd.s32 %s424, %s425
        %s427 = smul.addr %s426, 4
        %s428 = scalar_lea.vmem %s3, %s427
        %p429 = pneg %p141
        %p430 = pneg %p138
        %s431 = smul.u32 8, %s27
        %p432 = scmp.lt.s32.totalorder %s26, 1
        %s433 = scalar_select %p432, %s26, 1
        %p434 = scmp.lt.s32.totalorder %s431, 7
        %s435 = scalar_select %p434, %s431, 7
        %s436 = smul.addr %s435, 2
        %s437 = smul.addr %s433, 16
        %s438 = sadd.s32 %s436, %s437
        %s439 = smul.addr %s438, 4
        %s440 = scalar_lea.vmem %s4, %s439
        %p441 = pneg %p169
        %p442 = pneg %p166
        %s443 = smul.u32 8, %s27
        %p444 = scmp.lt.s32.totalorder %s26, 1
        %s445 = scalar_select %p444, %s26, 1
        %p446 = scmp.lt.s32.totalorder %s443, 7
        %s447 = scalar_select %p446, %s443, 7
        %s448 = smul.addr %s447, 2
        %s449 = smul.addr %s445, 16
        %s450 = sadd.s32 %s448, %s449
        %s451 = smul.addr %s450, 4
        %s452 = scalar_lea.vmem %s5, %s451
        %p453 = pneg %p197
        %p454 = pneg %p194
        %p455 = pneg %p218
        %p456 = pneg %p215
        %p457 = pneg %p239
        %p458 = pneg %p236
        %p459 = pneg %p267
        %p460 = pneg %p264
        %s461 = sand.u32 %s254, 1
        %s462 = scalar_lea.sflag [#allocation3], %s461
        %s463 = sand.u32 %s254, 1
        %s464 = smul.addr %s463, 64
        %s465 = scalar_lea.vmem [#allocation2], %s464
        %s466 = smul.u32 8, %s27
        %p467 = scmp.lt.s32.totalorder %s26, 1
        %s468 = scalar_select %p467, %s26, 1
        %p469 = scmp.lt.s32.totalorder %s466, 7
        %s470 = scalar_select %p469, %s466, 7
        %s471 = smul.addr %s470, 2
        %s472 = smul.addr %s468, 16
        %s473 = sadd.s32 %s471, %s472
        %s474 = smul.addr %s473, 4
        %s475 = scalar_lea.vmem %s0, %s474
        %s476 = smul.u32 8, %s27
        %s477 = smul.u32 8, %s27
        %p478 = scmp.lt.s32.totalorder %s26, 1
        %s479 = scalar_select %p478, %s26, 1
        %p480 = scmp.lt.s32.totalorder %s477, 7
        %s481 = scalar_select %p480, %s477, 7
        %s482 = smul.addr %s481, 2
        %s483 = smul.addr %s479, 16
        %s484 = sadd.s32 %s482, %s483
        %s485 = smul.addr %s484, 4
        %s486 = scalar_lea.vmem %s1, %s485
        %s487 = smul.u32 8, %s27
        %s488 = smul.u32 8, %s27
        %p489 = scmp.lt.s32.totalorder %s26, 1
        %s490 = scalar_select %p489, %s26, 1
        %p491 = scmp.lt.s32.totalorder %s488, 7
        %s492 = scalar_select %p491, %s488, 7
        %s493 = smul.addr %s492, 2
        %s494 = smul.addr %s490, 16
        %s495 = sadd.s32 %s493, %s494
        %s496 = smul.addr %s495, 4
        %s497 = scalar_lea.vmem %s2, %s496
        %s498 = smul.u32 8, %s27
        %s499 = smul.u32 8, %s27
        %p500 = scmp.lt.s32.totalorder %s26, 1
        %s501 = scalar_select %p500, %s26, 1
        %p502 = scmp.lt.s32.totalorder %s499, 7
        %s503 = scalar_select %p502, %s499, 7
        %s504 = smul.addr %s503, 2
        %s505 = smul.addr %s501, 16
        %s506 = sadd.s32 %s504, %s505
        %s507 = smul.addr %s506, 4
        %s508 = scalar_lea.vmem %s3, %s507
        %s509 = smul.u32 8, %s27
        %s510 = smul.u32 8, %s27
        %p511 = scmp.lt.s32.totalorder %s26, 1
        %s512 = scalar_select %p511, %s26, 1
        %p513 = scmp.lt.s32.totalorder %s510, 7
        %s514 = scalar_select %p513, %s510, 7
        %s515 = smul.addr %s514, 2
        %s516 = smul.addr %s512, 16
        %s517 = sadd.s32 %s515, %s516
        %s518 = smul.addr %s517, 4
        %s519 = scalar_lea.vmem %s4, %s518
        %s520 = smul.u32 8, %s27
        %s521 = smul.u32 8, %s27
        %p522 = scmp.lt.s32.totalorder %s26, 1
        %s523 = scalar_select %p522, %s26, 1
        %p524 = scmp.lt.s32.totalorder %s521, 7
        %s525 = scalar_select %p524, %s521, 7
        %s526 = smul.addr %s525, 2
        %s527 = smul.addr %s523, 16
        %s528 = sadd.s32 %s526, %s527
        %s529 = smul.addr %s528, 4
        %s530 = scalar_lea.vmem %s5, %s529
        %s531 = smul.u32 8, %s27
        %s532 = smul.u32 8, %s27
        %v534 = vld [vmem:[%s475] sm:$0xf]
        %v535 = vld [vmem:[%s475 + $0x8] sm:$0xf]
        %v536 = vld [vmem:[%s475 + $0x10] sm:$0xf]
        %v537 = vld [vmem:[%s475 + $0x18] sm:$0xf]
        %v538 = vld [vmem:[%s475 + $0x20] sm:$0xf]
        %v539 = vld [vmem:[%s475 + $0x28] sm:$0xf]
        %v540 = vld [vmem:[%s475 + $0x30] sm:$0xf]
        %v541 = vld [vmem:[%s475 + $0x38] sm:$0xf]
        %v542 = vld [vmem:[%s6] sm:$0xf]
        %v543 = vld [vmem:[%s6 + $0x4] sm:$0xf]
        %v544 = vld [vmem:[%s486] sm:$0xf]
        %v545 = vld [vmem:[%s486 + $0x8] sm:$0xf]
        %v546 = vld [vmem:[%s486 + $0x10] sm:$0xf]
        %v547 = vld [vmem:[%s486 + $0x18] sm:$0xf]
        %v548 = vld [vmem:[%s486 + $0x20] sm:$0xf]
        %v549 = vld [vmem:[%s486 + $0x28] sm:$0xf]
        %v550 = vld [vmem:[%s486 + $0x30] sm:$0xf]
        %v551 = vld [vmem:[%s486 + $0x38] sm:$0xf]
        %s552 = scalar_lea.vmem %s6, 8
        %v553 = vld [vmem:[%s552] sm:$0xf]
        %v554 = vld [vmem:[%s552 + $0x4] sm:$0xf]
        %v563 = vunpack.c.l.b16 %v544
        %v564 = vunpack.c.l.b16 %v545
        %v565 = vunpack.c.l.b16 %v546
        %v566 = vunpack.c.l.b16 %v547
        %v567 = vunpack.c.l.b16 %v548
        %v568 = vunpack.c.l.b16 %v549
        %v569 = vunpack.c.l.b16 %v550
        %v570 = vunpack.c.l.b16 %v551
        %v571 = vpack.c.b16 %v564, %v563
        %v572 = vpack.c.b16 %v566, %v565
        %v573 = vpack.c.b16 %v568, %v567
        %v574 = vpack.c.b16 %v570, %v569
        %v577 = vunpack.c.l.b16 %v553
        %v578 = vunpack.c.l.b16 %v554
        %v579 = vpack.c.b16 %v578, %v577
        %vm581 = vcmask 130048
        %v583 = vsel %vm581, %v571, 0
        %v586 = vsel %vm581, %v572, 0
        %v589 = vsel %vm581, %v573, 0
        %v592 = vsel %vm581, %v574, 0
        %594 = vmatpush.bf16.msra.mxu0 0
        %595 = vmatpush.bf16.msra.mxu0 0
        %596 = vmatpush.bf16.msra.mxu0 0
        %597 = vmatpush.bf16.msra.mxu0 0
        %598 = vmatpush.bf16.msra.mxu0 0
        %599 = vmatpush.bf16.msra.mxu0 0
        %600 = vmatpush.bf16.msra.mxu0 0
        %601 = vmatpush.bf16.msra.mxu0 %v579
        %602 = vmatmul.bf16.gmra.mxu0 %v583
        %v603 = vpop.f32.mrf.mxu0
        %v604 = vadd.f32 0.0, %v603
        %v605 = vpop.f32.mrf.mxu0
        %v606 = vadd.f32 0.0, %v605
        %607 = vmatmul.bf16.gmra.mxu0 %v586
        %v608 = vpop.f32.mrf.mxu0
        %v609 = vadd.f32 0.0, %v608
        %v610 = vpop.f32.mrf.mxu0
        %v611 = vadd.f32 0.0, %v610
        %612 = vmatmul.bf16.gmra.mxu0 %v589
        %v613 = vpop.f32.mrf.mxu0
        %v614 = vadd.f32 0.0, %v613
        %v615 = vpop.f32.mrf.mxu0
        %v616 = vadd.f32 0.0, %v615
        %617 = vmatmul.bf16.gmra.mxu0 %v592
        %v618 = vpop.f32.mrf.mxu0
        %v619 = vadd.f32 0.0, %v618
        %v620 = vpop.f32.mrf.mxu0
        %v621 = vadd.f32 0.0, %v620
        %622 = vdwg.mxu0
        %v631 = vunpack.c.l.b16 %v534
        %v632 = vunpack.c.l.b16 %v535
        %v633 = vunpack.c.l.b16 %v536
        %v634 = vunpack.c.l.b16 %v537
        %v635 = vunpack.c.l.b16 %v538
        %v636 = vunpack.c.l.b16 %v539
        %v637 = vunpack.c.l.b16 %v540
        %v638 = vunpack.c.l.b16 %v541
        %v639 = vpack.c.b16 %v632, %v631
        %v640 = vpack.c.b16 %v634, %v633
        %v641 = vpack.c.b16 %v636, %v635
        %v642 = vpack.c.b16 %v638, %v637
        %v645 = vunpack.c.l.b16 %v542
        %v646 = vunpack.c.l.b16 %v543
        %v647 = vpack.c.b16 %v646, %v645
        %v650 = vsel %vm581, %v639, 0
        %v653 = vsel %vm581, %v640, 0
        %v656 = vsel %vm581, %v641, 0
        %v659 = vsel %vm581, %v642, 0
        %661 = vmatpush.bf16.msra.mxu0 0
        %662 = vmatpush.bf16.msra.mxu0 0
        %663 = vmatpush.bf16.msra.mxu0 0
        %664 = vmatpush.bf16.msra.mxu0 0
        %665 = vmatpush.bf16.msra.mxu0 0
        %666 = vmatpush.bf16.msra.mxu0 0
        %667 = vmatpush.bf16.msra.mxu0 0
        %668 = vmatpush.bf16.msra.mxu0 %v647
        %669 = vmatmul.bf16.gmra.mxu0 %v650
        %v670 = vpop.f32.mrf.mxu0
        %v671 = vadd.f32 %v604, %v670
        %v672 = vpop.f32.mrf.mxu0
        %v673 = vadd.f32 %v606, %v672
        %674 = vmatmul.bf16.gmra.mxu0 %v653
        %v675 = vpop.f32.mrf.mxu0
        %v676 = vadd.f32 %v609, %v675
        %v677 = vpop.f32.mrf.mxu0
        %v678 = vadd.f32 %v611, %v677
        %679 = vmatmul.bf16.gmra.mxu0 %v656
        %v680 = vpop.f32.mrf.mxu0
        %v681 = vadd.f32 %v614, %v680
        %v682 = vpop.f32.mrf.mxu0
        %v683 = vadd.f32 %v616, %v682
        %684 = vmatmul.bf16.gmra.mxu0 %v659
        %v685 = vpop.f32.mrf.mxu0
        %v686 = vadd.f32 %v619, %v685
        %v687 = vpop.f32.mrf.mxu0
        %v688 = vadd.f32 %v621, %v687
        %689 = vdwg.mxu0
        %v690 = vld [vmem:[%s475] sm:$0xf]
        %v691 = vld [vmem:[%s475 + $0x4] sm:$0x1]
        %v692 = vld [vmem:[%s475 + $0x8] sm:$0xf]
        %v693 = vld [vmem:[%s475 + $0xc] sm:$0x1]
        %v694 = vld [vmem:[%s475 + $0x10] sm:$0xf]
        %v695 = vld [vmem:[%s475 + $0x14] sm:$0x1]
        %v696 = vld [vmem:[%s475 + $0x18] sm:$0xf]
        %v697 = vld [vmem:[%s475 + $0x1c] sm:$0x1]
        %v698 = vld [vmem:[%s475 + $0x20] sm:$0xf]
        %v699 = vld [vmem:[%s475 + $0x24] sm:$0x1]
        %v700 = vld [vmem:[%s475 + $0x28] sm:$0xf]
        %v701 = vld [vmem:[%s475 + $0x2c] sm:$0x1]
        %v702 = vld [vmem:[%s475 + $0x30] sm:$0xf]
        %v703 = vld [vmem:[%s475 + $0x34] sm:$0x1]
        %v704 = vld [vmem:[%s475 + $0x38] sm:$0xf]
        %v705 = vld [vmem:[%s475 + $0x3c] sm:$0x1]
        %vm706 = vsmask.f32 3328
        %vm707 = vsmask.f32 7440
        %vm708 = vmor %vm706, %vm707
        %v710 = vshrl.u32 %v690, 16
        %v712 = vrot.slane %v710, 4
        %v713 = vshll.u32 %v690, 16
        %v715 = vrot.slane %v713, 5
        %v716 = vor.u32 %v712, %v715
        %v717 = vrot.slane %v716, 4
        %v719 = vshll.u32 %v691, 16
        %v721 = vrot.slane %v719, 5
        %v722 = vsel %vm708, %v717, %v721
        %v724 = vshrl.u32 %v692, 16
        %v726 = vrot.slane %v724, 4
        %v727 = vshll.u32 %v692, 16
        %v729 = vrot.slane %v727, 5
        %v730 = vor.u32 %v726, %v729
        %v731 = vrot.slane %v730, 4
        %v733 = vshll.u32 %v693, 16
        %v735 = vrot.slane %v733, 5
        %v736 = vsel %vm708, %v731, %v735
        %v738 = vshrl.u32 %v694, 16
        %v740 = vrot.slane %v738, 4
        %v741 = vshll.u32 %v694, 16
        %v743 = vrot.slane %v741, 5
        %v744 = vor.u32 %v740, %v743
        %v745 = vrot.slane %v744, 4
        %v747 = vshll.u32 %v695, 16
        %v749 = vrot.slane %v747, 5
        %v750 = vsel %vm708, %v745, %v749
        %v752 = vshrl.u32 %v696, 16
        %v754 = vrot.slane %v752, 4
        %v755 = vshll.u32 %v696, 16
        %v757 = vrot.slane %v755, 5
        %v758 = vor.u32 %v754, %v757
        %v759 = vrot.slane %v758, 4
        %v761 = vshll.u32 %v697, 16
        %v763 = vrot.slane %v761, 5
        %v764 = vsel %vm708, %v759, %v763
        %v766 = vshrl.u32 %v698, 16
        %v768 = vrot.slane %v766, 4
        %v769 = vshll.u32 %v698, 16
        %v771 = vrot.slane %v769, 5
        %v772 = vor.u32 %v768, %v771
        %v773 = vrot.slane %v772, 4
        %v775 = vshll.u32 %v699, 16
        %v777 = vrot.slane %v775, 5
        %v778 = vsel %vm708, %v773, %v777
        %v780 = vshrl.u32 %v700, 16
        %v782 = vrot.slane %v780, 4
        %v783 = vshll.u32 %v700, 16
        %v785 = vrot.slane %v783, 5
        %v786 = vor.u32 %v782, %v785
        %v787 = vrot.slane %v786, 4
        %v789 = vshll.u32 %v701, 16
        %v791 = vrot.slane %v789, 5
        %v792 = vsel %vm708, %v787, %v791
        %v794 = vshrl.u32 %v702, 16
        %v796 = vrot.slane %v794, 4
        %v797 = vshll.u32 %v702, 16
        %v799 = vrot.slane %v797, 5
        %v800 = vor.u32 %v796, %v799
        %v801 = vrot.slane %v800, 4
        %v803 = vshll.u32 %v703, 16
        %v805 = vrot.slane %v803, 5
        %v806 = vsel %vm708, %v801, %v805
        %v808 = vshrl.u32 %v704, 16
        %v810 = vrot.slane %v808, 4
        %v811 = vshll.u32 %v704, 16
        %v813 = vrot.slane %v811, 5
        %v814 = vor.u32 %v810, %v813
        %v815 = vrot.slane %v814, 4
        %v817 = vshll.u32 %v705, 16
        %v819 = vrot.slane %v817, 5
        %v820 = vsel %vm708, %v815, %v819
        %s821 = scalar_lea.vmem %s6, 16
        %v822 = vld [vmem:[%s821] sm:$0xf]
        %v823 = vld [vmem:[%s821 + $0x4] sm:$0xf]
        %v824 = vunpack.c.l.b16 %v722
        %v825 = vunpack.c.l.b16 %v736
        %v826 = vunpack.c.l.b16 %v750
        %v827 = vunpack.c.l.b16 %v764
        %v828 = vunpack.c.l.b16 %v778
        %v829 = vunpack.c.l.b16 %v792
        %v830 = vunpack.c.l.b16 %v806
        %v831 = vunpack.c.l.b16 %v820
        %v832 = vpack.c.b16 %v825, %v824
        %v833 = vpack.c.b16 %v827, %v826
        %v834 = vpack.c.b16 %v829, %v828
        %v835 = vpack.c.b16 %v831, %v830
        %v838 = vunpack.c.l.b16 %v822
        %v839 = vunpack.c.l.b16 %v823
        %v840 = vpack.c.b16 %v839, %v838
        %v843 = vsel %vm581, %v832, 0
        %v846 = vsel %vm581, %v833, 0
        %v849 = vsel %vm581, %v834, 0
        %v852 = vsel %vm581, %v835, 0
        %854 = vmatpush.bf16.msra.mxu0 0
        %855 = vmatpush.bf16.msra.mxu0 0
        %856 = vmatpush.bf16.msra.mxu0 0
        %857 = vmatpush.bf16.msra.mxu0 0
        %858 = vmatpush.bf16.msra.mxu0 0
        %859 = vmatpush.bf16.msra.mxu0 0
        %860 = vmatpush.bf16.msra.mxu0 0
        %861 = vmatpush.bf16.msra.mxu0 %v840
        %862 = vmatmul.bf16.gmra.mxu0 %v843
        %v863 = vpop.f32.mrf.mxu0
        %v864 = vadd.f32 0.0, %v863
        %v865 = vpop.f32.mrf.mxu0
        %v866 = vadd.f32 0.0, %v865
        %867 = vmatmul.bf16.gmra.mxu0 %v846
        %v868 = vpop.f32.mrf.mxu0
        %v869 = vadd.f32 0.0, %v868
        %v870 = vpop.f32.mrf.mxu0
        %v871 = vadd.f32 0.0, %v870
        %872 = vmatmul.bf16.gmra.mxu0 %v849
        %v873 = vpop.f32.mrf.mxu0
        %v874 = vadd.f32 0.0, %v873
        %v875 = vpop.f32.mrf.mxu0
        %v876 = vadd.f32 0.0, %v875
        %877 = vmatmul.bf16.gmra.mxu0 %v852
        %v878 = vpop.f32.mrf.mxu0
        %v879 = vadd.f32 0.0, %v878
        %v880 = vpop.f32.mrf.mxu0
        %v881 = vadd.f32 0.0, %v880
        %882 = vdwg.mxu0
        %v883 = vadd.f32 %v671, %v864
        %v884 = vadd.f32 %v673, %v866
        %v885 = vadd.f32 %v676, %v869
        %v886 = vadd.f32 %v678, %v871
        %v887 = vadd.f32 %v681, %v874
        %v888 = vadd.f32 %v683, %v876
        %v889 = vadd.f32 %v686, %v879
        %v890 = vadd.f32 %v688, %v881
        %v891 = vld [vmem:[%s497] sm:$0xf]
        %v892 = vld [vmem:[%s497 + $0x8] sm:$0xf]
        %v893 = vld [vmem:[%s497 + $0x10] sm:$0xf]
        %v894 = vld [vmem:[%s497 + $0x18] sm:$0xf]
        %v895 = vld [vmem:[%s497 + $0x20] sm:$0xf]
        %v896 = vld [vmem:[%s497 + $0x28] sm:$0xf]
        %v897 = vld [vmem:[%s497 + $0x30] sm:$0xf]
        %v898 = vld [vmem:[%s497 + $0x38] sm:$0xf]
        %s899 = scalar_lea.vmem %s6, 24
        %v900 = vld [vmem:[%s899] sm:$0xf]
        %v901 = vld [vmem:[%s899 + $0x4] sm:$0xf]
        %v910 = vunpack.c.l.b16 %v891
        %v911 = vunpack.c.l.b16 %v892
        %v912 = vunpack.c.l.b16 %v893
        %v913 = vunpack.c.l.b16 %v894
        %v914 = vunpack.c.l.b16 %v895
        %v915 = vunpack.c.l.b16 %v896
        %v916 = vunpack.c.l.b16 %v897
        %v917 = vunpack.c.l.b16 %v898
        %v918 = vpack.c.b16 %v911, %v910
        %v919 = vpack.c.b16 %v913, %v912
        %v920 = vpack.c.b16 %v915, %v914
        %v921 = vpack.c.b16 %v917, %v916
        %v924 = vunpack.c.l.b16 %v900
        %v925 = vunpack.c.l.b16 %v901
        %v926 = vpack.c.b16 %v925, %v924
        %v929 = vsel %vm581, %v918, 0
        %v932 = vsel %vm581, %v919, 0
        %v935 = vsel %vm581, %v920, 0
        %v938 = vsel %vm581, %v921, 0
        %940 = vmatpush.bf16.msra.mxu0 0
        %941 = vmatpush.bf16.msra.mxu0 0
        %942 = vmatpush.bf16.msra.mxu0 0
        %943 = vmatpush.bf16.msra.mxu0 0
        %944 = vmatpush.bf16.msra.mxu0 0
        %945 = vmatpush.bf16.msra.mxu0 0
        %946 = vmatpush.bf16.msra.mxu0 0
        %947 = vmatpush.bf16.msra.mxu0 %v926
        %948 = vmatmul.bf16.gmra.mxu0 %v929
        %v949 = vpop.f32.mrf.mxu0
        %v950 = vadd.f32 0.0, %v949
        %v951 = vpop.f32.mrf.mxu0
        %v952 = vadd.f32 0.0, %v951
        %953 = vmatmul.bf16.gmra.mxu0 %v932
        %v954 = vpop.f32.mrf.mxu0
        %v955 = vadd.f32 0.0, %v954
        %v956 = vpop.f32.mrf.mxu0
        %v957 = vadd.f32 0.0, %v956
        %958 = vmatmul.bf16.gmra.mxu0 %v935
        %v959 = vpop.f32.mrf.mxu0
        %v960 = vadd.f32 0.0, %v959
        %v961 = vpop.f32.mrf.mxu0
        %v962 = vadd.f32 0.0, %v961
        %963 = vmatmul.bf16.gmra.mxu0 %v938
        %v964 = vpop.f32.mrf.mxu0
        %v965 = vadd.f32 0.0, %v964
        %v966 = vpop.f32.mrf.mxu0
        %v967 = vadd.f32 0.0, %v966
        %968 = vdwg.mxu0
        %v969 = vadd.f32 %v883, %v950
        %v970 = vadd.f32 %v884, %v952
        %v971 = vadd.f32 %v885, %v955
        %v972 = vadd.f32 %v886, %v957
        %v973 = vadd.f32 %v887, %v960
        %v974 = vadd.f32 %v888, %v962
        %v975 = vadd.f32 %v889, %v965
        %v976 = vadd.f32 %v890, %v967
        %v977 = vld [vmem:[%s508] sm:$0xf]
        %v978 = vld [vmem:[%s508 + $0x8] sm:$0xf]
        %v979 = vld [vmem:[%s508 + $0x10] sm:$0xf]
        %v980 = vld [vmem:[%s508 + $0x18] sm:$0xf]
        %v981 = vld [vmem:[%s508 + $0x20] sm:$0xf]
        %v982 = vld [vmem:[%s508 + $0x28] sm:$0xf]
        %v983 = vld [vmem:[%s508 + $0x30] sm:$0xf]
        %v984 = vld [vmem:[%s508 + $0x38] sm:$0xf]
        %s985 = scalar_lea.vmem %s6, 32
        %v986 = vld [vmem:[%s985] sm:$0xf]
        %v987 = vld [vmem:[%s985 + $0x4] sm:$0xf]
        %v996 = vunpack.c.l.b16 %v977
        %v997 = vunpack.c.l.b16 %v978
        %v998 = vunpack.c.l.b16 %v979
        %v999 = vunpack.c.l.b16 %v980
        %v1000 = vunpack.c.l.b16 %v981
        %v1001 = vunpack.c.l.b16 %v982
        %v1002 = vunpack.c.l.b16 %v983
        %v1003 = vunpack.c.l.b16 %v984
        %v1004 = vpack.c.b16 %v997, %v996
        %v1005 = vpack.c.b16 %v999, %v998
        %v1006 = vpack.c.b16 %v1001, %v1000
        %v1007 = vpack.c.b16 %v1003, %v1002
        %v1010 = vunpack.c.l.b16 %v986
        %v1011 = vunpack.c.l.b16 %v987
        %v1012 = vpack.c.b16 %v1011, %v1010
        %v1015 = vsel %vm581, %v1004, 0
        %v1018 = vsel %vm581, %v1005, 0
        %v1021 = vsel %vm581, %v1006, 0
        %v1024 = vsel %vm581, %v1007, 0
        %1026 = vmatpush.bf16.msra.mxu0 0
        %1027 = vmatpush.bf16.msra.mxu0 0
        %1028 = vmatpush.bf16.msra.mxu0 0
        %1029 = vmatpush.bf16.msra.mxu0 0
        %1030 = vmatpush.bf16.msra.mxu0 0
        %1031 = vmatpush.bf16.msra.mxu0 0
        %1032 = vmatpush.bf16.msra.mxu0 0
        %1033 = vmatpush.bf16.msra.mxu0 %v1012
        %1034 = vmatmul.bf16.gmra.mxu0 %v1015
        %v1035 = vpop.f32.mrf.mxu0
        %v1036 = vadd.f32 0.0, %v1035
        %v1037 = vpop.f32.mrf.mxu0
        %v1038 = vadd.f32 0.0, %v1037
        %1039 = vmatmul.bf16.gmra.mxu0 %v1018
        %v1040 = vpop.f32.mrf.mxu0
        %v1041 = vadd.f32 0.0, %v1040
        %v1042 = vpop.f32.mrf.mxu0
        %v1043 = vadd.f32 0.0, %v1042
        %1044 = vmatmul.bf16.gmra.mxu0 %v1021
        %v1045 = vpop.f32.mrf.mxu0
        %v1046 = vadd.f32 0.0, %v1045
        %v1047 = vpop.f32.mrf.mxu0
        %v1048 = vadd.f32 0.0, %v1047
        %1049 = vmatmul.bf16.gmra.mxu0 %v1024
        %v1050 = vpop.f32.mrf.mxu0
        %v1051 = vadd.f32 0.0, %v1050
        %v1052 = vpop.f32.mrf.mxu0
        %v1053 = vadd.f32 0.0, %v1052
        %1054 = vdwg.mxu0
        %v1055 = vadd.f32 %v969, %v1036
        %v1056 = vadd.f32 %v970, %v1038
        %v1057 = vadd.f32 %v971, %v1041
        %v1058 = vadd.f32 %v972, %v1043
        %v1059 = vadd.f32 %v973, %v1046
        %v1060 = vadd.f32 %v974, %v1048
        %v1061 = vadd.f32 %v975, %v1051
        %v1062 = vadd.f32 %v976, %v1053
        %v1063 = vld [vmem:[%s497] sm:$0xf]
        %v1064 = vld [vmem:[%s497 + $0x4] sm:$0x1]
        %v1065 = vld [vmem:[%s497 + $0x8] sm:$0xf]
        %v1066 = vld [vmem:[%s497 + $0xc] sm:$0x1]
        %v1067 = vld [vmem:[%s497 + $0x10] sm:$0xf]
        %v1068 = vld [vmem:[%s497 + $0x14] sm:$0x1]
        %v1069 = vld [vmem:[%s497 + $0x18] sm:$0xf]
        %v1070 = vld [vmem:[%s497 + $0x1c] sm:$0x1]
        %v1071 = vld [vmem:[%s497 + $0x20] sm:$0xf]
        %v1072 = vld [vmem:[%s497 + $0x24] sm:$0x1]
        %v1073 = vld [vmem:[%s497 + $0x28] sm:$0xf]
        %v1074 = vld [vmem:[%s497 + $0x2c] sm:$0x1]
        %v1075 = vld [vmem:[%s497 + $0x30] sm:$0xf]
        %v1076 = vld [vmem:[%s497 + $0x34] sm:$0x1]
        %v1077 = vld [vmem:[%s497 + $0x38] sm:$0xf]
        %v1078 = vld [vmem:[%s497 + $0x3c] sm:$0x1]
        %v1080 = vshrl.u32 %v1063, 16
        %v1082 = vrot.slane %v1080, 4
        %v1083 = vshll.u32 %v1063, 16
        %v1085 = vrot.slane %v1083, 5
        %v1086 = vor.u32 %v1082, %v1085
        %v1087 = vrot.slane %v1086, 4
        %v1089 = vshll.u32 %v1064, 16
        %v1091 = vrot.slane %v1089, 5
        %v1092 = vsel %vm708, %v1087, %v1091
        %v1094 = vshrl.u32 %v1065, 16
        %v1096 = vrot.slane %v1094, 4
        %v1097 = vshll.u32 %v1065, 16
        %v1099 = vrot.slane %v1097, 5
        %v1100 = vor.u32 %v1096, %v1099
        %v1101 = vrot.slane %v1100, 4
        %v1103 = vshll.u32 %v1066, 16
        %v1105 = vrot.slane %v1103, 5
        %v1106 = vsel %vm708, %v1101, %v1105
        %v1108 = vshrl.u32 %v1067, 16
        %v1110 = vrot.slane %v1108, 4
        %v1111 = vshll.u32 %v1067, 16
        %v1113 = vrot.slane %v1111, 5
        %v1114 = vor.u32 %v1110, %v1113
        %v1115 = vrot.slane %v1114, 4
        %v1117 = vshll.u32 %v1068, 16
        %v1119 = vrot.slane %v1117, 5
        %v1120 = vsel %vm708, %v1115, %v1119
        %v1122 = vshrl.u32 %v1069, 16
        %v1124 = vrot.slane %v1122, 4
        %v1125 = vshll.u32 %v1069, 16
        %v1127 = vrot.slane %v1125, 5
        %v1128 = vor.u32 %v1124, %v1127
        %v1129 = vrot.slane %v1128, 4
        %v1131 = vshll.u32 %v1070, 16
        %v1133 = vrot.slane %v1131, 5
        %v1134 = vsel %vm708, %v1129, %v1133
        %v1136 = vshrl.u32 %v1071, 16
        %v1138 = vrot.slane %v1136, 4
        %v1139 = vshll.u32 %v1071, 16
        %v1141 = vrot.slane %v1139, 5
        %v1142 = vor.u32 %v1138, %v1141
        %v1143 = vrot.slane %v1142, 4
        %v1145 = vshll.u32 %v1072, 16
        %v1147 = vrot.slane %v1145, 5
        %v1148 = vsel %vm708, %v1143, %v1147
        %v1150 = vshrl.u32 %v1073, 16
        %v1152 = vrot.slane %v1150, 4
        %v1153 = vshll.u32 %v1073, 16
        %v1155 = vrot.slane %v1153, 5
        %v1156 = vor.u32 %v1152, %v1155
        %v1157 = vrot.slane %v1156, 4
        %v1159 = vshll.u32 %v1074, 16
        %v1161 = vrot.slane %v1159, 5
        %v1162 = vsel %vm708, %v1157, %v1161
        %v1164 = vshrl.u32 %v1075, 16
        %v1166 = vrot.slane %v1164, 4
        %v1167 = vshll.u32 %v1075, 16
        %v1169 = vrot.slane %v1167, 5
        %v1170 = vor.u32 %v1166, %v1169
        %v1171 = vrot.slane %v1170, 4
        %v1173 = vshll.u32 %v1076, 16
        %v1175 = vrot.slane %v1173, 5
        %v1176 = vsel %vm708, %v1171, %v1175
        %v1178 = vshrl.u32 %v1077, 16
        %v1180 = vrot.slane %v1178, 4
        %v1181 = vshll.u32 %v1077, 16
        %v1183 = vrot.slane %v1181, 5
        %v1184 = vor.u32 %v1180, %v1183
        %v1185 = vrot.slane %v1184, 4
        %v1187 = vshll.u32 %v1078, 16
        %v1189 = vrot.slane %v1187, 5
        %v1190 = vsel %vm708, %v1185, %v1189
        %s1191 = scalar_lea.vmem %s6, 40
        %v1192 = vld [vmem:[%s1191] sm:$0xf]
        %v1193 = vld [vmem:[%s1191 + $0x4] sm:$0xf]
        %v1194 = vunpack.c.l.b16 %v1092
        %v1195 = vunpack.c.l.b16 %v1106
        %v1196 = vunpack.c.l.b16 %v1120
        %v1197 = vunpack.c.l.b16 %v1134
        %v1198 = vunpack.c.l.b16 %v1148
        %v1199 = vunpack.c.l.b16 %v1162
        %v1200 = vunpack.c.l.b16 %v1176
        %v1201 = vunpack.c.l.b16 %v1190
        %v1202 = vpack.c.b16 %v1195, %v1194
        %v1203 = vpack.c.b16 %v1197, %v1196
        %v1204 = vpack.c.b16 %v1199, %v1198
        %v1205 = vpack.c.b16 %v1201, %v1200
        %v1208 = vunpack.c.l.b16 %v1192
        %v1209 = vunpack.c.l.b16 %v1193
        %v1210 = vpack.c.b16 %v1209, %v1208
        %v1213 = vsel %vm581, %v1202, 0
        %v1216 = vsel %vm581, %v1203, 0
        %v1219 = vsel %vm581, %v1204, 0
        %v1222 = vsel %vm581, %v1205, 0
        %1224 = vmatpush.bf16.msra.mxu0 0
        %1225 = vmatpush.bf16.msra.mxu0 0
        %1226 = vmatpush.bf16.msra.mxu0 0
        %1227 = vmatpush.bf16.msra.mxu0 0
        %1228 = vmatpush.bf16.msra.mxu0 0
        %1229 = vmatpush.bf16.msra.mxu0 0
        %1230 = vmatpush.bf16.msra.mxu0 0
        %1231 = vmatpush.bf16.msra.mxu0 %v1210
        %1232 = vmatmul.bf16.gmra.mxu0 %v1213
        %v1233 = vpop.f32.mrf.mxu0
        %v1234 = vadd.f32 0.0, %v1233
        %v1235 = vpop.f32.mrf.mxu0
        %v1236 = vadd.f32 0.0, %v1235
        %1237 = vmatmul.bf16.gmra.mxu0 %v1216
        %v1238 = vpop.f32.mrf.mxu0
        %v1239 = vadd.f32 0.0, %v1238
        %v1240 = vpop.f32.mrf.mxu0
        %v1241 = vadd.f32 0.0, %v1240
        %1242 = vmatmul.bf16.gmra.mxu0 %v1219
        %v1243 = vpop.f32.mrf.mxu0
        %v1244 = vadd.f32 0.0, %v1243
        %v1245 = vpop.f32.mrf.mxu0
        %v1246 = vadd.f32 0.0, %v1245
        %1247 = vmatmul.bf16.gmra.mxu0 %v1222
        %v1248 = vpop.f32.mrf.mxu0
        %v1249 = vadd.f32 0.0, %v1248
        %v1250 = vpop.f32.mrf.mxu0
        %v1251 = vadd.f32 0.0, %v1250
        %1252 = vdwg.mxu0
        %v1253 = vadd.f32 %v1055, %v1234
        %v1254 = vadd.f32 %v1056, %v1236
        %v1255 = vadd.f32 %v1057, %v1239
        %v1256 = vadd.f32 %v1058, %v1241
        %v1257 = vadd.f32 %v1059, %v1244
        %v1258 = vadd.f32 %v1060, %v1246
        %v1259 = vadd.f32 %v1061, %v1249
        %v1260 = vadd.f32 %v1062, %v1251
        %v1261 = vld [vmem:[%s519] sm:$0xf]
        %v1262 = vld [vmem:[%s519 + $0x8] sm:$0xf]
        %v1263 = vld [vmem:[%s519 + $0x10] sm:$0xf]
        %v1264 = vld [vmem:[%s519 + $0x18] sm:$0xf]
        %v1265 = vld [vmem:[%s519 + $0x20] sm:$0xf]
        %v1266 = vld [vmem:[%s519 + $0x28] sm:$0xf]
        %v1267 = vld [vmem:[%s519 + $0x30] sm:$0xf]
        %v1268 = vld [vmem:[%s519 + $0x38] sm:$0xf]
        %s1269 = scalar_lea.vmem %s6, 48
        %v1270 = vld [vmem:[%s1269] sm:$0xf]
        %v1271 = vld [vmem:[%s1269 + $0x4] sm:$0xf]
        %v1280 = vunpack.c.l.b16 %v1261
        %v1281 = vunpack.c.l.b16 %v1262
        %v1282 = vunpack.c.l.b16 %v1263
        %v1283 = vunpack.c.l.b16 %v1264
        %v1284 = vunpack.c.l.b16 %v1265
        %v1285 = vunpack.c.l.b16 %v1266
        %v1286 = vunpack.c.l.b16 %v1267
        %v1287 = vunpack.c.l.b16 %v1268
        %v1288 = vpack.c.b16 %v1281, %v1280
        %v1289 = vpack.c.b16 %v1283, %v1282
        %v1290 = vpack.c.b16 %v1285, %v1284
        %v1291 = vpack.c.b16 %v1287, %v1286
        %v1294 = vunpack.c.l.b16 %v1270
        %v1295 = vunpack.c.l.b16 %v1271
        %v1296 = vpack.c.b16 %v1295, %v1294
        %v1299 = vsel %vm581, %v1288, 0
        %v1302 = vsel %vm581, %v1289, 0
        %v1305 = vsel %vm581, %v1290, 0
        %v1308 = vsel %vm581, %v1291, 0
        %1310 = vmatpush.bf16.msra.mxu0 0
        %1311 = vmatpush.bf16.msra.mxu0 0
        %1312 = vmatpush.bf16.msra.mxu0 0
        %1313 = vmatpush.bf16.msra.mxu0 0
        %1314 = vmatpush.bf16.msra.mxu0 0
        %1315 = vmatpush.bf16.msra.mxu0 0
        %1316 = vmatpush.bf16.msra.mxu0 0
        %1317 = vmatpush.bf16.msra.mxu0 %v1296
        %1318 = vmatmul.bf16.gmra.mxu0 %v1299
        %v1319 = vpop.f32.mrf.mxu0
        %v1320 = vadd.f32 0.0, %v1319
        %v1321 = vpop.f32.mrf.mxu0
        %v1322 = vadd.f32 0.0, %v1321
        %1323 = vmatmul.bf16.gmra.mxu0 %v1302
        %v1324 = vpop.f32.mrf.mxu0
        %v1325 = vadd.f32 0.0, %v1324
        %v1326 = vpop.f32.mrf.mxu0
        %v1327 = vadd.f32 0.0, %v1326
        %1328 = vmatmul.bf16.gmra.mxu0 %v1305
        %v1329 = vpop.f32.mrf.mxu0
        %v1330 = vadd.f32 0.0, %v1329
        %v1331 = vpop.f32.mrf.mxu0
        %v1332 = vadd.f32 0.0, %v1331
        %1333 = vmatmul.bf16.gmra.mxu0 %v1308
        %v1334 = vpop.f32.mrf.mxu0
        %v1335 = vadd.f32 0.0, %v1334
        %v1336 = vpop.f32.mrf.mxu0
        %v1337 = vadd.f32 0.0, %v1336
        %1338 = vdwg.mxu0
        %v1339 = vadd.f32 %v1253, %v1320
        %v1340 = vadd.f32 %v1254, %v1322
        %v1341 = vadd.f32 %v1255, %v1325
        %v1342 = vadd.f32 %v1256, %v1327
        %v1343 = vadd.f32 %v1257, %v1330
        %v1344 = vadd.f32 %v1258, %v1332
        %v1345 = vadd.f32 %v1259, %v1335
        %v1346 = vadd.f32 %v1260, %v1337
        %v1347 = vld [vmem:[%s530] sm:$0xf]
        %v1348 = vld [vmem:[%s530 + $0x8] sm:$0xf]
        %v1349 = vld [vmem:[%s530 + $0x10] sm:$0xf]
        %v1350 = vld [vmem:[%s530 + $0x18] sm:$0xf]
        %v1351 = vld [vmem:[%s530 + $0x20] sm:$0xf]
        %v1352 = vld [vmem:[%s530 + $0x28] sm:$0xf]
        %v1353 = vld [vmem:[%s530 + $0x30] sm:$0xf]
        %v1354 = vld [vmem:[%s530 + $0x38] sm:$0xf]
        %s1355 = scalar_lea.vmem %s6, 56
        %v1356 = vld [vmem:[%s1355] sm:$0xf]
        %v1357 = vld [vmem:[%s1355 + $0x4] sm:$0xf]
        %v1366 = vunpack.c.l.b16 %v1347
        %v1367 = vunpack.c.l.b16 %v1348
        %v1368 = vunpack.c.l.b16 %v1349
        %v1369 = vunpack.c.l.b16 %v1350
        %v1370 = vunpack.c.l.b16 %v1351
        %v1371 = vunpack.c.l.b16 %v1352
        %v1372 = vunpack.c.l.b16 %v1353
        %v1373 = vunpack.c.l.b16 %v1354
        %v1374 = vpack.c.b16 %v1367, %v1366
        %v1375 = vpack.c.b16 %v1369, %v1368
        %v1376 = vpack.c.b16 %v1371, %v1370
        %v1377 = vpack.c.b16 %v1373, %v1372
        %v1380 = vunpack.c.l.b16 %v1356
        %v1381 = vunpack.c.l.b16 %v1357
        %v1382 = vpack.c.b16 %v1381, %v1380
        %v1385 = vsel %vm581, %v1374, 0
        %v1388 = vsel %vm581, %v1375, 0
        %v1391 = vsel %vm581, %v1376, 0
        %v1394 = vsel %vm581, %v1377, 0
        %1396 = vmatpush.bf16.msra.mxu0 0
        %1397 = vmatpush.bf16.msra.mxu0 0
        %1398 = vmatpush.bf16.msra.mxu0 0
        %1399 = vmatpush.bf16.msra.mxu0 0
        %1400 = vmatpush.bf16.msra.mxu0 0
        %1401 = vmatpush.bf16.msra.mxu0 0
        %1402 = vmatpush.bf16.msra.mxu0 0
        %1403 = vmatpush.bf16.msra.mxu0 %v1382
        %1404 = vmatmul.bf16.gmra.mxu0 %v1385
        %v1405 = vpop.f32.mrf.mxu0
        %v1406 = vadd.f32 0.0, %v1405
        %v1407 = vpop.f32.mrf.mxu0
        %v1408 = vadd.f32 0.0, %v1407
        %1409 = vmatmul.bf16.gmra.mxu0 %v1388
        %v1410 = vpop.f32.mrf.mxu0
        %v1411 = vadd.f32 0.0, %v1410
        %v1412 = vpop.f32.mrf.mxu0
        %v1413 = vadd.f32 0.0, %v1412
        %1414 = vmatmul.bf16.gmra.mxu0 %v1391
        %v1415 = vpop.f32.mrf.mxu0
        %v1416 = vadd.f32 0.0, %v1415
        %v1417 = vpop.f32.mrf.mxu0
        %v1418 = vadd.f32 0.0, %v1417
        %1419 = vmatmul.bf16.gmra.mxu0 %v1394
        %v1420 = vpop.f32.mrf.mxu0
        %v1421 = vadd.f32 0.0, %v1420
        %v1422 = vpop.f32.mrf.mxu0
        %v1423 = vadd.f32 0.0, %v1422
        %1424 = vdwg.mxu0
        %v1425 = vadd.f32 %v1339, %v1406
        %v1426 = vadd.f32 %v1340, %v1408
        %v1427 = vadd.f32 %v1341, %v1411
        %v1428 = vadd.f32 %v1342, %v1413
        %v1429 = vadd.f32 %v1343, %v1416
        %v1430 = vadd.f32 %v1344, %v1418
        %v1431 = vadd.f32 %v1345, %v1421
        %v1432 = vadd.f32 %v1346, %v1423
        %v1433 = vld [vmem:[%s519] sm:$0xf]
        %v1434 = vld [vmem:[%s519 + $0x4] sm:$0x1]
        %v1435 = vld [vmem:[%s519 + $0x8] sm:$0xf]
        %v1436 = vld [vmem:[%s519 + $0xc] sm:$0x1]
        %v1437 = vld [vmem:[%s519 + $0x10] sm:$0xf]
        %v1438 = vld [vmem:[%s519 + $0x14] sm:$0x1]
        %v1439 = vld [vmem:[%s519 + $0x18] sm:$0xf]
        %v1440 = vld [vmem:[%s519 + $0x1c] sm:$0x1]
        %v1441 = vld [vmem:[%s519 + $0x20] sm:$0xf]
        %v1442 = vld [vmem:[%s519 + $0x24] sm:$0x1]
        %v1443 = vld [vmem:[%s519 + $0x28] sm:$0xf]
        %v1444 = vld [vmem:[%s519 + $0x2c] sm:$0x1]
        %v1445 = vld [vmem:[%s519 + $0x30] sm:$0xf]
        %v1446 = vld [vmem:[%s519 + $0x34] sm:$0x1]
        %v1447 = vld [vmem:[%s519 + $0x38] sm:$0xf]
        %v1448 = vld [vmem:[%s519 + $0x3c] sm:$0x1]
        %v1450 = vshrl.u32 %v1433, 16
        %v1452 = vrot.slane %v1450, 4
        %v1453 = vshll.u32 %v1433, 16
        %v1455 = vrot.slane %v1453, 5
        %v1456 = vor.u32 %v1452, %v1455
        %v1457 = vrot.slane %v1456, 4
        %v1459 = vshll.u32 %v1434, 16
        %v1461 = vrot.slane %v1459, 5
        %v1462 = vsel %vm708, %v1457, %v1461
        %v1464 = vshrl.u32 %v1435, 16
        %v1466 = vrot.slane %v1464, 4
        %v1467 = vshll.u32 %v1435, 16
        %v1469 = vrot.slane %v1467, 5
        %v1470 = vor.u32 %v1466, %v1469
        %v1471 = vrot.slane %v1470, 4
        %v1473 = vshll.u32 %v1436, 16
        %v1475 = vrot.slane %v1473, 5
        %v1476 = vsel %vm708, %v1471, %v1475
        %v1478 = vshrl.u32 %v1437, 16
        %v1480 = vrot.slane %v1478, 4
        %v1481 = vshll.u32 %v1437, 16
        %v1483 = vrot.slane %v1481, 5
        %v1484 = vor.u32 %v1480, %v1483
        %v1485 = vrot.slane %v1484, 4
        %v1487 = vshll.u32 %v1438, 16
        %v1489 = vrot.slane %v1487, 5
        %v1490 = vsel %vm708, %v1485, %v1489
        %v1492 = vshrl.u32 %v1439, 16
        %v1494 = vrot.slane %v1492, 4
        %v1495 = vshll.u32 %v1439, 16
        %v1497 = vrot.slane %v1495, 5
        %v1498 = vor.u32 %v1494, %v1497
        %v1499 = vrot.slane %v1498, 4
        %v1501 = vshll.u32 %v1440, 16
        %v1503 = vrot.slane %v1501, 5
        %v1504 = vsel %vm708, %v1499, %v1503
        %v1506 = vshrl.u32 %v1441, 16
        %v1508 = vrot.slane %v1506, 4
        %v1509 = vshll.u32 %v1441, 16
        %v1511 = vrot.slane %v1509, 5
        %v1512 = vor.u32 %v1508, %v1511
        %v1513 = vrot.slane %v1512, 4
        %v1515 = vshll.u32 %v1442, 16
        %v1517 = vrot.slane %v1515, 5
        %v1518 = vsel %vm708, %v1513, %v1517
        %v1520 = vshrl.u32 %v1443, 16
        %v1522 = vrot.slane %v1520, 4
        %v1523 = vshll.u32 %v1443, 16
        %v1525 = vrot.slane %v1523, 5
        %v1526 = vor.u32 %v1522, %v1525
        %v1527 = vrot.slane %v1526, 4
        %v1529 = vshll.u32 %v1444, 16
        %v1531 = vrot.slane %v1529, 5
        %v1532 = vsel %vm708, %v1527, %v1531
        %v1534 = vshrl.u32 %v1445, 16
        %v1536 = vrot.slane %v1534, 4
        %v1537 = vshll.u32 %v1445, 16
        %v1539 = vrot.slane %v1537, 5
        %v1540 = vor.u32 %v1536, %v1539
        %v1541 = vrot.slane %v1540, 4
        %v1543 = vshll.u32 %v1446, 16
        %v1545 = vrot.slane %v1543, 5
        %v1546 = vsel %vm708, %v1541, %v1545
        %v1548 = vshrl.u32 %v1447, 16
        %v1550 = vrot.slane %v1548, 4
        %v1551 = vshll.u32 %v1447, 16
        %v1553 = vrot.slane %v1551, 5
        %v1554 = vor.u32 %v1550, %v1553
        %v1555 = vrot.slane %v1554, 4
        %v1557 = vshll.u32 %v1448, 16
        %v1559 = vrot.slane %v1557, 5
        %v1560 = vsel %vm708, %v1555, %v1559
        %s1561 = scalar_lea.vmem %s6, 64
        %v1562 = vld [vmem:[%s1561] sm:$0xf]
        %v1563 = vld [vmem:[%s1561 + $0x4] sm:$0xf]
        %v1564 = vunpack.c.l.b16 %v1462
        %v1565 = vunpack.c.l.b16 %v1476
        %v1566 = vunpack.c.l.b16 %v1490
        %v1567 = vunpack.c.l.b16 %v1504
        %v1568 = vunpack.c.l.b16 %v1518
        %v1569 = vunpack.c.l.b16 %v1532
        %v1570 = vunpack.c.l.b16 %v1546
        %v1571 = vunpack.c.l.b16 %v1560
        %v1572 = vpack.c.b16 %v1565, %v1564
        %v1573 = vpack.c.b16 %v1567, %v1566
        %v1574 = vpack.c.b16 %v1569, %v1568
        %v1575 = vpack.c.b16 %v1571, %v1570
        %v1578 = vunpack.c.l.b16 %v1562
        %v1579 = vunpack.c.l.b16 %v1563
        %v1580 = vpack.c.b16 %v1579, %v1578
        %v1583 = vsel %vm581, %v1572, 0
        %v1586 = vsel %vm581, %v1573, 0
        %v1589 = vsel %vm581, %v1574, 0
        %v1592 = vsel %vm581, %v1575, 0
        %1594 = vmatpush.bf16.msra.mxu0 0
        %1595 = vmatpush.bf16.msra.mxu0 0
        %1596 = vmatpush.bf16.msra.mxu0 0
        %1597 = vmatpush.bf16.msra.mxu0 0
        %1598 = vmatpush.bf16.msra.mxu0 0
        %1599 = vmatpush.bf16.msra.mxu0 0
        %1600 = vmatpush.bf16.msra.mxu0 0
        %1601 = vmatpush.bf16.msra.mxu0 %v1580
        %1602 = vmatmul.bf16.gmra.mxu0 %v1583
        %v1603 = vpop.f32.mrf.mxu0
        %v1604 = vadd.f32 0.0, %v1603
        %v1605 = vpop.f32.mrf.mxu0
        %v1606 = vadd.f32 0.0, %v1605
        %1607 = vmatmul.bf16.gmra.mxu0 %v1586
        %v1608 = vpop.f32.mrf.mxu0
        %v1609 = vadd.f32 0.0, %v1608
        %v1610 = vpop.f32.mrf.mxu0
        %v1611 = vadd.f32 0.0, %v1610
        %1612 = vmatmul.bf16.gmra.mxu0 %v1589
        %v1613 = vpop.f32.mrf.mxu0
        %v1614 = vadd.f32 0.0, %v1613
        %v1615 = vpop.f32.mrf.mxu0
        %v1616 = vadd.f32 0.0, %v1615
        %1617 = vmatmul.bf16.gmra.mxu0 %v1592
        %v1618 = vpop.f32.mrf.mxu0
        %v1619 = vadd.f32 0.0, %v1618
        %v1620 = vpop.f32.mrf.mxu0
        %v1621 = vadd.f32 0.0, %v1620
        %1622 = vdwg.mxu0
        %v1623 = vadd.f32 %v1425, %v1604
        %v1624 = vadd.f32 %v1426, %v1606
        %v1625 = vadd.f32 %v1427, %v1609
        %v1626 = vadd.f32 %v1428, %v1611
        %v1627 = vadd.f32 %v1429, %v1614
        %v1628 = vadd.f32 %v1430, %v1616
        %v1629 = vadd.f32 %v1431, %v1619
        %v1630 = vadd.f32 %v1432, %v1621
        %v1631 = vld [vmem:[%s7] sm:$0x1]
        %v1633 = vperm.slane %v1631, 0
        %v1635 = vadd.f32 %v1623, %v1633
        %v1636 = vadd.f32 %v1624, %v1633
        %v1637 = vadd.f32 %v1625, %v1633
        %v1638 = vadd.f32 %v1626, %v1633
        %v1639 = vadd.f32 %v1627, %v1633
        %v1640 = vadd.f32 %v1628, %v1633
        %v1641 = vadd.f32 %v1629, %v1633
        %v1642 = vadd.f32 %v1630, %v1633
        %vm1643 = vcmask 261120
        %1644 = vst.msk [vmem:[%s465] sm:$0xff] %vm1643, %v1635
        %1645 = vst.msk [vmem:[%s465 + $0x8] sm:$0xff] %vm1643, %v1636
        %1646 = vst.msk [vmem:[%s465 + $0x10] sm:$0xff] %vm1643, %v1637
        %1647 = vst.msk [vmem:[%s465 + $0x18] sm:$0xff] %vm1643, %v1638
        %1648 = vst.msk [vmem:[%s465 + $0x20] sm:$0xff] %vm1643, %v1639
        %1649 = vst.msk [vmem:[%s465 + $0x28] sm:$0xff] %vm1643, %v1640
        %1650 = vst.msk [vmem:[%s465 + $0x30] sm:$0xff] %vm1643, %v1641
        %1651 = vst.msk [vmem:[%s465 + $0x38] sm:$0xff] %vm1643, %v1642
        %s1652 = sand.u32 %s254, 1
        %s1653 = scalar_lea.sflag [#allocation3], %s1652
        %s1654 = sand.u32 %s254, 1
        %s1655 = smul.addr %s1654, 64
        %s1656 = scalar_lea.vmem [#allocation2], %s1655
        // Predicated region
        $region53: #{stem_conv_forward.3} parent=51 // pred_check
          %p1657 = pneg %p264
        $region54: #{stem_conv_forward.3} parent=51 // pred_check_branch
          %1659 = sbr.rel (%p1657) target = $region56
        $region55: #{stem_conv_forward.3} parent=51 // pred_region
          %s1660 = smul.u32 8, %s27
          %1662 = vsyncadd %s1653, 0
          %s1663 = smul.addr %s26, 8
          %s1664 = sadd.s32 %s1660, %s1663
          %s1665 = smul.addr %s1664, 8
          %s1666 = scalar_lea.hbm %s8, %s1665
          %s1667 = sshll.u32 %s1656, 4
          %s1668 = int_to_ptr.vmem [resolvable:$true] %s1667
          %s1669 = sshll.u32 %s1666, 4
          %s1670 = int_to_ptr.hbm [resolvable:$true] %s1669
          %1675 = dma.vmem_to_hbm [thread:$0]  %s1668, 1024, %s1670, %s1653, 128, 128, 8
        $region56: #{stem_conv_forward.3} parent=51 // pred_fallthru
          _
      $region52: #{stem_conv_forward.3} parent=5 // pred_fallthru
        _
      %p1676 = scmp.le.s32.totalorder 2, %s17
      // Predicated region
      $region57: #{stem_conv_forward.3} parent=5 // pred_check
        %p1677 = pneg %p1676
      $region58: #{stem_conv_forward.3} parent=5 // pred_check_branch
        %1679 = sbr.rel (%p1677) target = $region60
      $region59: #{stem_conv_forward.3} parent=5 // pred_region
        %s1680 = ssub.s32 %s17, 2
        // Predicated region
        $region61: #{stem_conv_forward.3} parent=59 // pred_check
          %p1681 = pneg %p270
        $region62: #{stem_conv_forward.3} parent=59 // pred_check_branch
          %1683 = sbr.rel (%p1681) target = $region64
        $region63: #{stem_conv_forward.3} parent=59 // pred_region
          %s1684 = sand.u32 %s255, 1
          %s1685 = scalar_lea.sflag [#allocation3], %s1684
          %s1686 = sand.u32 %s255, 1
          %s1687 = smul.addr %s1686, 64
          %s1688 = scalar_lea.vmem [#allocation2], %s1687
          %1690 = dma.done %s1685, 1024
        $region64: #{stem_conv_forward.3} parent=59 // pred_fallthru
          _
      $region60: #{stem_conv_forward.3} parent=5 // pred_fallthru
        _
    $region6: #{stem_conv_forward.3} parent=1 // loop_footer
      %s21 = sadd.s32 1, %s17
    $region7: #{stem_conv_forward.3} parent=1 // loop_footer_branch
      %16 = sbr.rel target = $region3
    $region8: #{stem_conv_forward.3} parent=1 // loop_exit
      _
    %1691 = vsyncpa [#allocation3], 1
    %s1692 = scalar_lea.sflag [#allocation3], 1
    %1693 = vsyncpa %s1692, 1

// kernel: stem_conv_forward.2
$region0: #{stem_conv_forward.2}
  #allocation0 [shape = 'u32[]', space=smem, size = 0x4, offset = 0x4, fixed_abs, tag = 'smem constant byte address 0x4 - core index']
  #allocation1 [shape = 'u32[72,128]{1,0:T(1,128)}', space=vmem, size = 0x9000, scoped, tag = 'internal scratch']
  %s0 = inlined_call_operand.vmem [shape: bf16[2,16,17,3], index: 0, kind: input, shape index: {}]
  %s1 = inlined_call_operand.vmem [shape: bf16[2,16,17,3], index: 1, kind: input, shape index: {}]
  %s2 = inlined_call_operand.vmem [shape: bf16[2,16,17,3], index: 2, kind: input, shape index: {}]
  %s3 = inlined_call_operand.vmem [shape: bf16[2,16,17,3], index: 3, kind: input, shape index: {}]
  %s4 = inlined_call_operand.vmem [shape: bf16[2,16,17,3], index: 4, kind: input, shape index: {}]
  %s5 = inlined_call_operand.vmem [shape: bf16[2,16,17,3], index: 5, kind: input, shape index: {}]
  %s6 = inlined_call_operand.vmem [shape: bf16[3,3,3,16], index: 6, kind: input, shape index: {}]
  %s7 = inlined_call_operand.vmem [shape: f32[1,16], index: 7, kind: input, shape index: {}]
  %s8 = inlined_call_operand.vmem [shape: bf16[2,16,16,16], index: 8, kind: output, shape index: {}]
  %s9 = sld [smem:[#allocation0]]
  $region65: #{stem_conv_forward.2} parent=0
    _
  %s11 = ssub.s32 1, %s9
  %s12 = scalar_select 0, %s11, %s9
  loop: start=0, step=1, limit=4
  $region2: #{stem_conv_forward.2} parent=0 // loop_pre_header
    _
  $region3: #{stem_conv_forward.2} parent=0 // loop_header
    %s14 = sphi 0, %s18
    %p15 = scmp.ge.s32.totalorder %s14, 4
    %s21 = sphi 0, %s33
    %s22 = sphi 0, %s29
    %s23 = sphi 0, %s21
    %s24 = sphi 0, %s22
    %s25 = sphi 0, %s23
    %s26 = sphi 0, %s24
    %s38 = sphi 0, %s40
    %s41 = sphi 0, %s38
    %s42 = sphi 0, %s41
    %s58 = sphi 0, %s42
    %s66 = sphi 0, %s68
    %s69 = sphi 0, %s66
    %s70 = sphi 0, %s69
    %s86 = sphi 0, %s70
    %s94 = sphi 0, %s96
    %s97 = sphi 0, %s94
    %s98 = sphi 0, %s97
    %s114 = sphi 0, %s98
    %s122 = sphi 0, %s124
    %s125 = sphi 0, %s122
    %s126 = sphi 0, %s125
    %s142 = sphi 0, %s126
    %s150 = sphi 0, %s152
    %s153 = sphi 0, %s150
    %s154 = sphi 0, %s153
    %s170 = sphi 0, %s154
    %s178 = sphi 0, %s180
    %s181 = sphi 0, %s178
    %s182 = sphi 0, %s181
    %s198 = sphi 0, %s182
    %s202 = sphi 0, %s202
    %s204 = sphi 0, %s202
    %s205 = sphi 0, %s204
    %s219 = sphi 0, %s205
    %s223 = sphi 0, %s223
    %s225 = sphi 0, %s223
    %s226 = sphi 0, %s225
    %s240 = sphi 0, %s226
    %s248 = sphi 0, %s250
    %s251 = sphi 0, %s248
    %s252 = sphi 0, %s251
    %s268 = sphi 0, %s252
  $region4: #{stem_conv_forward.2} parent=0 // loop_header_branch
    %17 = sbr.rel (%p15) target = $region8
  $region5: #{stem_conv_forward.2} parent=0 // loop_body
    %s19 = ssub.s32 %s14, 1
    %s20 = ssub.s32 %s14, 2
    %s27 = sadd.s32 1, %s22
    %p28 = scmp.ge.s32.totalorder %s27, 1
    %s29 = scalar_select %p28, 0, %s27
    %s30 = sadd.s32 1, %s21
    %s31 = scalar_select %p28, %s30, %s21
    %p32 = scmp.ge.s32.totalorder %s31, 2
    %s33 = scalar_select %p32, 0, %s31
    %s34 = ssub.s32 %s21, %s33
    %s35 = ssub.s32 %s22, %s29
    %s36 = sor.u32 %s34, %s35
    %p37 = scmp.eq.s32.totalorder %s36, 0
    %s39 = sadd.s32 %s38, 1
    %s40 = scalar_select %p37, %s38, %s39
    %p43 = pneg %p37
    %p44 = scmp.eq.s32.totalorder %s14, 1
    %p45 = por %p43, %p44
    %p46 = scmp.ne.s32.totalorder %s38, %s41
    %p47 = scmp.eq.s32.totalorder %s14, 0
    %p48 = por %p46, %p47
    %p49 = scmp.ne.s32.totalorder %s38, %s41
    %p50 = scmp.eq.s32.totalorder %s19, 1
    %p51 = por %p49, %p50
    %p52 = scmp.ne.s32.totalorder %s41, %s42
    %p53 = scmp.eq.s32.totalorder %s19, 0
    %p54 = por %p52, %p53
    %p55 = scmp.ne.s32.totalorder %s41, %s42
    %p56 = scmp.eq.s32.totalorder %s20, 1
    %p57 = por %p55, %p56
    %p59 = scmp.ne.s32.totalorder %s42, %s58
    %p60 = scmp.eq.s32.totalorder %s20, 0
    %p61 = por %p59, %p60
    %s62 = ssub.s32 %s21, %s33
    %s63 = ssub.s32 %s22, %s29
    %s64 = sor.u32 %s62, %s63
    %p65 = scmp.eq.s32.totalorder %s64, 0
    %s67 = sadd.s32 %s66, 1
    %s68 = scalar_select %p65, %s66, %s67
    %p71 = pneg %p65
    %p72 = scmp.eq.s32.totalorder %s14, 1
    %p73 = por %p71, %p72
    %p74 = scmp.ne.s32.totalorder %s66, %s69
    %p75 = scmp.eq.s32.totalorder %s14, 0
    %p76 = por %p74, %p75
    %p77 = scmp.ne.s32.totalorder %s66, %s69
    %p78 = scmp.eq.s32.totalorder %s19, 1
    %p79 = por %p77, %p78
    %p80 = scmp.ne.s32.totalorder %s69, %s70
    %p81 = scmp.eq.s32.totalorder %s19, 0
    %p82 = por %p80, %p81
    %p83 = scmp.ne.s32.totalorder %s69, %s70
    %p84 = scmp.eq.s32.totalorder %s20, 1
    %p85 = por %p83, %p84
    %p87 = scmp.ne.s32.totalorder %s70, %s86
    %p88 = scmp.eq.s32.totalorder %s20, 0
    %p89 = por %p87, %p88
    %s90 = ssub.s32 %s21, %s33
    %s91 = ssub.s32 %s22, %s29
    %s92 = sor.u32 %s90, %s91
    %p93 = scmp.eq.s32.totalorder %s92, 0
    %s95 = sadd.s32 %s94, 1
    %s96 = scalar_select %p93, %s94, %s95
    %p99 = pneg %p93
    %p100 = scmp.eq.s32.totalorder %s14, 1
    %p101 = por %p99, %p100
    %p102 = scmp.ne.s32.totalorder %s94, %s97
    %p103 = scmp.eq.s32.totalorder %s14, 0
    %p104 = por %p102, %p103
    %p105 = scmp.ne.s32.totalorder %s94, %s97
    %p106 = scmp.eq.s32.totalorder %s19, 1
    %p107 = por %p105, %p106
    %p108 = scmp.ne.s32.totalorder %s97, %s98
    %p109 = scmp.eq.s32.totalorder %s19, 0
    %p110 = por %p108, %p109
    %p111 = scmp.ne.s32.totalorder %s97, %s98
    %p112 = scmp.eq.s32.totalorder %s20, 1
    %p113 = por %p111, %p112
    %p115 = scmp.ne.s32.totalorder %s98, %s114
    %p116 = scmp.eq.s32.totalorder %s20, 0
    %p117 = por %p115, %p116
    %s118 = ssub.s32 %s21, %s33
    %s119 = ssub.s32 %s22, %s29
    %s120 = sor.u32 %s118, %s119
    %p121 = scmp.eq.s32.totalorder %s120, 0
    %s123 = sadd.s32 %s122, 1
    %s124 = scalar_select %p121, %s122, %s123
    %p127 = pneg %p121
    %p128 = scmp.eq.s32.totalorder %s14, 1
    %p129 = por %p127, %p128
    %p130 = scmp.ne.s32.totalorder %s122, %s125
    %p131 = scmp.eq.s32.totalorder %s14, 0
    %p132 = por %p130, %p131
    %p133 = scmp.ne.s32.totalorder %s122, %s125
    %p134 = scmp.eq.s32.totalorder %s19, 1
    %p135 = por %p133, %p134
    %p136 = scmp.ne.s32.totalorder %s125, %s126
    %p137 = scmp.eq.s32.totalorder %s19, 0
    %p138 = por %p136, %p137
    %p139 = scmp.ne.s32.totalorder %s125, %s126
    %p140 = scmp.eq.s32.totalorder %s20, 1
    %p141 = por %p139, %p140
    %p143 = scmp.ne.s32.totalorder %s126, %s142
    %p144 = scmp.eq.s32.totalorder %s20, 0
    %p145 = por %p143, %p144
    %s146 = ssub.s32 %s21, %s33
    %s147 = ssub.s32 %s22, %s29
    %s148 = sor.u32 %s146, %s147
    %p149 = scmp.eq.s32.totalorder %s148, 0
    %s151 = sadd.s32 %s150, 1
    %s152 = scalar_select %p149, %s150, %s151
    %p155 = pneg %p149
    %p156 = scmp.eq.s32.totalorder %s14, 1
    %p157 = por %p155, %p156
    %p158 = scmp.ne.s32.totalorder %s150, %s153
    %p159 = scmp.eq.s32.totalorder %s14, 0
    %p160 = por %p158, %p159
    %p161 = scmp.ne.s32.totalorder %s150, %s153
    %p162 = scmp.eq.s32.totalorder %s19, 1
    %p163 = por %p161, %p162
    %p164 = scmp.ne.s32.totalorder %s153, %s154
    %p165 = scmp.eq.s32.totalorder %s19, 0
    %p166 = por %p164, %p165
    %p167 = scmp.ne.s32.totalorder %s153, %s154
    %p168 = scmp.eq.s32.totalorder %s20, 1
    %p169 = por %p167, %p168
    %p171 = scmp.ne.s32.totalorder %s154, %s170
    %p172 = scmp.eq.s32.totalorder %s20, 0
    %p173 = por %p171, %p172
    %s174 = ssub.s32 %s21, %s33
    %s175 = ssub.s32 %s22, %s29
    %s176 = sor.u32 %s174, %s175
    %p177 = scmp.eq.s32.totalorder %s176, 0
    %s179 = sadd.s32 %s178, 1
    %s180 = scalar_select %p177, %s178, %s179
    %p183 = pneg %p177
    %p184 = scmp.eq.s32.totalorder %s14, 1
    %p185 = por %p183, %p184
    %p186 = scmp.ne.s32.totalorder %s178, %s181
    %p187 = scmp.eq.s32.totalorder %s14, 0
    %p188 = por %p186, %p187
    %p189 = scmp.ne.s32.totalorder %s178, %s181
    %p190 = scmp.eq.s32.totalorder %s19, 1
    %p191 = por %p189, %p190
    %p192 = scmp.ne.s32.totalorder %s181, %s182
    %p193 = scmp.eq.s32.totalorder %s19, 0
    %p194 = por %p192, %p193
    %p195 = scmp.ne.s32.totalorder %s181, %s182
    %p196 = scmp.eq.s32.totalorder %s20, 1
    %p197 = por %p195, %p196
    %p199 = scmp.ne.s32.totalorder %s182, %s198
    %p200 = scmp.eq.s32.totalorder %s20, 0
    %p201 = por %p199, %p200
    %s203 = sadd.s32 %s202, 1
    %p206 = scmp.eq.s32.totalorder %s14, 1
    %p207 = scmp.ne.s32.totalorder %s202, %s204
    %p208 = scmp.eq.s32.totalorder %s14, 0
    %p209 = por %p207, %p208
    %p210 = scmp.ne.s32.totalorder %s202, %s204
    %p211 = scmp.eq.s32.totalorder %s19, 1
    %p212 = por %p210, %p211
    %p213 = scmp.ne.s32.totalorder %s204, %s205
    %p214 = scmp.eq.s32.totalorder %s19, 0
    %p215 = por %p213, %p214
    %p216 = scmp.ne.s32.totalorder %s204, %s205
    %p217 = scmp.eq.s32.totalorder %s20, 1
    %p218 = por %p216, %p217
    %p220 = scmp.ne.s32.totalorder %s205, %s219
    %p221 = scmp.eq.s32.totalorder %s20, 0
    %p222 = por %p220, %p221
    %s224 = sadd.s32 %s223, 1
    %p227 = scmp.eq.s32.totalorder %s14, 1
    %p228 = scmp.ne.s32.totalorder %s223, %s225
    %p229 = scmp.eq.s32.totalorder %s14, 0
    %p230 = por %p228, %p229
    %p231 = scmp.ne.s32.totalorder %s223, %s225
    %p232 = scmp.eq.s32.totalorder %s19, 1
    %p233 = por %p231, %p232
    %p234 = scmp.ne.s32.totalorder %s225, %s226
    %p235 = scmp.eq.s32.totalorder %s19, 0
    %p236 = por %p234, %p235
    %p237 = scmp.ne.s32.totalorder %s225, %s226
    %p238 = scmp.eq.s32.totalorder %s20, 1
    %p239 = por %p237, %p238
    %p241 = scmp.ne.s32.totalorder %s226, %s240
    %p242 = scmp.eq.s32.totalorder %s20, 0
    %p243 = por %p241, %p242
    %s244 = ssub.s32 %s21, %s33
    %s245 = ssub.s32 %s22, %s29
    %s246 = sor.u32 %s244, %s245
    %p247 = scmp.eq.s32.totalorder %s246, 0
    %s249 = sadd.s32 %s248, 1
    %s250 = scalar_select %p247, %s248, %s249
    %p253 = pneg %p247
    %p254 = scmp.eq.s32.totalorder %s14, 1
    %p255 = por %p253, %p254
    %p256 = scmp.ne.s32.totalorder %s248, %s251
    %p257 = scmp.eq.s32.totalorder %s14, 0
    %p258 = por %p256, %p257
    %p259 = scmp.ne.s32.totalorder %s248, %s251
    %p260 = scmp.eq.s32.totalorder %s19, 1
    %p261 = por %p259, %p260
    %p262 = scmp.ne.s32.totalorder %s251, %s252
    %p263 = scmp.eq.s32.totalorder %s19, 0
    %p264 = por %p262, %p263
    %p265 = scmp.ne.s32.totalorder %s251, %s252
    %p266 = scmp.eq.s32.totalorder %s20, 1
    %p267 = por %p265, %p266
    %p269 = scmp.ne.s32.totalorder %s252, %s268
    %p270 = scmp.eq.s32.totalorder %s20, 0
    %p271 = por %p269, %p270
    %p272 = scmp.le.s32.totalorder 1, %s14
    %p273 = scmp.lt.s32.totalorder %s14, 3
    %p274 = pnand %p272, %p273
    %p275 = pneg %p274
    // Predicated region
    $region9: #{stem_conv_forward.2} parent=5 // pred_check
      _
    $region10: #{stem_conv_forward.2} parent=5 // pred_check_branch
      %277 = sbr.rel (%p274) target = $region12
    $region11: #{stem_conv_forward.2} parent=5 // pred_region
      %s278 = ssub.s32 %s14, 1
      // Predicated region
      $region13: #{stem_conv_forward.2} parent=11 // pred_check
        %p279 = pneg %p215
      $region14: #{stem_conv_forward.2} parent=11 // pred_check_branch
        %281 = sbr.rel (%p279) target = $region16
      $region15: #{stem_conv_forward.2} parent=11 // pred_region
        _
      $region16: #{stem_conv_forward.2} parent=11 // pred_fallthru
        _
      // Predicated region
      $region17: #{stem_conv_forward.2} parent=11 // pred_check
        %p282 = pneg %p236
      $region18: #{stem_conv_forward.2} parent=11 // pred_check_branch
        %284 = sbr.rel (%p282) target = $region20
      $region19: #{stem_conv_forward.2} parent=11 // pred_region
        _
      $region20: #{stem_conv_forward.2} parent=11 // pred_fallthru
        _
    $region12: #{stem_conv_forward.2} parent=5 // pred_fallthru
      _
    %p285 = scmp.lt.s32.totalorder %s14, 2
    // Predicated region
    $region21: #{stem_conv_forward.2} parent=5 // pred_check
      %p286 = pneg %p285
    $region22: #{stem_conv_forward.2} parent=5 // pred_check_branch
      %288 = sbr.rel (%p286) target = $region24
    $region23: #{stem_conv_forward.2} parent=5 // pred_region
      // Predicated region
      $region25: #{stem_conv_forward.2} parent=23 // pred_check
        %p289 = pneg %p48
      $region26: #{stem_conv_forward.2} parent=23 // pred_check_branch
        %291 = sbr.rel (%p289) target = $region28
      $region27: #{stem_conv_forward.2} parent=23 // pred_region
        %s292 = smul.u32 16, %s22
        %p293 = scmp.lt.s32.totalorder %s21, 1
        %s294 = scalar_select %p293, %s21, 1
        %p295 = scmp.lt.s32.totalorder %s292, 15
        %s296 = scalar_select %p295, %s292, 15
        %s297 = smul.addr %s296, 3
        %s298 = smul.addr %s294, 48
        %s299 = sadd.s32 %s297, %s298
        %s300 = smul.addr %s299, 4
        %s301 = scalar_lea.vmem %s0, %s300
        %s302 = smul.u32 16, %s22
      $region28: #{stem_conv_forward.2} parent=23 // pred_fallthru
        _
      // Predicated region
      $region29: #{stem_conv_forward.2} parent=23 // pred_check
        %p303 = pneg %p76
      $region30: #{stem_conv_forward.2} parent=23 // pred_check_branch
        %305 = sbr.rel (%p303) target = $region32
      $region31: #{stem_conv_forward.2} parent=23 // pred_region
        %s306 = smul.u32 16, %s22
        %p307 = scmp.lt.s32.totalorder %s21, 1
        %s308 = scalar_select %p307, %s21, 1
        %p309 = scmp.lt.s32.totalorder %s306, 15
        %s310 = scalar_select %p309, %s306, 15
        %s311 = smul.addr %s310, 3
        %s312 = smul.addr %s308, 48
        %s313 = sadd.s32 %s311, %s312
        %s314 = smul.addr %s313, 4
        %s315 = scalar_lea.vmem %s1, %s314
        %s316 = smul.u32 16, %s22
      $region32: #{stem_conv_forward.2} parent=23 // pred_fallthru
        _
      // Predicated region
      $region33: #{stem_conv_forward.2} parent=23 // pred_check
        %p317 = pneg %p104
      $region34: #{stem_conv_forward.2} parent=23 // pred_check_branch
        %319 = sbr.rel (%p317) target = $region36
      $region35: #{stem_conv_forward.2} parent=23 // pred_region
        %s320 = smul.u32 16, %s22
        %p321 = scmp.lt.s32.totalorder %s21, 1
        %s322 = scalar_select %p321, %s21, 1
        %p323 = scmp.lt.s32.totalorder %s320, 15
        %s324 = scalar_select %p323, %s320, 15
        %s325 = smul.addr %s324, 3
        %s326 = smul.addr %s322, 48
        %s327 = sadd.s32 %s325, %s326
        %s328 = smul.addr %s327, 4
        %s329 = scalar_lea.vmem %s2, %s328
        %s330 = smul.u32 16, %s22
      $region36: #{stem_conv_forward.2} parent=23 // pred_fallthru
        _
      // Predicated region
      $region37: #{stem_conv_forward.2} parent=23 // pred_check
        %p331 = pneg %p132
      $region38: #{stem_conv_forward.2} parent=23 // pred_check_branch
        %333 = sbr.rel (%p331) target = $region40
      $region39: #{stem_conv_forward.2} parent=23 // pred_region
        %s334 = smul.u32 16, %s22
        %p335 = scmp.lt.s32.totalorder %s21, 1
        %s336 = scalar_select %p335, %s21, 1
        %p337 = scmp.lt.s32.totalorder %s334, 15
        %s338 = scalar_select %p337, %s334, 15
        %s339 = smul.addr %s338, 3
        %s340 = smul.addr %s336, 48
        %s341 = sadd.s32 %s339, %s340
        %s342 = smul.addr %s341, 4
        %s343 = scalar_lea.vmem %s3, %s342
        %s344 = smul.u32 16, %s22
      $region40: #{stem_conv_forward.2} parent=23 // pred_fallthru
        _
      // Predicated region
      $region41: #{stem_conv_forward.2} parent=23 // pred_check
        %p345 = pneg %p160
      $region42: #{stem_conv_forward.2} parent=23 // pred_check_branch
        %347 = sbr.rel (%p345) target = $region44
      $region43: #{stem_conv_forward.2} parent=23 // pred_region
        %s348 = smul.u32 16, %s22
        %p349 = scmp.lt.s32.totalorder %s21, 1
        %s350 = scalar_select %p349, %s21, 1
        %p351 = scmp.lt.s32.totalorder %s348, 15
        %s352 = scalar_select %p351, %s348, 15
        %s353 = smul.addr %s352, 3
        %s354 = smul.addr %s350, 48
        %s355 = sadd.s32 %s353, %s354
        %s356 = smul.addr %s355, 4
        %s357 = scalar_lea.vmem %s4, %s356
        %s358 = smul.u32 16, %s22
      $region44: #{stem_conv_forward.2} parent=23 // pred_fallthru
        _
      // Predicated region
      $region45: #{stem_conv_forward.2} parent=23 // pred_check
        %p359 = pneg %p188
      $region46: #{stem_conv_forward.2} parent=23 // pred_check_branch
        %361 = sbr.rel (%p359) target = $region48
      $region47: #{stem_conv_forward.2} parent=23 // pred_region
        %s362 = smul.u32 16, %s22
        %p363 = scmp.lt.s32.totalorder %s21, 1
        %s364 = scalar_select %p363, %s21, 1
        %p365 = scmp.lt.s32.totalorder %s362, 15
        %s366 = scalar_select %p365, %s362, 15
        %s367 = smul.addr %s366, 3
        %s368 = smul.addr %s364, 48
        %s369 = sadd.s32 %s367, %s368
        %s370 = smul.addr %s369, 4
        %s371 = scalar_lea.vmem %s5, %s370
        %s372 = smul.u32 16, %s22
      $region48: #{stem_conv_forward.2} parent=23 // pred_fallthru
        _
    $region24: #{stem_conv_forward.2} parent=5 // pred_fallthru
      _
    %p373 = scmp.le.s32.totalorder 1, %s14
    %p374 = scmp.lt.s32.totalorder %s14, 3
    %p375 = pnand %p373, %p374
    %p376 = pneg %p375
    // Predicated region
    $region49: #{stem_conv_forward.2} parent=5 // pred_check
      _
    $region50: #{stem_conv_forward.2} parent=5 // pred_check_branch
      %378 = sbr.rel (%p375) target = $region52
    $region51: #{stem_conv_forward.2} parent=5 // pred_region
      %s379 = ssub.s32 %s14, 1
      %s380 = smul.u32 16, %s24
      %p381 = scmp.lt.s32.totalorder %s23, 1
      %s382 = scalar_select %p381, %s23, 1
      %p383 = scmp.lt.s32.totalorder %s380, 15
      %s384 = scalar_select %p383, %s380, 15
      %s385 = smul.addr %s384, 3
      %s386 = smul.addr %s382, 48
      %s387 = sadd.s32 %s385, %s386
      %s388 = smul.addr %s387, 4
      %s389 = scalar_lea.vmem %s0, %s388
      %p390 = pneg %p54
      %p391 = pneg %p51
      %s392 = smul.u32 16, %s24
      %p393 = scmp.lt.s32.totalorder %s23, 1
      %s394 = scalar_select %p393, %s23, 1
      %p395 = scmp.lt.s32.totalorder %s392, 15
      %s396 = scalar_select %p395, %s392, 15
      %s397 = smul.addr %s396, 3
      %s398 = smul.addr %s394, 48
      %s399 = sadd.s32 %s397, %s398
      %s400 = smul.addr %s399, 4
      %s401 = scalar_lea.vmem %s1, %s400
      %p402 = pneg %p82
      %p403 = pneg %p79
      %s404 = smul.u32 16, %s24
      %p405 = scmp.lt.s32.totalorder %s23, 1
      %s406 = scalar_select %p405, %s23, 1
      %p407 = scmp.lt.s32.totalorder %s404, 15
      %s408 = scalar_select %p407, %s404, 15
      %s409 = smul.addr %s408, 3
      %s410 = smul.addr %s406, 48
      %s411 = sadd.s32 %s409, %s410
      %s412 = smul.addr %s411, 4
      %s413 = scalar_lea.vmem %s2, %s412
      %p414 = pneg %p110
      %p415 = pneg %p107
      %s416 = smul.u32 16, %s24
      %p417 = scmp.lt.s32.totalorder %s23, 1
      %s418 = scalar_select %p417, %s23, 1
      %p419 = scmp.lt.s32.totalorder %s416, 15
      %s420 = scalar_select %p419, %s416, 15
      %s421 = smul.addr %s420, 3
      %s422 = smul.addr %s418, 48
      %s423 = sadd.s32 %s421, %s422
      %s424 = smul.addr %s423, 4
      %s425 = scalar_lea.vmem %s3, %s424
      %p426 = pneg %p138
      %p427 = pneg %p135
      %s428 = smul.u32 16, %s24
      %p429 = scmp.lt.s32.totalorder %s23, 1
      %s430 = scalar_select %p429, %s23, 1
      %p431 = scmp.lt.s32.totalorder %s428, 15
      %s432 = scalar_select %p431, %s428, 15
      %s433 = smul.addr %s432, 3
      %s434 = smul.addr %s430, 48
      %s435 = sadd.s32 %s433, %s434
      %s436 = smul.addr %s435, 4
      %s437 = scalar_lea.vmem %s4, %s436
      %p438 = pneg %p166
      %p439 = pneg %p163
      %s440 = smul.u32 16, %s24
      %p441 = scmp.lt.s32.totalorder %s23, 1
      %s442 = scalar_select %p441, %s23, 1
      %p443 = scmp.lt.s32.totalorder %s440, 15
      %s444 = scalar_select %p443, %s440, 15
      %s445 = smul.addr %s444, 3
      %s446 = smul.addr %s442, 48
      %s447 = sadd.s32 %s445, %s446
      %s448 = smul.addr %s447, 4
      %s449 = scalar_lea.vmem %s5, %s448
      %p450 = pneg %p194
      %p451 = pneg %p191
      %p452 = pneg %p215
      %p453 = pneg %p212
      %p454 = pneg %p236
      %p455 = pneg %p233
      %p456 = pneg %p264
      %p457 = pneg %p261
      %s458 = smul.u32 16, %s24
      %p459 = scmp.lt.s32.totalorder %s23, 1
      %s460 = scalar_select %p459, %s23, 1
      %p461 = scmp.lt.s32.totalorder %s458, 15
      %s462 = scalar_select %p461, %s458, 15
      %s463 = smul.addr %s462, 2
      %s464 = smul.addr %s460, 32
      %s465 = sadd.s32 %s463, %s464
      %s466 = smul.addr %s465, 4
      %s467 = scalar_lea.vmem %s8, %s466
      %s468 = smul.u32 16, %s24
      %p469 = scmp.lt.s32.totalorder %s23, 1
      %s470 = scalar_select %p469, %s23, 1
      %p471 = scmp.lt.s32.totalorder %s468, 15
      %s472 = scalar_select %p471, %s468, 15
      %s473 = smul.addr %s472, 3
      %s474 = smul.addr %s470, 48
      %s475 = sadd.s32 %s473, %s474
      %s476 = smul.addr %s475, 4
      %s477 = scalar_lea.vmem %s0, %s476
      %s478 = smul.u32 16, %s24
      %s479 = smul.u32 16, %s24
      %p480 = scmp.lt.s32.totalorder %s23, 1
      %s481 = scalar_select %p480, %s23, 1
      %p482 = scmp.lt.s32.totalorder %s479, 15
      %s483 = scalar_select %p482, %s479, 15
      %s484 = smul.addr %s483, 3
      %s485 = smul.addr %s481, 48
      %s486 = sadd.s32 %s484, %s485
      %s487 = smul.addr %s486, 4
      %s488 = scalar_lea.vmem %s1, %s487
      %s489 = smul.u32 16, %s24
      %s490 = smul.u32 16, %s24
      %p491 = scmp.lt.s32.totalorder %s23, 1
      %s492 = scalar_select %p491, %s23, 1
      %p493 = scmp.lt.s32.totalorder %s490, 15
      %s494 = scalar_select %p493, %s490, 15
      %s495 = smul.addr %s494, 3
      %s496 = smul.addr %s492, 48
      %s497 = sadd.s32 %s495, %s496
      %s498 = smul.addr %s497, 4
      %s499 = scalar_lea.vmem %s2, %s498
      %s500 = smul.u32 16, %s24
      %s501 = smul.u32 16, %s24
      %p502 = scmp.lt.s32.totalorder %s23, 1
      %s503 = scalar_select %p502, %s23, 1
      %p504 = scmp.lt.s32.totalorder %s501, 15
      %s505 = scalar_select %p504, %s501, 15
      %s506 = smul.addr %s505, 3
      %s507 = smul.addr %s503, 48
      %s508 = sadd.s32 %s506, %s507
      %s509 = smul.addr %s508, 4
      %s510 = scalar_lea.vmem %s3, %s509
      %s511 = smul.u32 16, %s24
      %s512 = smul.u32 16, %s24
      %p513 = scmp.lt.s32.totalorder %s23, 1
      %s514 = scalar_select %p513, %s23, 1
      %p515 = scmp.lt.s32.totalorder %s512, 15
      %s516 = scalar_select %p515, %s512, 15
      %s517 = smul.addr %s516, 3
      %s518 = smul.addr %s514, 48
      %s519 = sadd.s32 %s517, %s518
      %s520 = smul.addr %s519, 4
      %s521 = scalar_lea.vmem %s4, %s520
      %s522 = smul.u32 16, %s24
      %s523 = smul.u32 16, %s24
      %p524 = scmp.lt.s32.totalorder %s23, 1
      %s525 = scalar_select %p524, %s23, 1
      %p526 = scmp.lt.s32.totalorder %s523, 15
      %s527 = scalar_select %p526, %s523, 15
      %s528 = smul.addr %s527, 3
      %s529 = smul.addr %s525, 48
      %s530 = sadd.s32 %s528, %s529
      %s531 = smul.addr %s530, 4
      %s532 = scalar_lea.vmem %s5, %s531
      %s533 = smul.u32 16, %s24
      %s534 = smul.u32 16, %s24
      %p535 = scmp.lt.s32.totalorder %s23, 1
      %s536 = scalar_select %p535, %s23, 1
      %p537 = scmp.lt.s32.totalorder %s534, 15
      %s538 = scalar_select %p537, %s534, 15
      %s539 = smul.addr %s538, 2
      %s540 = smul.addr %s536, 32
      %s541 = sadd.s32 %s539, %s540
      %s542 = smul.addr %s541, 4
      %s543 = scalar_lea.vmem %s8, %s542
      %s544 = smul.u32 16, %s24
      %v546 = vld [vmem:[%s477] sm:$0xf]
      %v547 = vld [vmem:[%s477 + $0x4] sm:$0xf]
      %v548 = vld [vmem:[%s477 + $0xc] sm:$0xf]
      %v549 = vld [vmem:[%s477 + $0x10] sm:$0xf]
      %v550 = vld [vmem:[%s477 + $0x18] sm:$0xf]
      %v551 = vld [vmem:[%s477 + $0x1c] sm:$0xf]
      %v552 = vld [vmem:[%s477 + $0x24] sm:$0xf]
      %v553 = vld [vmem:[%s477 + $0x28] sm:$0xf]
      %v554 = vld [vmem:[%s477 + $0x30] sm:$0xf]
      %v555 = vld [vmem:[%s477 + $0x34] sm:$0xf]
      %v556 = vld [vmem:[%s477 + $0x3c] sm:$0xf]
      %v557 = vld [vmem:[%s477 + $0x40] sm:$0xf]
      %v558 = vld [vmem:[%s477 + $0x48] sm:$0xf]
      %v559 = vld [vmem:[%s477 + $0x4c] sm:$0xf]
      %v560 = vld [vmem:[%s477 + $0x54] sm:$0xf]
      %v561 = vld [vmem:[%s477 + $0x58] sm:$0xf]
      %v562 = vld [vmem:[%s477 + $0x60] sm:$0xf]
      %v563 = vld [vmem:[%s477 + $0x64] sm:$0xf]
      %v564 = vld [vmem:[%s477 + $0x6c] sm:$0xf]
      %v565 = vld [vmem:[%s477 + $0x70] sm:$0xf]
      %v566 = vld [vmem:[%s477 + $0x78] sm:$0xf]
      %v567 = vld [vmem:[%s477 + $0x7c] sm:$0xf]
      %v568 = vld [vmem:[%s477 + $0x84] sm:$0xf]
      %v569 = vld [vmem:[%s477 + $0x88] sm:$0xf]
      %v570 = vld [vmem:[%s477 + $0x90] sm:$0xf]
      %v571 = vld [vmem:[%s477 + $0x94] sm:$0xf]
      %v572 = vld [vmem:[%s477 + $0x9c] sm:$0xf]
      %v573 = vld [vmem:[%s477 + $0xa0] sm:$0xf]
      %v574 = vld [vmem:[%s477 + $0xa8] sm:$0xf]
      %v575 = vld [vmem:[%s477 + $0xac] sm:$0xf]
      %v576 = vld [vmem:[%s477 + $0xb4] sm:$0xf]
      %v577 = vld [vmem:[%s477 + $0xb8] sm:$0xf]
      %v578 = vld [vmem:[%s6] sm:$0x3]
      %v579 = vld [vmem:[%s488] sm:$0xf]
      %v580 = vld [vmem:[%s488 + $0x4] sm:$0xf]
      %v581 = vld [vmem:[%s488 + $0xc] sm:$0xf]
      %v582 = vld [vmem:[%s488 + $0x10] sm:$0xf]
      %v583 = vld [vmem:[%s488 + $0x18] sm:$0xf]
      %v584 = vld [vmem:[%s488 + $0x1c] sm:$0xf]
      %v585 = vld [vmem:[%s488 + $0x24] sm:$0xf]
      %v586 = vld [vmem:[%s488 + $0x28] sm:$0xf]
      %v587 = vld [vmem:[%s488 + $0x30] sm:$0xf]
      %v588 = vld [vmem:[%s488 + $0x34] sm:$0xf]
      %v589 = vld [vmem:[%s488 + $0x3c] sm:$0xf]
      %v590 = vld [vmem:[%s488 + $0x40] sm:$0xf]
      %v591 = vld [vmem:[%s488 + $0x48] sm:$0xf]
      %v592 = vld [vmem:[%s488 + $0x4c] sm:$0xf]
      %v593 = vld [vmem:[%s488 + $0x54] sm:$0xf]
      %v594 = vld [vmem:[%s488 + $0x58] sm:$0xf]
      %v595 = vld [vmem:[%s488 + $0x60] sm:$0xf]
      %v596 = vld [vmem:[%s488 + $0x64] sm:$0xf]
      %v597 = vld [vmem:[%s488 + $0x6c] sm:$0xf]
      %v598 = vld [vmem:[%s488 + $0x70] sm:$0xf]
      %v599 = vld [vmem:[%s488 + $0x78] sm:$0xf]
      %v600 = vld [vmem:[%s488 + $0x7c] sm:$0xf]
      %v601 = vld [vmem:[%s488 + $0x84] sm:$0xf]
      %v602 = vld [vmem:[%s488 + $0x88] sm:$0xf]
      %v603 = vld [vmem:[%s488 + $0x90] sm:$0xf]
      %v604 = vld [vmem:[%s488 + $0x94] sm:$0xf]
      %v605 = vld [vmem:[%s488 + $0x9c] sm:$0xf]
      %v606 = vld [vmem:[%s488 + $0xa0] sm:$0xf]
      %v607 = vld [vmem:[%s488 + $0xa8] sm:$0xf]
      %v608 = vld [vmem:[%s488 + $0xac] sm:$0xf]
      %v609 = vld [vmem:[%s488 + $0xb4] sm:$0xf]
      %v610 = vld [vmem:[%s488 + $0xb8] sm:$0xf]
      %s611 = scalar_lea.vmem %s6, 2
      %v612 = vld [vmem:[%s611] sm:$0x3]
      %v645 = vunpack.c.l.b16 %v579
      %v646 = vunpack.c.l.b16 %v580
      %v647 = vunpack.c.l.b16 %v581
      %v648 = vunpack.c.l.b16 %v582
      %v649 = vunpack.c.l.b16 %v583
      %v650 = vunpack.c.l.b16 %v584
      %v651 = vunpack.c.l.b16 %v585
      %v652 = vunpack.c.l.b16 %v586
      %v653 = vunpack.c.l.b16 %v587
      %v654 = vunpack.c.l.b16 %v588
      %v655 = vunpack.c.l.b16 %v589
      %v656 = vunpack.c.l.b16 %v590
      %v657 = vunpack.c.l.b16 %v591
      %v658 = vunpack.c.l.b16 %v592
      %v659 = vunpack.c.l.b16 %v593
      %v660 = vunpack.c.l.b16 %v594
      %v661 = vunpack.c.l.b16 %v595
      %v662 = vunpack.c.l.b16 %v596
      %v663 = vunpack.c.l.b16 %v597
      %v664 = vunpack.c.l.b16 %v598
      %v665 = vunpack.c.l.b16 %v599
      %v666 = vunpack.c.l.b16 %v600
      %v667 = vunpack.c.l.b16 %v601
      %v668 = vunpack.c.l.b16 %v602
      %v669 = vunpack.c.l.b16 %v603
      %v670 = vunpack.c.l.b16 %v604
      %v671 = vunpack.c.l.b16 %v605
      %v672 = vunpack.c.l.b16 %v606
      %v673 = vunpack.c.l.b16 %v607
      %v674 = vunpack.c.l.b16 %v608
      %v675 = vunpack.c.l.b16 %v609
      %v676 = vunpack.c.l.b16 %v610
      %v677 = vpack.c.b16 %v646, %v645
      %v678 = vpack.c.b16 %v648, %v647
      %v679 = vpack.c.b16 %v650, %v649
      %v680 = vpack.c.b16 %v652, %v651
      %v681 = vpack.c.b16 %v654, %v653
      %v682 = vpack.c.b16 %v656, %v655
      %v683 = vpack.c.b16 %v658, %v657
      %v684 = vpack.c.b16 %v660, %v659
      %v685 = vpack.c.b16 %v662, %v661
      %v686 = vpack.c.b16 %v664, %v663
      %v687 = vpack.c.b16 %v666, %v665
      %v688 = vpack.c.b16 %v668, %v667
      %v689 = vpack.c.b16 %v670, %v669
      %v690 = vpack.c.b16 %v672, %v671
      %v691 = vpack.c.b16 %v674, %v673
      %v692 = vpack.c.b16 %v676, %v675
      %vm693 = vcmask 23552
      %v695 = vsel %vm693, %v677, 0
      %v698 = vsel %vm693, %v678, 0
      %v701 = vsel %vm693, %v679, 0
      %v704 = vsel %vm693, %v680, 0
      %v707 = vsel %vm693, %v681, 0
      %v710 = vsel %vm693, %v682, 0
      %v713 = vsel %vm693, %v683, 0
      %v716 = vsel %vm693, %v684, 0
      %v719 = vsel %vm693, %v685, 0
      %v722 = vsel %vm693, %v686, 0
      %v725 = vsel %vm693, %v687, 0
      %v728 = vsel %vm693, %v688, 0
      %v731 = vsel %vm693, %v689, 0
      %v734 = vsel %vm693, %v690, 0
      %v737 = vsel %vm693, %v691, 0
      %v740 = vsel %vm693, %v692, 0
      %vm742 = vcmask 1040384
      %vm743 = vcmask 1041408
      %v744 = vsel %vm742, 4294967295, 65535
      %v745 = vsel %vm743, %v744, 0
      %v747 = vand.u32 %v612, %v745
      %749 = vmatpush.bf16.msra.mxu0 0
      %750 = vmatpush.bf16.msra.mxu0 0
      %751 = vmatpush.bf16.msra.mxu0 0
      %752 = vmatpush.bf16.msra.mxu0 0
      %753 = vmatpush.bf16.msra.mxu0 0
      %754 = vmatpush.bf16.msra.mxu0 0
      %755 = vmatpush.bf16.msra.mxu0 0
      %756 = vmatpush.bf16.msra.mxu0 %v747
      %757 = vmatmul.bf16.gmra.mxu0 %v695
      %v758 = vpop.f32.mrf.mxu0
      %v759 = vadd.f32 0.0, %v758
      %v760 = vpop.f32.mrf.mxu0
      %v761 = vadd.f32 0.0, %v760
      %762 = vmatmul.bf16.gmra.mxu0 %v698
      %v763 = vpop.f32.mrf.mxu0
      %v764 = vadd.f32 0.0, %v763
      %v765 = vpop.f32.mrf.mxu0
      %v766 = vadd.f32 0.0, %v765
      %767 = vmatmul.bf16.gmra.mxu0 %v701
      %v768 = vpop.f32.mrf.mxu0
      %v769 = vadd.f32 0.0, %v768
      %v770 = vpop.f32.mrf.mxu0
      %v771 = vadd.f32 0.0, %v770
      %772 = vmatmul.bf16.gmra.mxu0 %v704
      %v773 = vpop.f32.mrf.mxu0
      %v774 = vadd.f32 0.0, %v773
      %v775 = vpop.f32.mrf.mxu0
      %v776 = vadd.f32 0.0, %v775
      %777 = vmatmul.bf16.gmra.mxu0 %v707
      %v778 = vpop.f32.mrf.mxu0
      %v779 = vadd.f32 0.0, %v778
      %v780 = vpop.f32.mrf.mxu0
      %v781 = vadd.f32 0.0, %v780
      %782 = vmatmul.bf16.gmra.mxu0 %v710
      %v783 = vpop.f32.mrf.mxu0
      %v784 = vadd.f32 0.0, %v783
      %v785 = vpop.f32.mrf.mxu0
      %v786 = vadd.f32 0.0, %v785
      %787 = vmatmul.bf16.gmra.mxu0 %v713
      %v788 = vpop.f32.mrf.mxu0
      %v789 = vadd.f32 0.0, %v788
      %v790 = vpop.f32.mrf.mxu0
      %v791 = vadd.f32 0.0, %v790
      %792 = vmatmul.bf16.gmra.mxu0 %v716
      %v793 = vpop.f32.mrf.mxu0
      %v794 = vadd.f32 0.0, %v793
      %v795 = vpop.f32.mrf.mxu0
      %v796 = vadd.f32 0.0, %v795
      %797 = vmatmul.bf16.gmra.mxu0 %v719
      %v798 = vpop.f32.mrf.mxu0
      %v799 = vadd.f32 0.0, %v798
      %v800 = vpop.f32.mrf.mxu0
      %v801 = vadd.f32 0.0, %v800
      %802 = vmatmul.bf16.gmra.mxu0 %v722
      %v803 = vpop.f32.mrf.mxu0
      %v804 = vadd.f32 0.0, %v803
      %v805 = vpop.f32.mrf.mxu0
      %v806 = vadd.f32 0.0, %v805
      %807 = vmatmul.bf16.gmra.mxu0 %v725
      %v808 = vpop.f32.mrf.mxu0
      %v809 = vadd.f32 0.0, %v808
      %v810 = vpop.f32.mrf.mxu0
      %v811 = vadd.f32 0.0, %v810
      %812 = vmatmul.bf16.gmra.mxu0 %v728
      %v813 = vpop.f32.mrf.mxu0
      %v814 = vadd.f32 0.0, %v813
      %v815 = vpop.f32.mrf.mxu0
      %v816 = vadd.f32 0.0, %v815
      %817 = vmatmul.bf16.gmra.mxu0 %v731
      %v818 = vpop.f32.mrf.mxu0
      %v819 = vadd.f32 0.0, %v818
      %v820 = vpop.f32.mrf.mxu0
      %v821 = vadd.f32 0.0, %v820
      %822 = vmatmul.bf16.gmra.mxu0 %v734
      %v823 = vpop.f32.mrf.mxu0
      %v824 = vadd.f32 0.0, %v823
      %v825 = vpop.f32.mrf.mxu0
      %v826 = vadd.f32 0.0, %v825
      %827 = vmatmul.bf16.gmra.mxu0 %v737
      %v828 = vpop.f32.mrf.mxu0
      %v829 = vadd.f32 0.0, %v828
      %v830 = vpop.f32.mrf.mxu0
      %v831 = vadd.f32 0.0, %v830
      %832 = vmatmul.bf16.gmra.mxu0 %v740
      %v833 = vpop.f32.mrf.mxu0
      %v834 = vadd.f32 0.0, %v833
      %v835 = vpop.f32.mrf.mxu0
      %v836 = vadd.f32 0.0, %v835
      %837 = vdwg.mxu0
      %v870 = vunpack.c.l.b16 %v546
      %v871 = vunpack.c.l.b16 %v547
      %v872 = vunpack.c.l.b16 %v548
      %v873 = vunpack.c.l.b16 %v549
      %v874 = vunpack.c.l.b16 %v550
      %v875 = vunpack.c.l.b16 %v551
      %v876 = vunpack.c.l.b16 %v552
      %v877 = vunpack.c.l.b16 %v553
      %v878 = vunpack.c.l.b16 %v554
      %v879 = vunpack.c.l.b16 %v555
      %v880 = vunpack.c.l.b16 %v556
      %v881 = vunpack.c.l.b16 %v557
      %v882 = vunpack.c.l.b16 %v558
      %v883 = vunpack.c.l.b16 %v559
      %v884 = vunpack.c.l.b16 %v560
      %v885 = vunpack.c.l.b16 %v561
      %v886 = vunpack.c.l.b16 %v562
      %v887 = vunpack.c.l.b16 %v563
      %v888 = vunpack.c.l.b16 %v564
      %v889 = vunpack.c.l.b16 %v565
      %v890 = vunpack.c.l.b16 %v566
      %v891 = vunpack.c.l.b16 %v567
      %v892 = vunpack.c.l.b16 %v568
      %v893 = vunpack.c.l.b16 %v569
      %v894 = vunpack.c.l.b16 %v570
      %v895 = vunpack.c.l.b16 %v571
      %v896 = vunpack.c.l.b16 %v572
      %v897 = vunpack.c.l.b16 %v573
      %v898 = vunpack.c.l.b16 %v574
      %v899 = vunpack.c.l.b16 %v575
      %v900 = vunpack.c.l.b16 %v576
      %v901 = vunpack.c.l.b16 %v577
      %v902 = vpack.c.b16 %v871, %v870
      %v903 = vpack.c.b16 %v873, %v872
      %v904 = vpack.c.b16 %v875, %v874
      %v905 = vpack.c.b16 %v877, %v876
      %v906 = vpack.c.b16 %v879, %v878
      %v907 = vpack.c.b16 %v881, %v880
      %v908 = vpack.c.b16 %v883, %v882
      %v909 = vpack.c.b16 %v885, %v884
      %v910 = vpack.c.b16 %v887, %v886
      %v911 = vpack.c.b16 %v889, %v888
      %v912 = vpack.c.b16 %v891, %v890
      %v913 = vpack.c.b16 %v893, %v892
      %v914 = vpack.c.b16 %v895, %v894
      %v915 = vpack.c.b16 %v897, %v896
      %v916 = vpack.c.b16 %v899, %v898
      %v917 = vpack.c.b16 %v901, %v900
      %v919 = vsel %vm693, %v902, 0
      %v922 = vsel %vm693, %v903, 0
      %v925 = vsel %vm693, %v904, 0
      %v928 = vsel %vm693, %v905, 0
      %v931 = vsel %vm693, %v906, 0
      %v934 = vsel %vm693, %v907, 0
      %v937 = vsel %vm693, %v908, 0
      %v940 = vsel %vm693, %v909, 0
      %v943 = vsel %vm693, %v910, 0
      %v946 = vsel %vm693, %v911, 0
      %v949 = vsel %vm693, %v912, 0
      %v952 = vsel %vm693, %v913, 0
      %v955 = vsel %vm693, %v914, 0
      %v958 = vsel %vm693, %v915, 0
      %v961 = vsel %vm693, %v916, 0
      %v964 = vsel %vm693, %v917, 0
      %v967 = vand.u32 %v578, %v745
      %969 = vmatpush.bf16.msra.mxu0 0
      %970 = vmatpush.bf16.msra.mxu0 0
      %971 = vmatpush.bf16.msra.mxu0 0
      %972 = vmatpush.bf16.msra.mxu0 0
      %973 = vmatpush.bf16.msra.mxu0 0
      %974 = vmatpush.bf16.msra.mxu0 0
      %975 = vmatpush.bf16.msra.mxu0 0
      %976 = vmatpush.bf16.msra.mxu0 %v967
      %977 = vmatmul.bf16.gmra.mxu0 %v919
      %v978 = vpop.f32.mrf.mxu0
      %v979 = vadd.f32 %v759, %v978
      %v980 = vpop.f32.mrf.mxu0
      %v981 = vadd.f32 %v761, %v980
      %982 = vmatmul.bf16.gmra.mxu0 %v922
      %v983 = vpop.f32.mrf.mxu0
      %v984 = vadd.f32 %v764, %v983
      %v985 = vpop.f32.mrf.mxu0
      %v986 = vadd.f32 %v766, %v985
      %987 = vmatmul.bf16.gmra.mxu0 %v925
      %v988 = vpop.f32.mrf.mxu0
      %v989 = vadd.f32 %v769, %v988
      %v990 = vpop.f32.mrf.mxu0
      %v991 = vadd.f32 %v771, %v990
      %992 = vmatmul.bf16.gmra.mxu0 %v928
      %v993 = vpop.f32.mrf.mxu0
      %v994 = vadd.f32 %v774, %v993
      %v995 = vpop.f32.mrf.mxu0
      %v996 = vadd.f32 %v776, %v995
      %997 = vmatmul.bf16.gmra.mxu0 %v931
      %v998 = vpop.f32.mrf.mxu0
      %v999 = vadd.f32 %v779, %v998
      %v1000 = vpop.f32.mrf.mxu0
      %v1001 = vadd.f32 %v781, %v1000
      %1002 = vmatmul.bf16.gmra.mxu0 %v934
      %v1003 = vpop.f32.mrf.mxu0
      %v1004 = vadd.f32 %v784, %v1003
      %v1005 = vpop.f32.mrf.mxu0
      %v1006 = vadd.f32 %v786, %v1005
      %1007 = vmatmul.bf16.gmra.mxu0 %v937
      %v1008 = vpop.f32.mrf.mxu0
      %v1009 = vadd.f32 %v789, %v1008
      %v1010 = vpop.f32.mrf.mxu0
      %v1011 = vadd.f32 %v791, %v1010
      %1012 = vmatmul.bf16.gmra.mxu0 %v940
      %v1013 = vpop.f32.mrf.mxu0
      %v1014 = vadd.f32 %v794, %v1013
      %v1015 = vpop.f32.mrf.mxu0
      %v1016 = vadd.f32 %v796, %v1015
      %1017 = vmatmul.bf16.gmra.mxu0 %v943
      %v1018 = vpop.f32.mrf.mxu0
      %v1019 = vadd.f32 %v799, %v1018
      %v1020 = vpop.f32.mrf.mxu0
      %v1021 = vadd.f32 %v801, %v1020
      %1022 = vmatmul.bf16.gmra.mxu0 %v946
      %v1023 = vpop.f32.mrf.mxu0
      %v1024 = vadd.f32 %v804, %v1023
      %v1025 = vpop.f32.mrf.mxu0
      %v1026 = vadd.f32 %v806, %v1025
      %1027 = vmatmul.bf16.gmra.mxu0 %v949
      %v1028 = vpop.f32.mrf.mxu0
      %v1029 = vadd.f32 %v809, %v1028
      %v1030 = vpop.f32.mrf.mxu0
      %v1031 = vadd.f32 %v811, %v1030
      %1032 = vmatmul.bf16.gmra.mxu0 %v952
      %v1033 = vpop.f32.mrf.mxu0
      %v1034 = vadd.f32 %v814, %v1033
      %v1035 = vpop.f32.mrf.mxu0
      %v1036 = vadd.f32 %v816, %v1035
      %1037 = vmatmul.bf16.gmra.mxu0 %v955
      %v1038 = vpop.f32.mrf.mxu0
      %v1039 = vadd.f32 %v819, %v1038
      %v1040 = vpop.f32.mrf.mxu0
      %v1041 = vadd.f32 %v821, %v1040
      %1042 = vmatmul.bf16.gmra.mxu0 %v958
      %v1043 = vpop.f32.mrf.mxu0
      %v1044 = vadd.f32 %v824, %v1043
      %v1045 = vpop.f32.mrf.mxu0
      %v1046 = vadd.f32 %v826, %v1045
      %1047 = vmatmul.bf16.gmra.mxu0 %v961
      %v1048 = vpop.f32.mrf.mxu0
      %v1049 = vadd.f32 %v829, %v1048
      %v1050 = vpop.f32.mrf.mxu0
      %v1051 = vadd.f32 %v831, %v1050
      %1052 = vmatmul.bf16.gmra.mxu0 %v964
      %v1053 = vpop.f32.mrf.mxu0
      %v1054 = vadd.f32 %v834, %v1053
      %v1055 = vpop.f32.mrf.mxu0
      %v1056 = vadd.f32 %v836, %v1055
      %1057 = vdwg.mxu0
      %v1058 = vld [vmem:[%s477] sm:$0xf]
      %v1059 = vld [vmem:[%s477 + $0x4] sm:$0xf]
      %v1060 = vld [vmem:[%s477 + $0x8] sm:$0x1]
      %v1061 = vld [vmem:[%s477 + $0xc] sm:$0xf]
      %v1062 = vld [vmem:[%s477 + $0x10] sm:$0xf]
      %v1063 = vld [vmem:[%s477 + $0x14] sm:$0x1]
      %v1064 = vld [vmem:[%s477 + $0x18] sm:$0xf]
      %v1065 = vld [vmem:[%s477 + $0x1c] sm:$0xf]
      %v1066 = vld [vmem:[%s477 + $0x20] sm:$0x1]
      %v1067 = vld [vmem:[%s477 + $0x24] sm:$0xf]
      %v1068 = vld [vmem:[%s477 + $0x28] sm:$0xf]
      %v1069 = vld [vmem:[%s477 + $0x2c] sm:$0x1]
      %v1070 = vld [vmem:[%s477 + $0x30] sm:$0xf]
      %v1071 = vld [vmem:[%s477 + $0x34] sm:$0xf]
      %v1072 = vld [vmem:[%s477 + $0x38] sm:$0x1]
      %v1073 = vld [vmem:[%s477 + $0x3c] sm:$0xf]
      %v1074 = vld [vmem:[%s477 + $0x40] sm:$0xf]
      %v1075 = vld [vmem:[%s477 + $0x44] sm:$0x1]
      %v1076 = vld [vmem:[%s477 + $0x48] sm:$0xf]
      %v1077 = vld [vmem:[%s477 + $0x4c] sm:$0xf]
      %v1078 = vld [vmem:[%s477 + $0x50] sm:$0x1]
      %v1079 = vld [vmem:[%s477 + $0x54] sm:$0xf]
      %v1080 = vld [vmem:[%s477 + $0x58] sm:$0xf]
      %v1081 = vld [vmem:[%s477 + $0x5c] sm:$0x1]
      %v1082 = vld [vmem:[%s477 + $0x60] sm:$0xf]
      %v1083 = vld [vmem:[%s477 + $0x64] sm:$0xf]
      %v1084 = vld [vmem:[%s477 + $0x68] sm:$0x1]
      %v1085 = vld [vmem:[%s477 + $0x6c] sm:$0xf]
      %v1086 = vld [vmem:[%s477 + $0x70] sm:$0xf]
      %v1087 = vld [vmem:[%s477 + $0x74] sm:$0x1]
      %v1088 = vld [vmem:[%s477 + $0x78] sm:$0xf]
      %v1089 = vld [vmem:[%s477 + $0x7c] sm:$0xf]
      %v1090 = vld [vmem:[%s477 + $0x80] sm:$0x1]
      %v1091 = vld [vmem:[%s477 + $0x84] sm:$0xf]
      %v1092 = vld [vmem:[%s477 + $0x88] sm:$0xf]
      %v1093 = vld [vmem:[%s477 + $0x8c] sm:$0x1]
      %v1094 = vld [vmem:[%s477 + $0x90] sm:$0xf]
      %v1095 = vld [vmem:[%s477 + $0x94] sm:$0xf]
      %v1096 = vld [vmem:[%s477 + $0x98] sm:$0x1]
      %v1097 = vld [vmem:[%s477 + $0x9c] sm:$0xf]
      %v1098 = vld [vmem:[%s477 + $0xa0] sm:$0xf]
      %v1099 = vld [vmem:[%s477 + $0xa4] sm:$0x1]
      %v1100 = vld [vmem:[%s477 + $0xa8] sm:$0xf]
      %v1101 = vld [vmem:[%s477 + $0xac] sm:$0xf]
      %v1102 = vld [vmem:[%s477 + $0xb0] sm:$0x1]
      %v1103 = vld [vmem:[%s477 + $0xb4] sm:$0xf]
      %v1104 = vld [vmem:[%s477 + $0xb8] sm:$0xf]
      %v1105 = vld [vmem:[%s477 + $0xbc] sm:$0x1]
      %vm1106 = vsmask.f32 3328
      %vm1107 = vsmask.f32 7440
      %vm1108 = vmor %vm1106, %vm1107
      %v1110 = vshrl.u32 %v1058, 16
      %v1112 = vrot.slane %v1110, 4
      %v1113 = vshll.u32 %v1058, 16
      %v1115 = vrot.slane %v1113, 5
      %v1116 = vor.u32 %v1112, %v1115
      %v1117 = vrot.slane %v1116, 4
      %v1119 = vshll.u32 %v1059, 16
      %v1121 = vrot.slane %v1119, 5
      %v1122 = vsel %vm1108, %v1117, %v1121
      %v1123 = vshrl.u32 %v1059, 16
      %v1125 = vrot.slane %v1123, 4
      %v1126 = vor.u32 %v1125, %v1121
      %v1127 = vrot.slane %v1126, 4
      %v1129 = vshll.u32 %v1060, 16
      %v1131 = vrot.slane %v1129, 5
      %v1132 = vsel %vm1108, %v1127, %v1131
      %v1134 = vshrl.u32 %v1061, 16
      %v1136 = vrot.slane %v1134, 4
      %v1137 = vshll.u32 %v1061, 16
      %v1139 = vrot.slane %v1137, 5
      %v1140 = vor.u32 %v1136, %v1139
      %v1141 = vrot.slane %v1140, 4
      %v1143 = vshll.u32 %v1062, 16
      %v1145 = vrot.slane %v1143, 5
      %v1146 = vsel %vm1108, %v1141, %v1145
      %v1147 = vshrl.u32 %v1062, 16
      %v1149 = vrot.slane %v1147, 4
      %v1150 = vor.u32 %v1149, %v1145
      %v1151 = vrot.slane %v1150, 4
      %v1153 = vshll.u32 %v1063, 16
      %v1155 = vrot.slane %v1153, 5
      %v1156 = vsel %vm1108, %v1151, %v1155
      %v1158 = vshrl.u32 %v1064, 16
      %v1160 = vrot.slane %v1158, 4
      %v1161 = vshll.u32 %v1064, 16
      %v1163 = vrot.slane %v1161, 5
      %v1164 = vor.u32 %v1160, %v1163
      %v1165 = vrot.slane %v1164, 4
      %v1167 = vshll.u32 %v1065, 16
      %v1169 = vrot.slane %v1167, 5
      %v1170 = vsel %vm1108, %v1165, %v1169
      %v1171 = vshrl.u32 %v1065, 16
      %v1173 = vrot.slane %v1171, 4
      %v1174 = vor.u32 %v1173, %v1169
      %v1175 = vrot.slane %v1174, 4
      %v1177 = vshll.u32 %v1066, 16
      %v1179 = vrot.slane %v1177, 5
      %v1180 = vsel %vm1108, %v1175, %v1179
      %v1182 = vshrl.u32 %v1067, 16
      %v1184 = vrot.slane %v1182, 4
      %v1185 = vshll.u32 %v1067, 16
      %v1187 = vrot.slane %v1185, 5
      %v1188 = vor.u32 %v1184, %v1187
      %v1189 = vrot.slane %v1188, 4
      %v1191 = vshll.u32 %v1068, 16
      %v1193 = vrot.slane %v1191, 5
      %v1194 = vsel %vm1108, %v1189, %v1193
      %v1195 = vshrl.u32 %v1068, 16
      %v1197 = vrot.slane %v1195, 4
      %v1198 = vor.u32 %v1197, %v1193
      %v1199 = vrot.slane %v1198, 4
      %v1201 = vshll.u32 %v1069, 16
      %v1203 = vrot.slane %v1201, 5
      %v1204 = vsel %vm1108, %v1199, %v1203
      %v1206 = vshrl.u32 %v1070, 16
      %v1208 = vrot.slane %v1206, 4
      %v1209 = vshll.u32 %v1070, 16
      %v1211 = vrot.slane %v1209, 5
      %v1212 = vor.u32 %v1208, %v1211
      %v1213 = vrot.slane %v1212, 4
      %v1215 = vshll.u32 %v1071, 16
      %v1217 = vrot.slane %v1215, 5
      %v1218 = vsel %vm1108, %v1213, %v1217
      %v1219 = vshrl.u32 %v1071, 16
      %v1221 = vrot.slane %v1219, 4
      %v1222 = vor.u32 %v1221, %v1217
      %v1223 = vrot.slane %v1222, 4
      %v1225 = vshll.u32 %v1072, 16
      %v1227 = vrot.slane %v1225, 5
      %v1228 = vsel %vm1108, %v1223, %v1227
      %v1230 = vshrl.u32 %v1073, 16
      %v1232 = vrot.slane %v1230, 4
      %v1233 = vshll.u32 %v1073, 16
      %v1235 = vrot.slane %v1233, 5
      %v1236 = vor.u32 %v1232, %v1235
      %v1237 = vrot.slane %v1236, 4
      %v1239 = vshll.u32 %v1074, 16
      %v1241 = vrot.slane %v1239, 5
      %v1242 = vsel %vm1108, %v1237, %v1241
      %v1243 = vshrl.u32 %v1074, 16
      %v1245 = vrot.slane %v1243, 4
      %v1246 = vor.u32 %v1245, %v1241
      %v1247 = vrot.slane %v1246, 4
      %v1249 = vshll.u32 %v1075, 16
      %v1251 = vrot.slane %v1249, 5
      %v1252 = vsel %vm1108, %v1247, %v1251
      %v1254 = vshrl.u32 %v1076, 16
      %v1256 = vrot.slane %v1254, 4
      %v1257 = vshll.u32 %v1076, 16
      %v1259 = vrot.slane %v1257, 5
      %v1260 = vor.u32 %v1256, %v1259
      %v1261 = vrot.slane %v1260, 4
      %v1263 = vshll.u32 %v1077, 16
      %v1265 = vrot.slane %v1263, 5
      %v1266 = vsel %vm1108, %v1261, %v1265
      %v1267 = vshrl.u32 %v1077, 16
      %v1269 = vrot.slane %v1267, 4
      %v1270 = vor.u32 %v1269, %v1265
      %v1271 = vrot.slane %v1270, 4
      %v1273 = vshll.u32 %v1078, 16
      %v1275 = vrot.slane %v1273, 5
      %v1276 = vsel %vm1108, %v1271, %v1275
      %v1278 = vshrl.u32 %v1079, 16
      %v1280 = vrot.slane %v1278, 4
      %v1281 = vshll.u32 %v1079, 16
      %v1283 = vrot.slane %v1281, 5
      %v1284 = vor.u32 %v1280, %v1283
      %v1285 = vrot.slane %v1284, 4
      %v1287 = vshll.u32 %v1080, 16
      %v1289 = vrot.slane %v1287, 5
      %v1290 = vsel %vm1108, %v1285, %v1289
      %v1291 = vshrl.u32 %v1080, 16
      %v1293 = vrot.slane %v1291, 4
      %v1294 = vor.u32 %v1293, %v1289
      %v1295 = vrot.slane %v1294, 4
      %v1297 = vshll.u32 %v1081, 16
      %v1299 = vrot.slane %v1297, 5
      %v1300 = vsel %vm1108, %v1295, %v1299
      %v1302 = vshrl.u32 %v1082, 16
      %v1304 = vrot.slane %v1302, 4
      %v1305 = vshll.u32 %v1082, 16
      %v1307 = vrot.slane %v1305, 5
      %v1308 = vor.u32 %v1304, %v1307
      %v1309 = vrot.slane %v1308, 4
      %v1311 = vshll.u32 %v1083, 16
      %v1313 = vrot.slane %v1311, 5
      %v1314 = vsel %vm1108, %v1309, %v1313
      %v1315 = vshrl.u32 %v1083, 16
      %v1317 = vrot.slane %v1315, 4
      %v1318 = vor.u32 %v1317, %v1313
      %v1319 = vrot.slane %v1318, 4
      %v1321 = vshll.u32 %v1084, 16
      %v1323 = vrot.slane %v1321, 5
      %v1324 = vsel %vm1108, %v1319, %v1323
      %v1326 = vshrl.u32 %v1085, 16
      %v1328 = vrot.slane %v1326, 4
      %v1329 = vshll.u32 %v1085, 16
      %v1331 = vrot.slane %v1329, 5
      %v1332 = vor.u32 %v1328, %v1331
      %v1333 = vrot.slane %v1332, 4
      %v1335 = vshll.u32 %v1086, 16
      %v1337 = vrot.slane %v1335, 5
      %v1338 = vsel %vm1108, %v1333, %v1337
      %v1339 = vshrl.u32 %v1086, 16
      %v1341 = vrot.slane %v1339, 4
      %v1342 = vor.u32 %v1341, %v1337
      %v1343 = vrot.slane %v1342, 4
      %v1345 = vshll.u32 %v1087, 16
      %v1347 = vrot.slane %v1345, 5
      %v1348 = vsel %vm1108, %v1343, %v1347
      %v1350 = vshrl.u32 %v1088, 16
      %v1352 = vrot.slane %v1350, 4
      %v1353 = vshll.u32 %v1088, 16
      %v1355 = vrot.slane %v1353, 5
      %v1356 = vor.u32 %v1352, %v1355
      %v1357 = vrot.slane %v1356, 4
      %v1359 = vshll.u32 %v1089, 16
      %v1361 = vrot.slane %v1359, 5
      %v1362 = vsel %vm1108, %v1357, %v1361
      %v1363 = vshrl.u32 %v1089, 16
      %v1365 = vrot.slane %v1363, 4
      %v1366 = vor.u32 %v1365, %v1361
      %v1367 = vrot.slane %v1366, 4
      %v1369 = vshll.u32 %v1090, 16
      %v1371 = vrot.slane %v1369, 5
      %v1372 = vsel %vm1108, %v1367, %v1371
      %v1374 = vshrl.u32 %v1091, 16
      %v1376 = vrot.slane %v1374, 4
      %v1377 = vshll.u32 %v1091, 16
      %v1379 = vrot.slane %v1377, 5
      %v1380 = vor.u32 %v1376, %v1379
      %v1381 = vrot.slane %v1380, 4
      %v1383 = vshll.u32 %v1092, 16
      %v1385 = vrot.slane %v1383, 5
      %v1386 = vsel %vm1108, %v1381, %v1385
      %v1387 = vshrl.u32 %v1092, 16
      %v1389 = vrot.slane %v1387, 4
      %v1390 = vor.u32 %v1389, %v1385
      %v1391 = vrot.slane %v1390, 4
      %v1393 = vshll.u32 %v1093, 16
      %v1395 = vrot.slane %v1393, 5
      %v1396 = vsel %vm1108, %v1391, %v1395
      %v1398 = vshrl.u32 %v1094, 16
      %v1400 = vrot.slane %v1398, 4
      %v1401 = vshll.u32 %v1094, 16
      %v1403 = vrot.slane %v1401, 5
      %v1404 = vor.u32 %v1400, %v1403
      %v1405 = vrot.slane %v1404, 4
      %v1407 = vshll.u32 %v1095, 16
      %v1409 = vrot.slane %v1407, 5
      %v1410 = vsel %vm1108, %v1405, %v1409
      %v1411 = vshrl.u32 %v1095, 16
      %v1413 = vrot.slane %v1411, 4
      %v1414 = vor.u32 %v1413, %v1409
      %v1415 = vrot.slane %v1414, 4
      %v1417 = vshll.u32 %v1096, 16
      %v1419 = vrot.slane %v1417, 5
      %v1420 = vsel %vm1108, %v1415, %v1419
      %v1422 = vshrl.u32 %v1097, 16
      %v1424 = vrot.slane %v1422, 4
      %v1425 = vshll.u32 %v1097, 16
      %v1427 = vrot.slane %v1425, 5
      %v1428 = vor.u32 %v1424, %v1427
      %v1429 = vrot.slane %v1428, 4
      %v1431 = vshll.u32 %v1098, 16
      %v1433 = vrot.slane %v1431, 5
      %v1434 = vsel %vm1108, %v1429, %v1433
      %v1435 = vshrl.u32 %v1098, 16
      %v1437 = vrot.slane %v1435, 4
      %v1438 = vor.u32 %v1437, %v1433
      %v1439 = vrot.slane %v1438, 4
      %v1441 = vshll.u32 %v1099, 16
      %v1443 = vrot.slane %v1441, 5
      %v1444 = vsel %vm1108, %v1439, %v1443
      %v1446 = vshrl.u32 %v1100, 16
      %v1448 = vrot.slane %v1446, 4
      %v1449 = vshll.u32 %v1100, 16
      %v1451 = vrot.slane %v1449, 5
      %v1452 = vor.u32 %v1448, %v1451
      %v1453 = vrot.slane %v1452, 4
      %v1455 = vshll.u32 %v1101, 16
      %v1457 = vrot.slane %v1455, 5
      %v1458 = vsel %vm1108, %v1453, %v1457
      %v1459 = vshrl.u32 %v1101, 16
      %v1461 = vrot.slane %v1459, 4
      %v1462 = vor.u32 %v1461, %v1457
      %v1463 = vrot.slane %v1462, 4
      %v1465 = vshll.u32 %v1102, 16
      %v1467 = vrot.slane %v1465, 5
      %v1468 = vsel %vm1108, %v1463, %v1467
      %v1470 = vshrl.u32 %v1103, 16
      %v1472 = vrot.slane %v1470, 4
      %v1473 = vshll.u32 %v1103, 16
      %v1475 = vrot.slane %v1473, 5
      %v1476 = vor.u32 %v1472, %v1475
      %v1477 = vrot.slane %v1476, 4
      %v1479 = vshll.u32 %v1104, 16
      %v1481 = vrot.slane %v1479, 5
      %v1482 = vsel %vm1108, %v1477, %v1481
      %v1483 = vshrl.u32 %v1104, 16
      %v1485 = vrot.slane %v1483, 4
      %v1486 = vor.u32 %v1485, %v1481
      %v1487 = vrot.slane %v1486, 4
      %v1489 = vshll.u32 %v1105, 16
      %v1491 = vrot.slane %v1489, 5
      %v1492 = vsel %vm1108, %v1487, %v1491
      %s1493 = scalar_lea.vmem %s6, 4
      %v1494 = vld [vmem:[%s1493] sm:$0x3]
      %v1495 = vunpack.c.l.b16 %v1122
      %v1496 = vunpack.c.l.b16 %v1132
      %v1497 = vunpack.c.l.b16 %v1146
      %v1498 = vunpack.c.l.b16 %v1156
      %v1499 = vunpack.c.l.b16 %v1170
      %v1500 = vunpack.c.l.b16 %v1180
      %v1501 = vunpack.c.l.b16 %v1194
      %v1502 = vunpack.c.l.b16 %v1204
      %v1503 = vunpack.c.l.b16 %v1218
      %v1504 = vunpack.c.l.b16 %v1228
      %v1505 = vunpack.c.l.b16 %v1242
      %v1506 = vunpack.c.l.b16 %v1252
      %v1507 = vunpack.c.l.b16 %v1266
      %v1508 = vunpack.c.l.b16 %v1276
      %v1509 = vunpack.c.l.b16 %v1290
      %v1510 = vunpack.c.l.b16 %v1300
      %v1511 = vunpack.c.l.b16 %v1314
      %v1512 = vunpack.c.l.b16 %v1324
      %v1513 = vunpack.c.l.b16 %v1338
      %v1514 = vunpack.c.l.b16 %v1348
      %v1515 = vunpack.c.l.b16 %v1362
      %v1516 = vunpack.c.l.b16 %v1372
      %v1517 = vunpack.c.l.b16 %v1386
      %v1518 = vunpack.c.l.b16 %v1396
      %v1519 = vunpack.c.l.b16 %v1410
      %v1520 = vunpack.c.l.b16 %v1420
      %v1521 = vunpack.c.l.b16 %v1434
      %v1522 = vunpack.c.l.b16 %v1444
      %v1523 = vunpack.c.l.b16 %v1458
      %v1524 = vunpack.c.l.b16 %v1468
      %v1525 = vunpack.c.l.b16 %v1482
      %v1526 = vunpack.c.l.b16 %v1492
      %v1527 = vpack.c.b16 %v1496, %v1495
      %v1528 = vpack.c.b16 %v1498, %v1497
      %v1529 = vpack.c.b16 %v1500, %v1499
      %v1530 = vpack.c.b16 %v1502, %v1501
      %v1531 = vpack.c.b16 %v1504, %v1503
      %v1532 = vpack.c.b16 %v1506, %v1505
      %v1533 = vpack.c.b16 %v1508, %v1507
      %v1534 = vpack.c.b16 %v1510, %v1509
      %v1535 = vpack.c.b16 %v1512, %v1511
      %v1536 = vpack.c.b16 %v1514, %v1513
      %v1537 = vpack.c.b16 %v1516, %v1515
      %v1538 = vpack.c.b16 %v1518, %v1517
      %v1539 = vpack.c.b16 %v1520, %v1519
      %v1540 = vpack.c.b16 %v1522, %v1521
      %v1541 = vpack.c.b16 %v1524, %v1523
      %v1542 = vpack.c.b16 %v1526, %v1525
      %v1544 = vsel %vm693, %v1527, 0
      %v1547 = vsel %vm693, %v1528, 0
      %v1550 = vsel %vm693, %v1529, 0
      %v1553 = vsel %vm693, %v1530, 0
      %v1556 = vsel %vm693, %v1531, 0
      %v1559 = vsel %vm693, %v1532, 0
      %v1562 = vsel %vm693, %v1533, 0
      %v1565 = vsel %vm693, %v1534, 0
      %v1568 = vsel %vm693, %v1535, 0
      %v1571 = vsel %vm693, %v1536, 0
      %v1574 = vsel %vm693, %v1537, 0
      %v1577 = vsel %vm693, %v1538, 0
      %v1580 = vsel %vm693, %v1539, 0
      %v1583 = vsel %vm693, %v1540, 0
      %v1586 = vsel %vm693, %v1541, 0
      %v1589 = vsel %vm693, %v1542, 0
      %v1592 = vand.u32 %v1494, %v745
      %1594 = vmatpush.bf16.msra.mxu0 0
      %1595 = vmatpush.bf16.msra.mxu0 0
      %1596 = vmatpush.bf16.msra.mxu0 0
      %1597 = vmatpush.bf16.msra.mxu0 0
      %1598 = vmatpush.bf16.msra.mxu0 0
      %1599 = vmatpush.bf16.msra.mxu0 0
      %1600 = vmatpush.bf16.msra.mxu0 0
      %1601 = vmatpush.bf16.msra.mxu0 %v1592
      %1602 = vmatmul.bf16.gmra.mxu0 %v1544
      %v1603 = vpop.f32.mrf.mxu0
      %v1604 = vadd.f32 0.0, %v1603
      %v1605 = vpop.f32.mrf.mxu0
      %v1606 = vadd.f32 0.0, %v1605
      %1607 = vmatmul.bf16.gmra.mxu0 %v1547
      %v1608 = vpop.f32.mrf.mxu0
      %v1609 = vadd.f32 0.0, %v1608
      %v1610 = vpop.f32.mrf.mxu0
      %v1611 = vadd.f32 0.0, %v1610
      %1612 = vmatmul.bf16.gmra.mxu0 %v1550
      %v1613 = vpop.f32.mrf.mxu0
      %v1614 = vadd.f32 0.0, %v1613
      %v1615 = vpop.f32.mrf.mxu0
      %v1616 = vadd.f32 0.0, %v1615
      %1617 = vmatmul.bf16.gmra.mxu0 %v1553
      %v1618 = vpop.f32.mrf.mxu0
      %v1619 = vadd.f32 0.0, %v1618
      %v1620 = vpop.f32.mrf.mxu0
      %v1621 = vadd.f32 0.0, %v1620
      %1622 = vmatmul.bf16.gmra.mxu0 %v1556
      %v1623 = vpop.f32.mrf.mxu0
      %v1624 = vadd.f32 0.0, %v1623
      %v1625 = vpop.f32.mrf.mxu0
      %v1626 = vadd.f32 0.0, %v1625
      %1627 = vmatmul.bf16.gmra.mxu0 %v1559
      %v1628 = vpop.f32.mrf.mxu0
      %v1629 = vadd.f32 0.0, %v1628
      %v1630 = vpop.f32.mrf.mxu0
      %v1631 = vadd.f32 0.0, %v1630
      %1632 = vmatmul.bf16.gmra.mxu0 %v1562
      %v1633 = vpop.f32.mrf.mxu0
      %v1634 = vadd.f32 0.0, %v1633
      %v1635 = vpop.f32.mrf.mxu0
      %v1636 = vadd.f32 0.0, %v1635
      %1637 = vmatmul.bf16.gmra.mxu0 %v1565
      %v1638 = vpop.f32.mrf.mxu0
      %v1639 = vadd.f32 0.0, %v1638
      %v1640 = vpop.f32.mrf.mxu0
      %v1641 = vadd.f32 0.0, %v1640
      %1642 = vmatmul.bf16.gmra.mxu0 %v1568
      %v1643 = vpop.f32.mrf.mxu0
      %v1644 = vadd.f32 0.0, %v1643
      %v1645 = vpop.f32.mrf.mxu0
      %v1646 = vadd.f32 0.0, %v1645
      %1647 = vmatmul.bf16.gmra.mxu0 %v1571
      %v1648 = vpop.f32.mrf.mxu0
      %v1649 = vadd.f32 0.0, %v1648
      %v1650 = vpop.f32.mrf.mxu0
      %v1651 = vadd.f32 0.0, %v1650
      %1652 = vmatmul.bf16.gmra.mxu0 %v1574
      %v1653 = vpop.f32.mrf.mxu0
      %v1654 = vadd.f32 0.0, %v1653
      %v1655 = vpop.f32.mrf.mxu0
      %v1656 = vadd.f32 0.0, %v1655
      %1657 = vmatmul.bf16.gmra.mxu0 %v1577
      %v1658 = vpop.f32.mrf.mxu0
      %v1659 = vadd.f32 0.0, %v1658
      %v1660 = vpop.f32.mrf.mxu0
      %v1661 = vadd.f32 0.0, %v1660
      %1662 = vmatmul.bf16.gmra.mxu0 %v1580
      %v1663 = vpop.f32.mrf.mxu0
      %v1664 = vadd.f32 0.0, %v1663
      %v1665 = vpop.f32.mrf.mxu0
      %v1666 = vadd.f32 0.0, %v1665
      %1667 = vmatmul.bf16.gmra.mxu0 %v1583
      %v1668 = vpop.f32.mrf.mxu0
      %v1669 = vadd.f32 0.0, %v1668
      %v1670 = vpop.f32.mrf.mxu0
      %v1671 = vadd.f32 0.0, %v1670
      %1672 = vmatmul.bf16.gmra.mxu0 %v1586
      %v1673 = vpop.f32.mrf.mxu0
      %v1674 = vadd.f32 0.0, %v1673
      %v1675 = vpop.f32.mrf.mxu0
      %v1676 = vadd.f32 0.0, %v1675
      %1677 = vmatmul.bf16.gmra.mxu0 %v1589
      %v1678 = vpop.f32.mrf.mxu0
      %v1679 = vadd.f32 0.0, %v1678
      %v1680 = vpop.f32.mrf.mxu0
      %v1681 = vadd.f32 0.0, %v1680
      %1682 = vdwg.mxu0
      %v1683 = vadd.f32 %v979, %v1604
      %v1684 = vadd.f32 %v981, %v1606
      %v1685 = vadd.f32 %v984, %v1609
      %v1686 = vadd.f32 %v986, %v1611
      %v1687 = vadd.f32 %v989, %v1614
      %v1688 = vadd.f32 %v991, %v1616
      %v1689 = vadd.f32 %v994, %v1619
      %v1690 = vadd.f32 %v996, %v1621
      %v1691 = vadd.f32 %v999, %v1624
      %v1692 = vadd.f32 %v1001, %v1626
      %v1693 = vadd.f32 %v1004, %v1629
      %v1694 = vadd.f32 %v1006, %v1631
      %v1695 = vadd.f32 %v1009, %v1634
      %v1696 = vadd.f32 %v1011, %v1636
      %v1697 = vadd.f32 %v1014, %v1639
      %v1698 = vadd.f32 %v1016, %v1641
      %v1699 = vadd.f32 %v1019, %v1644
      %v1700 = vadd.f32 %v1021, %v1646
      %v1701 = vadd.f32 %v1024, %v1649
      %v1702 = vadd.f32 %v1026, %v1651
      %v1703 = vadd.f32 %v1029, %v1654
      %v1704 = vadd.f32 %v1031, %v1656
      %v1705 = vadd.f32 %v1034, %v1659
      %v1706 = vadd.f32 %v1036, %v1661
      %v1707 = vadd.f32 %v1039, %v1664
      %v1708 = vadd.f32 %v1041, %v1666
      %v1709 = vadd.f32 %v1044, %v1669
      %v1710 = vadd.f32 %v1046, %v1671
      %v1711 = vadd.f32 %v1049, %v1674
      %v1712 = vadd.f32 %v1051, %v1676
      %v1713 = vadd.f32 %v1054, %v1679
      %v1714 = vadd.f32 %v1056, %v1681
      %v1715 = vld [vmem:[%s499] sm:$0xf]
      %v1716 = vld [vmem:[%s499 + $0x4] sm:$0xf]
      %v1717 = vld [vmem:[%s499 + $0xc] sm:$0xf]
      %v1718 = vld [vmem:[%s499 + $0x10] sm:$0xf]
      %v1719 = vld [vmem:[%s499 + $0x18] sm:$0xf]
      %v1720 = vld [vmem:[%s499 + $0x1c] sm:$0xf]
      %v1721 = vld [vmem:[%s499 + $0x24] sm:$0xf]
      %v1722 = vld [vmem:[%s499 + $0x28] sm:$0xf]
      %v1723 = vld [vmem:[%s499 + $0x30] sm:$0xf]
      %v1724 = vld [vmem:[%s499 + $0x34] sm:$0xf]
      %v1725 = vld [vmem:[%s499 + $0x3c] sm:$0xf]
      %v1726 = vld [vmem:[%s499 + $0x40] sm:$0xf]
      %v1727 = vld [vmem:[%s499 + $0x48] sm:$0xf]
      %v1728 = vld [vmem:[%s499 + $0x4c] sm:$0xf]
      %v1729 = vld [vmem:[%s499 + $0x54] sm:$0xf]
      %v1730 = vld [vmem:[%s499 + $0x58] sm:$0xf]
      %v1731 = vld [vmem:[%s499 + $0x60] sm:$0xf]
      %v1732 = vld [vmem:[%s499 + $0x64] sm:$0xf]
      %v1733 = vld [vmem:[%s499 + $0x6c] sm:$0xf]
      %v1734 = vld [vmem:[%s499 + $0x70] sm:$0xf]
      %v1735 = vld [vmem:[%s499 + $0x78] sm:$0xf]
      %v1736 = vld [vmem:[%s499 + $0x7c] sm:$0xf]
      %v1737 = vld [vmem:[%s499 + $0x84] sm:$0xf]
      %v1738 = vld [vmem:[%s499 + $0x88] sm:$0xf]
      %v1739 = vld [vmem:[%s499 + $0x90] sm:$0xf]
      %v1740 = vld [vmem:[%s499 + $0x94] sm:$0xf]
      %v1741 = vld [vmem:[%s499 + $0x9c] sm:$0xf]
      %v1742 = vld [vmem:[%s499 + $0xa0] sm:$0xf]
      %v1743 = vld [vmem:[%s499 + $0xa8] sm:$0xf]
      %v1744 = vld [vmem:[%s499 + $0xac] sm:$0xf]
      %v1745 = vld [vmem:[%s499 + $0xb4] sm:$0xf]
      %v1746 = vld [vmem:[%s499 + $0xb8] sm:$0xf]
      %s1747 = scalar_lea.vmem %s6, 6
      %v1748 = vld [vmem:[%s1747] sm:$0x3]
      %v1781 = vunpack.c.l.b16 %v1715
      %v1782 = vunpack.c.l.b16 %v1716
      %v1783 = vunpack.c.l.b16 %v1717
      %v1784 = vunpack.c.l.b16 %v1718
      %v1785 = vunpack.c.l.b16 %v1719
      %v1786 = vunpack.c.l.b16 %v1720
      %v1787 = vunpack.c.l.b16 %v1721
      %v1788 = vunpack.c.l.b16 %v1722
      %v1789 = vunpack.c.l.b16 %v1723
      %v1790 = vunpack.c.l.b16 %v1724
      %v1791 = vunpack.c.l.b16 %v1725
      %v1792 = vunpack.c.l.b16 %v1726
      %v1793 = vunpack.c.l.b16 %v1727
      %v1794 = vunpack.c.l.b16 %v1728
      %v1795 = vunpack.c.l.b16 %v1729
      %v1796 = vunpack.c.l.b16 %v1730
      %v1797 = vunpack.c.l.b16 %v1731
      %v1798 = vunpack.c.l.b16 %v1732
      %v1799 = vunpack.c.l.b16 %v1733
      %v1800 = vunpack.c.l.b16 %v1734
      %v1801 = vunpack.c.l.b16 %v1735
      %v1802 = vunpack.c.l.b16 %v1736
      %v1803 = vunpack.c.l.b16 %v1737
      %v1804 = vunpack.c.l.b16 %v1738
      %v1805 = vunpack.c.l.b16 %v1739
      %v1806 = vunpack.c.l.b16 %v1740
      %v1807 = vunpack.c.l.b16 %v1741
      %v1808 = vunpack.c.l.b16 %v1742
      %v1809 = vunpack.c.l.b16 %v1743
      %v1810 = vunpack.c.l.b16 %v1744
      %v1811 = vunpack.c.l.b16 %v1745
      %v1812 = vunpack.c.l.b16 %v1746
      %v1813 = vpack.c.b16 %v1782, %v1781
      %v1814 = vpack.c.b16 %v1784, %v1783
      %v1815 = vpack.c.b16 %v1786, %v1785
      %v1816 = vpack.c.b16 %v1788, %v1787
      %v1817 = vpack.c.b16 %v1790, %v1789
      %v1818 = vpack.c.b16 %v1792, %v1791
      %v1819 = vpack.c.b16 %v1794, %v1793
      %v1820 = vpack.c.b16 %v1796, %v1795
      %v1821 = vpack.c.b16 %v1798, %v1797
      %v1822 = vpack.c.b16 %v1800, %v1799
      %v1823 = vpack.c.b16 %v1802, %v1801
      %v1824 = vpack.c.b16 %v1804, %v1803
      %v1825 = vpack.c.b16 %v1806, %v1805
      %v1826 = vpack.c.b16 %v1808, %v1807
      %v1827 = vpack.c.b16 %v1810, %v1809
      %v1828 = vpack.c.b16 %v1812, %v1811
      %v1830 = vsel %vm693, %v1813, 0
      %v1833 = vsel %vm693, %v1814, 0
      %v1836 = vsel %vm693, %v1815, 0
      %v1839 = vsel %vm693, %v1816, 0
      %v1842 = vsel %vm693, %v1817, 0
      %v1845 = vsel %vm693, %v1818, 0
      %v1848 = vsel %vm693, %v1819, 0
      %v1851 = vsel %vm693, %v1820, 0
      %v1854 = vsel %vm693, %v1821, 0
      %v1857 = vsel %vm693, %v1822, 0
      %v1860 = vsel %vm693, %v1823, 0
      %v1863 = vsel %vm693, %v1824, 0
      %v1866 = vsel %vm693, %v1825, 0
      %v1869 = vsel %vm693, %v1826, 0
      %v1872 = vsel %vm693, %v1827, 0
      %v1875 = vsel %vm693, %v1828, 0
      %v1878 = vand.u32 %v1748, %v745
      %1880 = vmatpush.bf16.msra.mxu0 0
      %1881 = vmatpush.bf16.msra.mxu0 0
      %1882 = vmatpush.bf16.msra.mxu0 0
      %1883 = vmatpush.bf16.msra.mxu0 0
      %1884 = vmatpush.bf16.msra.mxu0 0
      %1885 = vmatpush.bf16.msra.mxu0 0
      %1886 = vmatpush.bf16.msra.mxu0 0
      %1887 = vmatpush.bf16.msra.mxu0 %v1878
      %1888 = vmatmul.bf16.gmra.mxu0 %v1830
      %v1889 = vpop.f32.mrf.mxu0
      %v1890 = vadd.f32 0.0, %v1889
      %v1891 = vpop.f32.mrf.mxu0
      %v1892 = vadd.f32 0.0, %v1891
      %1893 = vmatmul.bf16.gmra.mxu0 %v1833
      %v1894 = vpop.f32.mrf.mxu0
      %v1895 = vadd.f32 0.0, %v1894
      %v1896 = vpop.f32.mrf.mxu0
      %v1897 = vadd.f32 0.0, %v1896
      %1898 = vmatmul.bf16.gmra.mxu0 %v1836
      %v1899 = vpop.f32.mrf.mxu0
      %v1900 = vadd.f32 0.0, %v1899
      %v1901 = vpop.f32.mrf.mxu0
      %v1902 = vadd.f32 0.0, %v1901
      %1903 = vmatmul.bf16.gmra.mxu0 %v1839
      %v1904 = vpop.f32.mrf.mxu0
      %v1905 = vadd.f32 0.0, %v1904
      %v1906 = vpop.f32.mrf.mxu0
      %v1907 = vadd.f32 0.0, %v1906
      %1908 = vmatmul.bf16.gmra.mxu0 %v1842
      %v1909 = vpop.f32.mrf.mxu0
      %v1910 = vadd.f32 0.0, %v1909
      %v1911 = vpop.f32.mrf.mxu0
      %v1912 = vadd.f32 0.0, %v1911
      %1913 = vmatmul.bf16.gmra.mxu0 %v1845
      %v1914 = vpop.f32.mrf.mxu0
      %v1915 = vadd.f32 0.0, %v1914
      %v1916 = vpop.f32.mrf.mxu0
      %v1917 = vadd.f32 0.0, %v1916
      %1918 = vmatmul.bf16.gmra.mxu0 %v1848
      %v1919 = vpop.f32.mrf.mxu0
      %v1920 = vadd.f32 0.0, %v1919
      %v1921 = vpop.f32.mrf.mxu0
      %v1922 = vadd.f32 0.0, %v1921
      %1923 = vmatmul.bf16.gmra.mxu0 %v1851
      %v1924 = vpop.f32.mrf.mxu0
      %v1925 = vadd.f32 0.0, %v1924
      %v1926 = vpop.f32.mrf.mxu0
      %v1927 = vadd.f32 0.0, %v1926
      %1928 = vmatmul.bf16.gmra.mxu0 %v1854
      %v1929 = vpop.f32.mrf.mxu0
      %v1930 = vadd.f32 0.0, %v1929
      %v1931 = vpop.f32.mrf.mxu0
      %v1932 = vadd.f32 0.0, %v1931
      %1933 = vmatmul.bf16.gmra.mxu0 %v1857
      %v1934 = vpop.f32.mrf.mxu0
      %v1935 = vadd.f32 0.0, %v1934
      %v1936 = vpop.f32.mrf.mxu0
      %v1937 = vadd.f32 0.0, %v1936
      %1938 = vmatmul.bf16.gmra.mxu0 %v1860
      %v1939 = vpop.f32.mrf.mxu0
      %v1940 = vadd.f32 0.0, %v1939
      %v1941 = vpop.f32.mrf.mxu0
      %v1942 = vadd.f32 0.0, %v1941
      %1943 = vmatmul.bf16.gmra.mxu0 %v1863
      %v1944 = vpop.f32.mrf.mxu0
      %v1945 = vadd.f32 0.0, %v1944
      %v1946 = vpop.f32.mrf.mxu0
      %v1947 = vadd.f32 0.0, %v1946
      %1948 = vmatmul.bf16.gmra.mxu0 %v1866
      %v1949 = vpop.f32.mrf.mxu0
      %v1950 = vadd.f32 0.0, %v1949
      %v1951 = vpop.f32.mrf.mxu0
      %v1952 = vadd.f32 0.0, %v1951
      %1953 = vmatmul.bf16.gmra.mxu0 %v1869
      %v1954 = vpop.f32.mrf.mxu0
      %v1955 = vadd.f32 0.0, %v1954
      %v1956 = vpop.f32.mrf.mxu0
      %v1957 = vadd.f32 0.0, %v1956
      %1958 = vmatmul.bf16.gmra.mxu0 %v1872
      %v1959 = vpop.f32.mrf.mxu0
      %v1960 = vadd.f32 0.0, %v1959
      %v1961 = vpop.f32.mrf.mxu0
      %v1962 = vadd.f32 0.0, %v1961
      %1963 = vmatmul.bf16.gmra.mxu0 %v1875
      %v1964 = vpop.f32.mrf.mxu0
      %v1965 = vadd.f32 0.0, %v1964
      %v1966 = vpop.f32.mrf.mxu0
      %v1967 = vadd.f32 0.0, %v1966
      %1968 = vdwg.mxu0
      %v1969 = vadd.f32 %v1683, %v1890
      %v1970 = vadd.f32 %v1684, %v1892
      %v1971 = vadd.f32 %v1685, %v1895
      %v1972 = vadd.f32 %v1686, %v1897
      %v1973 = vadd.f32 %v1687, %v1900
      %v1974 = vadd.f32 %v1688, %v1902
      %v1975 = vadd.f32 %v1689, %v1905
      %v1976 = vadd.f32 %v1690, %v1907
      %v1977 = vadd.f32 %v1691, %v1910
      %v1978 = vadd.f32 %v1692, %v1912
      %v1979 = vadd.f32 %v1693, %v1915
      %v1980 = vadd.f32 %v1694, %v1917
      %v1981 = vadd.f32 %v1695, %v1920
      %v1982 = vadd.f32 %v1696, %v1922
      %v1983 = vadd.f32 %v1697, %v1925
      %v1984 = vadd.f32 %v1698, %v1927
      %v1985 = vadd.f32 %v1699, %v1930
      %v1986 = vadd.f32 %v1700, %v1932
      %v1987 = vadd.f32 %v1701, %v1935
      %v1988 = vadd.f32 %v1702, %v1937
      %v1989 = vadd.f32 %v1703, %v1940
      %v1990 = vadd.f32 %v1704, %v1942
      %v1991 = vadd.f32 %v1705, %v1945
      %v1992 = vadd.f32 %v1706, %v1947
      %v1993 = vadd.f32 %v1707, %v1950
      %v1994 = vadd.f32 %v1708, %v1952
      %v1995 = vadd.f32 %v1709, %v1955
      %v1996 = vadd.f32 %v1710, %v1957
      %v1997 = vadd.f32 %v1711, %v1960
      %v1998 = vadd.f32 %v1712, %v1962
      %v1999 = vadd.f32 %v1713, %v1965
      %v2000 = vadd.f32 %v1714, %v1967
      %v2001 = vld [vmem:[%s510] sm:$0xf]
      %v2002 = vld [vmem:[%s510 + $0x4] sm:$0xf]
      %v2003 = vld [vmem:[%s510 + $0xc] sm:$0xf]
      %v2004 = vld [vmem:[%s510 + $0x10] sm:$0xf]
      %v2005 = vld [vmem:[%s510 + $0x18] sm:$0xf]
      %v2006 = vld [vmem:[%s510 + $0x1c] sm:$0xf]
      %v2007 = vld [vmem:[%s510 + $0x24] sm:$0xf]
      %v2008 = vld [vmem:[%s510 + $0x28] sm:$0xf]
      %v2009 = vld [vmem:[%s510 + $0x30] sm:$0xf]
      %v2010 = vld [vmem:[%s510 + $0x34] sm:$0xf]
      %v2011 = vld [vmem:[%s510 + $0x3c] sm:$0xf]
      %v2012 = vld [vmem:[%s510 + $0x40] sm:$0xf]
      %v2013 = vld [vmem:[%s510 + $0x48] sm:$0xf]
      %v2014 = vld [vmem:[%s510 + $0x4c] sm:$0xf]
      %v2015 = vld [vmem:[%s510 + $0x54] sm:$0xf]
      %v2016 = vld [vmem:[%s510 + $0x58] sm:$0xf]
      %v2017 = vld [vmem:[%s510 + $0x60] sm:$0xf]
      %v2018 = vld [vmem:[%s510 + $0x64] sm:$0xf]
      %v2019 = vld [vmem:[%s510 + $0x6c] sm:$0xf]
      %v2020 = vld [vmem:[%s510 + $0x70] sm:$0xf]
      %v2021 = vld [vmem:[%s510 + $0x78] sm:$0xf]
      %v2022 = vld [vmem:[%s510 + $0x7c] sm:$0xf]
      %v2023 = vld [vmem:[%s510 + $0x84] sm:$0xf]
      %v2024 = vld [vmem:[%s510 + $0x88] sm:$0xf]
      %v2025 = vld [vmem:[%s510 + $0x90] sm:$0xf]
      %v2026 = vld [vmem:[%s510 + $0x94] sm:$0xf]
      %v2027 = vld [vmem:[%s510 + $0x9c] sm:$0xf]
      %v2028 = vld [vmem:[%s510 + $0xa0] sm:$0xf]
      %v2029 = vld [vmem:[%s510 + $0xa8] sm:$0xf]
      %v2030 = vld [vmem:[%s510 + $0xac] sm:$0xf]
      %v2031 = vld [vmem:[%s510 + $0xb4] sm:$0xf]
      %v2032 = vld [vmem:[%s510 + $0xb8] sm:$0xf]
      %s2033 = scalar_lea.vmem %s6, 8
      %v2034 = vld [vmem:[%s2033] sm:$0x3]
      %v2067 = vunpack.c.l.b16 %v2001
      %v2068 = vunpack.c.l.b16 %v2002
      %v2069 = vunpack.c.l.b16 %v2003
      %v2070 = vunpack.c.l.b16 %v2004
      %v2071 = vunpack.c.l.b16 %v2005
      %v2072 = vunpack.c.l.b16 %v2006
      %v2073 = vunpack.c.l.b16 %v2007
      %v2074 = vunpack.c.l.b16 %v2008
      %v2075 = vunpack.c.l.b16 %v2009
      %v2076 = vunpack.c.l.b16 %v2010
      %v2077 = vunpack.c.l.b16 %v2011
      %v2078 = vunpack.c.l.b16 %v2012
      %v2079 = vunpack.c.l.b16 %v2013
      %v2080 = vunpack.c.l.b16 %v2014
      %v2081 = vunpack.c.l.b16 %v2015
      %v2082 = vunpack.c.l.b16 %v2016
      %v2083 = vunpack.c.l.b16 %v2017
      %v2084 = vunpack.c.l.b16 %v2018
      %v2085 = vunpack.c.l.b16 %v2019
      %v2086 = vunpack.c.l.b16 %v2020
      %v2087 = vunpack.c.l.b16 %v2021
      %v2088 = vunpack.c.l.b16 %v2022
      %v2089 = vunpack.c.l.b16 %v2023
      %v2090 = vunpack.c.l.b16 %v2024
      %v2091 = vunpack.c.l.b16 %v2025
      %v2092 = vunpack.c.l.b16 %v2026
      %v2093 = vunpack.c.l.b16 %v2027
      %v2094 = vunpack.c.l.b16 %v2028
      %v2095 = vunpack.c.l.b16 %v2029
      %v2096 = vunpack.c.l.b16 %v2030
      %v2097 = vunpack.c.l.b16 %v2031
      %v2098 = vunpack.c.l.b16 %v2032
      %v2099 = vpack.c.b16 %v2068, %v2067
      %v2100 = vpack.c.b16 %v2070, %v2069
      %v2101 = vpack.c.b16 %v2072, %v2071
      %v2102 = vpack.c.b16 %v2074, %v2073
      %v2103 = vpack.c.b16 %v2076, %v2075
      %v2104 = vpack.c.b16 %v2078, %v2077
      %v2105 = vpack.c.b16 %v2080, %v2079
      %v2106 = vpack.c.b16 %v2082, %v2081
      %v2107 = vpack.c.b16 %v2084, %v2083
      %v2108 = vpack.c.b16 %v2086, %v2085
      %v2109 = vpack.c.b16 %v2088, %v2087
      %v2110 = vpack.c.b16 %v2090, %v2089
      %v2111 = vpack.c.b16 %v2092, %v2091
      %v2112 = vpack.c.b16 %v2094, %v2093
      %v2113 = vpack.c.b16 %v2096, %v2095
      %v2114 = vpack.c.b16 %v2098, %v2097
      %v2116 = vsel %vm693, %v2099, 0
      %v2119 = vsel %vm693, %v2100, 0
      %v2122 = vsel %vm693, %v2101, 0
      %v2125 = vsel %vm693, %v2102, 0
      %v2128 = vsel %vm693, %v2103, 0
      %v2131 = vsel %vm693, %v2104, 0
      %v2134 = vsel %vm693, %v2105, 0
      %v2137 = vsel %vm693, %v2106, 0
      %v2140 = vsel %vm693, %v2107, 0
      %v2143 = vsel %vm693, %v2108, 0
      %v2146 = vsel %vm693, %v2109, 0
      %v2149 = vsel %vm693, %v2110, 0
      %v2152 = vsel %vm693, %v2111, 0
      %v2155 = vsel %vm693, %v2112, 0
      %v2158 = vsel %vm693, %v2113, 0
      %v2161 = vsel %vm693, %v2114, 0
      %v2164 = vand.u32 %v2034, %v745
      %2166 = vmatpush.bf16.msra.mxu0 0
      %2167 = vmatpush.bf16.msra.mxu0 0
      %2168 = vmatpush.bf16.msra.mxu0 0
      %2169 = vmatpush.bf16.msra.mxu0 0
      %2170 = vmatpush.bf16.msra.mxu0 0
      %2171 = vmatpush.bf16.msra.mxu0 0
      %2172 = vmatpush.bf16.msra.mxu0 0
      %2173 = vmatpush.bf16.msra.mxu0 %v2164
      %2174 = vmatmul.bf16.gmra.mxu0 %v2116
      %v2175 = vpop.f32.mrf.mxu0
      %v2176 = vadd.f32 0.0, %v2175
      %v2177 = vpop.f32.mrf.mxu0
      %v2178 = vadd.f32 0.0, %v2177
      %2179 = vmatmul.bf16.gmra.mxu0 %v2119
      %v2180 = vpop.f32.mrf.mxu0
      %v2181 = vadd.f32 0.0, %v2180
      %v2182 = vpop.f32.mrf.mxu0
      %v2183 = vadd.f32 0.0, %v2182
      %2184 = vmatmul.bf16.gmra.mxu0 %v2122
      %v2185 = vpop.f32.mrf.mxu0
      %v2186 = vadd.f32 0.0, %v2185
      %v2187 = vpop.f32.mrf.mxu0
      %v2188 = vadd.f32 0.0, %v2187
      %2189 = vmatmul.bf16.gmra.mxu0 %v2125
      %v2190 = vpop.f32.mrf.mxu0
      %v2191 = vadd.f32 0.0, %v2190
      %v2192 = vpop.f32.mrf.mxu0
      %v2193 = vadd.f32 0.0, %v2192
      %2194 = vmatmul.bf16.gmra.mxu0 %v2128
      %v2195 = vpop.f32.mrf.mxu0
      %v2196 = vadd.f32 0.0, %v2195
      %v2197 = vpop.f32.mrf.mxu0
      %v2198 = vadd.f32 0.0, %v2197
      %2199 = vmatmul.bf16.gmra.mxu0 %v2131
      %v2200 = vpop.f32.mrf.mxu0
      %v2201 = vadd.f32 0.0, %v2200
      %v2202 = vpop.f32.mrf.mxu0
      %v2203 = vadd.f32 0.0, %v2202
      %2204 = vmatmul.bf16.gmra.mxu0 %v2134
      %v2205 = vpop.f32.mrf.mxu0
      %v2206 = vadd.f32 0.0, %v2205
      %v2207 = vpop.f32.mrf.mxu0
      %v2208 = vadd.f32 0.0, %v2207
      %2209 = vmatmul.bf16.gmra.mxu0 %v2137
      %v2210 = vpop.f32.mrf.mxu0
      %v2211 = vadd.f32 0.0, %v2210
      %v2212 = vpop.f32.mrf.mxu0
      %v2213 = vadd.f32 0.0, %v2212
      %2214 = vmatmul.bf16.gmra.mxu0 %v2140
      %v2215 = vpop.f32.mrf.mxu0
      %v2216 = vadd.f32 0.0, %v2215
      %v2217 = vpop.f32.mrf.mxu0
      %v2218 = vadd.f32 0.0, %v2217
      %2219 = vmatmul.bf16.gmra.mxu0 %v2143
      %v2220 = vpop.f32.mrf.mxu0
      %v2221 = vadd.f32 0.0, %v2220
      %v2222 = vpop.f32.mrf.mxu0
      %v2223 = vadd.f32 0.0, %v2222
      %2224 = vmatmul.bf16.gmra.mxu0 %v2146
      %v2225 = vpop.f32.mrf.mxu0
      %v2226 = vadd.f32 0.0, %v2225
      %v2227 = vpop.f32.mrf.mxu0
      %v2228 = vadd.f32 0.0, %v2227
      %2229 = vmatmul.bf16.gmra.mxu0 %v2149
      %v2230 = vpop.f32.mrf.mxu0
      %v2231 = vadd.f32 0.0, %v2230
      %v2232 = vpop.f32.mrf.mxu0
      %v2233 = vadd.f32 0.0, %v2232
      %2234 = vmatmul.bf16.gmra.mxu0 %v2152
      %v2235 = vpop.f32.mrf.mxu0
      %v2236 = vadd.f32 0.0, %v2235
      %v2237 = vpop.f32.mrf.mxu0
      %v2238 = vadd.f32 0.0, %v2237
      %2239 = vmatmul.bf16.gmra.mxu0 %v2155
      %v2240 = vpop.f32.mrf.mxu0
      %v2241 = vadd.f32 0.0, %v2240
      %v2242 = vpop.f32.mrf.mxu0
      %v2243 = vadd.f32 0.0, %v2242
      %2244 = vmatmul.bf16.gmra.mxu0 %v2158
      %v2245 = vpop.f32.mrf.mxu0
      %v2246 = vadd.f32 0.0, %v2245
      %v2247 = vpop.f32.mrf.mxu0
      %v2248 = vadd.f32 0.0, %v2247
      %2249 = vmatmul.bf16.gmra.mxu0 %v2161
      %v2250 = vpop.f32.mrf.mxu0
      %v2251 = vadd.f32 0.0, %v2250
      %v2252 = vpop.f32.mrf.mxu0
      %v2253 = vadd.f32 0.0, %v2252
      %2254 = vdwg.mxu0
      %v2255 = vadd.f32 %v1969, %v2176
      %v2256 = vadd.f32 %v1970, %v2178
      %v2257 = vadd.f32 %v1971, %v2181
      %v2258 = vadd.f32 %v1972, %v2183
      %v2259 = vadd.f32 %v1973, %v2186
      %v2260 = vadd.f32 %v1974, %v2188
      %v2261 = vadd.f32 %v1975, %v2191
      %v2262 = vadd.f32 %v1976, %v2193
      %v2263 = vadd.f32 %v1977, %v2196
      %v2264 = vadd.f32 %v1978, %v2198
      %v2265 = vadd.f32 %v1979, %v2201
      %v2266 = vadd.f32 %v1980, %v2203
      %v2267 = vadd.f32 %v1981, %v2206
      %v2268 = vadd.f32 %v1982, %v2208
      %v2269 = vadd.f32 %v1983, %v2211
      %v2270 = vadd.f32 %v1984, %v2213
      %v2271 = vadd.f32 %v1985, %v2216
      %v2272 = vadd.f32 %v1986, %v2218
      %v2273 = vadd.f32 %v1987, %v2221
      %v2274 = vadd.f32 %v1988, %v2223
      %v2275 = vadd.f32 %v1989, %v2226
      %v2276 = vadd.f32 %v1990, %v2228
      %v2277 = vadd.f32 %v1991, %v2231
      %v2278 = vadd.f32 %v1992, %v2233
      %v2279 = vadd.f32 %v1993, %v2236
      %v2280 = vadd.f32 %v1994, %v2238
      %v2281 = vadd.f32 %v1995, %v2241
      %v2282 = vadd.f32 %v1996, %v2243
      %v2283 = vadd.f32 %v1997, %v2246
      %v2284 = vadd.f32 %v1998, %v2248
      %v2285 = vadd.f32 %v1999, %v2251
      %v2286 = vadd.f32 %v2000, %v2253
      %v2287 = vld [vmem:[%s499] sm:$0xf]
      %v2288 = vld [vmem:[%s499 + $0x4] sm:$0xf]
      %v2289 = vld [vmem:[%s499 + $0x8] sm:$0x1]
      %v2290 = vld [vmem:[%s499 + $0xc] sm:$0xf]
      %v2291 = vld [vmem:[%s499 + $0x10] sm:$0xf]
      %v2292 = vld [vmem:[%s499 + $0x14] sm:$0x1]
      %v2293 = vld [vmem:[%s499 + $0x18] sm:$0xf]
      %v2294 = vld [vmem:[%s499 + $0x1c] sm:$0xf]
      %v2295 = vld [vmem:[%s499 + $0x20] sm:$0x1]
      %v2296 = vld [vmem:[%s499 + $0x24] sm:$0xf]
      %v2297 = vld [vmem:[%s499 + $0x28] sm:$0xf]
      %v2298 = vld [vmem:[%s499 + $0x2c] sm:$0x1]
      %v2299 = vld [vmem:[%s499 + $0x30] sm:$0xf]
      %v2300 = vld [vmem:[%s499 + $0x34] sm:$0xf]
      %v2301 = vld [vmem:[%s499 + $0x38] sm:$0x1]
      %v2302 = vld [vmem:[%s499 + $0x3c] sm:$0xf]
      %v2303 = vld [vmem:[%s499 + $0x40] sm:$0xf]
      %v2304 = vld [vmem:[%s499 + $0x44] sm:$0x1]
      %v2305 = vld [vmem:[%s499 + $0x48] sm:$0xf]
      %v2306 = vld [vmem:[%s499 + $0x4c] sm:$0xf]
      %v2307 = vld [vmem:[%s499 + $0x50] sm:$0x1]
      %v2308 = vld [vmem:[%s499 + $0x54] sm:$0xf]
      %v2309 = vld [vmem:[%s499 + $0x58] sm:$0xf]
      %v2310 = vld [vmem:[%s499 + $0x5c] sm:$0x1]
      %v2311 = vld [vmem:[%s499 + $0x60] sm:$0xf]
      %v2312 = vld [vmem:[%s499 + $0x64] sm:$0xf]
      %v2313 = vld [vmem:[%s499 + $0x68] sm:$0x1]
      %v2314 = vld [vmem:[%s499 + $0x6c] sm:$0xf]
      %v2315 = vld [vmem:[%s499 + $0x70] sm:$0xf]
      %v2316 = vld [vmem:[%s499 + $0x74] sm:$0x1]
      %v2317 = vld [vmem:[%s499 + $0x78] sm:$0xf]
      %v2318 = vld [vmem:[%s499 + $0x7c] sm:$0xf]
      %v2319 = vld [vmem:[%s499 + $0x80] sm:$0x1]
      %v2320 = vld [vmem:[%s499 + $0x84] sm:$0xf]
      %v2321 = vld [vmem:[%s499 + $0x88] sm:$0xf]
      %v2322 = vld [vmem:[%s499 + $0x8c] sm:$0x1]
      %v2323 = vld [vmem:[%s499 + $0x90] sm:$0xf]
      %v2324 = vld [vmem:[%s499 + $0x94] sm:$0xf]
      %v2325 = vld [vmem:[%s499 + $0x98] sm:$0x1]
      %v2326 = vld [vmem:[%s499 + $0x9c] sm:$0xf]
      %v2327 = vld [vmem:[%s499 + $0xa0] sm:$0xf]
      %v2328 = vld [vmem:[%s499 + $0xa4] sm:$0x1]
      %v2329 = vld [vmem:[%s499 + $0xa8] sm:$0xf]
      %v2330 = vld [vmem:[%s499 + $0xac] sm:$0xf]
      %v2331 = vld [vmem:[%s499 + $0xb0] sm:$0x1]
      %v2332 = vld [vmem:[%s499 + $0xb4] sm:$0xf]
      %v2333 = vld [vmem:[%s499 + $0xb8] sm:$0xf]
      %v2334 = vld [vmem:[%s499 + $0xbc] sm:$0x1]
      %v2336 = vshrl.u32 %v2287, 16
      %v2338 = vrot.slane %v2336, 4
      %v2339 = vshll.u32 %v2287, 16
      %v2341 = vrot.slane %v2339, 5
      %v2342 = vor.u32 %v2338, %v2341
      %v2343 = vrot.slane %v2342, 4
      %v2345 = vshll.u32 %v2288, 16
      %v2347 = vrot.slane %v2345, 5
      %v2348 = vsel %vm1108, %v2343, %v2347
      %v2349 = vshrl.u32 %v2288, 16
      %v2351 = vrot.slane %v2349, 4
      %v2352 = vor.u32 %v2351, %v2347
      %v2353 = vrot.slane %v2352, 4
      %v2355 = vshll.u32 %v2289, 16
      %v2357 = vrot.slane %v2355, 5
      %v2358 = vsel %vm1108, %v2353, %v2357
      %v2360 = vshrl.u32 %v2290, 16
      %v2362 = vrot.slane %v2360, 4
      %v2363 = vshll.u32 %v2290, 16
      %v2365 = vrot.slane %v2363, 5
      %v2366 = vor.u32 %v2362, %v2365
      %v2367 = vrot.slane %v2366, 4
      %v2369 = vshll.u32 %v2291, 16
      %v2371 = vrot.slane %v2369, 5
      %v2372 = vsel %vm1108, %v2367, %v2371
      %v2373 = vshrl.u32 %v2291, 16
      %v2375 = vrot.slane %v2373, 4
      %v2376 = vor.u32 %v2375, %v2371
      %v2377 = vrot.slane %v2376, 4
      %v2379 = vshll.u32 %v2292, 16
      %v2381 = vrot.slane %v2379, 5
      %v2382 = vsel %vm1108, %v2377, %v2381
      %v2384 = vshrl.u32 %v2293, 16
      %v2386 = vrot.slane %v2384, 4
      %v2387 = vshll.u32 %v2293, 16
      %v2389 = vrot.slane %v2387, 5
      %v2390 = vor.u32 %v2386, %v2389
      %v2391 = vrot.slane %v2390, 4
      %v2393 = vshll.u32 %v2294, 16
      %v2395 = vrot.slane %v2393, 5
      %v2396 = vsel %vm1108, %v2391, %v2395
      %v2397 = vshrl.u32 %v2294, 16
      %v2399 = vrot.slane %v2397, 4
      %v2400 = vor.u32 %v2399, %v2395
      %v2401 = vrot.slane %v2400, 4
      %v2403 = vshll.u32 %v2295, 16
      %v2405 = vrot.slane %v2403, 5
      %v2406 = vsel %vm1108, %v2401, %v2405
      %v2408 = vshrl.u32 %v2296, 16
      %v2410 = vrot.slane %v2408, 4
      %v2411 = vshll.u32 %v2296, 16
      %v2413 = vrot.slane %v2411, 5
      %v2414 = vor.u32 %v2410, %v2413
      %v2415 = vrot.slane %v2414, 4
      %v2417 = vshll.u32 %v2297, 16
      %v2419 = vrot.slane %v2417, 5
      %v2420 = vsel %vm1108, %v2415, %v2419
      %v2421 = vshrl.u32 %v2297, 16
      %v2423 = vrot.slane %v2421, 4
      %v2424 = vor.u32 %v2423, %v2419
      %v2425 = vrot.slane %v2424, 4
      %v2427 = vshll.u32 %v2298, 16
      %v2429 = vrot.slane %v2427, 5
      %v2430 = vsel %vm1108, %v2425, %v2429
      %v2432 = vshrl.u32 %v2299, 16
      %v2434 = vrot.slane %v2432, 4
      %v2435 = vshll.u32 %v2299, 16
      %v2437 = vrot.slane %v2435, 5
      %v2438 = vor.u32 %v2434, %v2437
      %v2439 = vrot.slane %v2438, 4
      %v2441 = vshll.u32 %v2300, 16
      %v2443 = vrot.slane %v2441, 5
      %v2444 = vsel %vm1108, %v2439, %v2443
      %v2445 = vshrl.u32 %v2300, 16
      %v2447 = vrot.slane %v2445, 4
      %v2448 = vor.u32 %v2447, %v2443
      %v2449 = vrot.slane %v2448, 4
      %v2451 = vshll.u32 %v2301, 16
      %v2453 = vrot.slane %v2451, 5
      %v2454 = vsel %vm1108, %v2449, %v2453
      %v2456 = vshrl.u32 %v2302, 16
      %v2458 = vrot.slane %v2456, 4
      %v2459 = vshll.u32 %v2302, 16
      %v2461 = vrot.slane %v2459, 5
      %v2462 = vor.u32 %v2458, %v2461
      %v2463 = vrot.slane %v2462, 4
      %v2465 = vshll.u32 %v2303, 16
      %v2467 = vrot.slane %v2465, 5
      %v2468 = vsel %vm1108, %v2463, %v2467
      %v2469 = vshrl.u32 %v2303, 16
      %v2471 = vrot.slane %v2469, 4
      %v2472 = vor.u32 %v2471, %v2467
      %v2473 = vrot.slane %v2472, 4
      %v2475 = vshll.u32 %v2304, 16
      %v2477 = vrot.slane %v2475, 5
      %v2478 = vsel %vm1108, %v2473, %v2477
      %v2480 = vshrl.u32 %v2305, 16
      %v2482 = vrot.slane %v2480, 4
      %v2483 = vshll.u32 %v2305, 16
      %v2485 = vrot.slane %v2483, 5
      %v2486 = vor.u32 %v2482, %v2485
      %v2487 = vrot.slane %v2486, 4
      %v2489 = vshll.u32 %v2306, 16
      %v2491 = vrot.slane %v2489, 5
      %v2492 = vsel %vm1108, %v2487, %v2491
      %v2493 = vshrl.u32 %v2306, 16
      %v2495 = vrot.slane %v2493, 4
      %v2496 = vor.u32 %v2495, %v2491
      %v2497 = vrot.slane %v2496, 4
      %v2499 = vshll.u32 %v2307, 16
      %v2501 = vrot.slane %v2499, 5
      %v2502 = vsel %vm1108, %v2497, %v2501
      %v2504 = vshrl.u32 %v2308, 16
      %v2506 = vrot.slane %v2504, 4
      %v2507 = vshll.u32 %v2308, 16
      %v2509 = vrot.slane %v2507, 5
      %v2510 = vor.u32 %v2506, %v2509
      %v2511 = vrot.slane %v2510, 4
      %v2513 = vshll.u32 %v2309, 16
      %v2515 = vrot.slane %v2513, 5
      %v2516 = vsel %vm1108, %v2511, %v2515
      %v2517 = vshrl.u32 %v2309, 16
      %v2519 = vrot.slane %v2517, 4
      %v2520 = vor.u32 %v2519, %v2515
      %v2521 = vrot.slane %v2520, 4
      %v2523 = vshll.u32 %v2310, 16
      %v2525 = vrot.slane %v2523, 5
      %v2526 = vsel %vm1108, %v2521, %v2525
      %v2528 = vshrl.u32 %v2311, 16
      %v2530 = vrot.slane %v2528, 4
      %v2531 = vshll.u32 %v2311, 16
      %v2533 = vrot.slane %v2531, 5
      %v2534 = vor.u32 %v2530, %v2533
      %v2535 = vrot.slane %v2534, 4
      %v2537 = vshll.u32 %v2312, 16
      %v2539 = vrot.slane %v2537, 5
      %v2540 = vsel %vm1108, %v2535, %v2539
      %v2541 = vshrl.u32 %v2312, 16
      %v2543 = vrot.slane %v2541, 4
      %v2544 = vor.u32 %v2543, %v2539
      %v2545 = vrot.slane %v2544, 4
      %v2547 = vshll.u32 %v2313, 16
      %v2549 = vrot.slane %v2547, 5
      %v2550 = vsel %vm1108, %v2545, %v2549
      %v2552 = vshrl.u32 %v2314, 16
      %v2554 = vrot.slane %v2552, 4
      %v2555 = vshll.u32 %v2314, 16
      %v2557 = vrot.slane %v2555, 5
      %v2558 = vor.u32 %v2554, %v2557
      %v2559 = vrot.slane %v2558, 4
      %v2561 = vshll.u32 %v2315, 16
      %v2563 = vrot.slane %v2561, 5
      %v2564 = vsel %vm1108, %v2559, %v2563
      %v2565 = vshrl.u32 %v2315, 16
      %v2567 = vrot.slane %v2565, 4
      %v2568 = vor.u32 %v2567, %v2563
      %v2569 = vrot.slane %v2568, 4
      %v2571 = vshll.u32 %v2316, 16
      %v2573 = vrot.slane %v2571, 5
      %v2574 = vsel %vm1108, %v2569, %v2573
      %v2576 = vshrl.u32 %v2317, 16
      %v2578 = vrot.slane %v2576, 4
      %v2579 = vshll.u32 %v2317, 16
      %v2581 = vrot.slane %v2579, 5
      %v2582 = vor.u32 %v2578, %v2581
      %v2583 = vrot.slane %v2582, 4
      %v2585 = vshll.u32 %v2318, 16
      %v2587 = vrot.slane %v2585, 5
      %v2588 = vsel %vm1108, %v2583, %v2587
      %v2589 = vshrl.u32 %v2318, 16
      %v2591 = vrot.slane %v2589, 4
      %v2592 = vor.u32 %v2591, %v2587
      %v2593 = vrot.slane %v2592, 4
      %v2595 = vshll.u32 %v2319, 16
      %v2597 = vrot.slane %v2595, 5
      %v2598 = vsel %vm1108, %v2593, %v2597
      %v2600 = vshrl.u32 %v2320, 16
      %v2602 = vrot.slane %v2600, 4
      %v2603 = vshll.u32 %v2320, 16
      %v2605 = vrot.slane %v2603, 5
      %v2606 = vor.u32 %v2602, %v2605
      %v2607 = vrot.slane %v2606, 4
      %v2609 = vshll.u32 %v2321, 16
      %v2611 = vrot.slane %v2609, 5
      %v2612 = vsel %vm1108, %v2607, %v2611
      %v2613 = vshrl.u32 %v2321, 16
      %v2615 = vrot.slane %v2613, 4
      %v2616 = vor.u32 %v2615, %v2611
      %v2617 = vrot.slane %v2616, 4
      %v2619 = vshll.u32 %v2322, 16
      %v2621 = vrot.slane %v2619, 5
      %v2622 = vsel %vm1108, %v2617, %v2621
      %v2624 = vshrl.u32 %v2323, 16
      %v2626 = vrot.slane %v2624, 4
      %v2627 = vshll.u32 %v2323, 16
      %v2629 = vrot.slane %v2627, 5
      %v2630 = vor.u32 %v2626, %v2629
      %v2631 = vrot.slane %v2630, 4
      %v2633 = vshll.u32 %v2324, 16
      %v2635 = vrot.slane %v2633, 5
      %v2636 = vsel %vm1108, %v2631, %v2635
      %v2637 = vshrl.u32 %v2324, 16
      %v2639 = vrot.slane %v2637, 4
      %v2640 = vor.u32 %v2639, %v2635
      %v2641 = vrot.slane %v2640, 4
      %v2643 = vshll.u32 %v2325, 16
      %v2645 = vrot.slane %v2643, 5
      %v2646 = vsel %vm1108, %v2641, %v2645
      %v2648 = vshrl.u32 %v2326, 16
      %v2650 = vrot.slane %v2648, 4
      %v2651 = vshll.u32 %v2326, 16
      %v2653 = vrot.slane %v2651, 5
      %v2654 = vor.u32 %v2650, %v2653
      %v2655 = vrot.slane %v2654, 4
      %v2657 = vshll.u32 %v2327, 16
      %v2659 = vrot.slane %v2657, 5
      %v2660 = vsel %vm1108, %v2655, %v2659
      %v2661 = vshrl.u32 %v2327, 16
      %v2663 = vrot.slane %v2661, 4
      %v2664 = vor.u32 %v2663, %v2659
      %v2665 = vrot.slane %v2664, 4
      %v2667 = vshll.u32 %v2328, 16
      %v2669 = vrot.slane %v2667, 5
      %v2670 = vsel %vm1108, %v2665, %v2669
      %v2672 = vshrl.u32 %v2329, 16
      %v2674 = vrot.slane %v2672, 4
      %v2675 = vshll.u32 %v2329, 16
      %v2677 = vrot.slane %v2675, 5
      %v2678 = vor.u32 %v2674, %v2677
      %v2679 = vrot.slane %v2678, 4
      %v2681 = vshll.u32 %v2330, 16
      %v2683 = vrot.slane %v2681, 5
      %v2684 = vsel %vm1108, %v2679, %v2683
      %v2685 = vshrl.u32 %v2330, 16
      %v2687 = vrot.slane %v2685, 4
      %v2688 = vor.u32 %v2687, %v2683
      %v2689 = vrot.slane %v2688, 4
      %v2691 = vshll.u32 %v2331, 16
      %v2693 = vrot.slane %v2691, 5
      %v2694 = vsel %vm1108, %v2689, %v2693
      %v2696 = vshrl.u32 %v2332, 16
      %v2698 = vrot.slane %v2696, 4
      %v2699 = vshll.u32 %v2332, 16
      %v2701 = vrot.slane %v2699, 5
      %v2702 = vor.u32 %v2698, %v2701
      %v2703 = vrot.slane %v2702, 4
      %v2705 = vshll.u32 %v2333, 16
      %v2707 = vrot.slane %v2705, 5
      %v2708 = vsel %vm1108, %v2703, %v2707
      %v2709 = vshrl.u32 %v2333, 16
      %v2711 = vrot.slane %v2709, 4
      %v2712 = vor.u32 %v2711, %v2707
      %v2713 = vrot.slane %v2712, 4
      %v2715 = vshll.u32 %v2334, 16
      %v2717 = vrot.slane %v2715, 5
      %v2718 = vsel %vm1108, %v2713, %v2717
      %s2719 = scalar_lea.vmem %s6, 10
      %v2720 = vld [vmem:[%s2719] sm:$0x3]
      %v2721 = vunpack.c.l.b16 %v2348
      %v2722 = vunpack.c.l.b16 %v2358
      %v2723 = vunpack.c.l.b16 %v2372
      %v2724 = vunpack.c.l.b16 %v2382
      %v2725 = vunpack.c.l.b16 %v2396
      %v2726 = vunpack.c.l.b16 %v2406
      %v2727 = vunpack.c.l.b16 %v2420
      %v2728 = vunpack.c.l.b16 %v2430
      %v2729 = vunpack.c.l.b16 %v2444
      %v2730 = vunpack.c.l.b16 %v2454
      %v2731 = vunpack.c.l.b16 %v2468
      %v2732 = vunpack.c.l.b16 %v2478
      %v2733 = vunpack.c.l.b16 %v2492
      %v2734 = vunpack.c.l.b16 %v2502
      %v2735 = vunpack.c.l.b16 %v2516
      %v2736 = vunpack.c.l.b16 %v2526
      %v2737 = vunpack.c.l.b16 %v2540
      %v2738 = vunpack.c.l.b16 %v2550
      %v2739 = vunpack.c.l.b16 %v2564
      %v2740 = vunpack.c.l.b16 %v2574
      %v2741 = vunpack.c.l.b16 %v2588
      %v2742 = vunpack.c.l.b16 %v2598
      %v2743 = vunpack.c.l.b16 %v2612
      %v2744 = vunpack.c.l.b16 %v2622
      %v2745 = vunpack.c.l.b16 %v2636
      %v2746 = vunpack.c.l.b16 %v2646
      %v2747 = vunpack.c.l.b16 %v2660
      %v2748 = vunpack.c.l.b16 %v2670
      %v2749 = vunpack.c.l.b16 %v2684
      %v2750 = vunpack.c.l.b16 %v2694
      %v2751 = vunpack.c.l.b16 %v2708
      %v2752 = vunpack.c.l.b16 %v2718
      %v2753 = vpack.c.b16 %v2722, %v2721
      %v2754 = vpack.c.b16 %v2724, %v2723
      %v2755 = vpack.c.b16 %v2726, %v2725
      %v2756 = vpack.c.b16 %v2728, %v2727
      %v2757 = vpack.c.b16 %v2730, %v2729
      %v2758 = vpack.c.b16 %v2732, %v2731
      %v2759 = vpack.c.b16 %v2734, %v2733
      %v2760 = vpack.c.b16 %v2736, %v2735
      %v2761 = vpack.c.b16 %v2738, %v2737
      %v2762 = vpack.c.b16 %v2740, %v2739
      %v2763 = vpack.c.b16 %v2742, %v2741
      %v2764 = vpack.c.b16 %v2744, %v2743
      %v2765 = vpack.c.b16 %v2746, %v2745
      %v2766 = vpack.c.b16 %v2748, %v2747
      %v2767 = vpack.c.b16 %v2750, %v2749
      %v2768 = vpack.c.b16 %v2752, %v2751
      %v2770 = vsel %vm693, %v2753, 0
      %v2773 = vsel %vm693, %v2754, 0
      %v2776 = vsel %vm693, %v2755, 0
      %v2779 = vsel %vm693, %v2756, 0
      %v2782 = vsel %vm693, %v2757, 0
      %v2785 = vsel %vm693, %v2758, 0
      %v2788 = vsel %vm693, %v2759, 0
      %v2791 = vsel %vm693, %v2760, 0
      %v2794 = vsel %vm693, %v2761, 0
      %v2797 = vsel %vm693, %v2762, 0
      %v2800 = vsel %vm693, %v2763, 0
      %v2803 = vsel %vm693, %v2764, 0
      %v2806 = vsel %vm693, %v2765, 0
      %v2809 = vsel %vm693, %v2766, 0
      %v2812 = vsel %vm693, %v2767, 0
      %v2815 = vsel %vm693, %v2768, 0
      %v2818 = vand.u32 %v2720, %v745
      %2820 = vmatpush.bf16.msra.mxu0 0
      %2821 = vmatpush.bf16.msra.mxu0 0
      %2822 = vmatpush.bf16.msra.mxu0 0
      %2823 = vmatpush.bf16.msra.mxu0 0
      %2824 = vmatpush.bf16.msra.mxu0 0
      %2825 = vmatpush.bf16.msra.mxu0 0
      %2826 = vmatpush.bf16.msra.mxu0 0
      %2827 = vmatpush.bf16.msra.mxu0 %v2818
      %2828 = vmatmul.bf16.gmra.mxu0 %v2770
      %v2829 = vpop.f32.mrf.mxu0
      %v2830 = vadd.f32 0.0, %v2829
      %v2831 = vpop.f32.mrf.mxu0
      %v2832 = vadd.f32 0.0, %v2831
      %2833 = vmatmul.bf16.gmra.mxu0 %v2773
      %v2834 = vpop.f32.mrf.mxu0
      %v2835 = vadd.f32 0.0, %v2834
      %v2836 = vpop.f32.mrf.mxu0
      %v2837 = vadd.f32 0.0, %v2836
      %2838 = vmatmul.bf16.gmra.mxu0 %v2776
      %v2839 = vpop.f32.mrf.mxu0
      %v2840 = vadd.f32 0.0, %v2839
      %v2841 = vpop.f32.mrf.mxu0
      %v2842 = vadd.f32 0.0, %v2841
      %2843 = vmatmul.bf16.gmra.mxu0 %v2779
      %v2844 = vpop.f32.mrf.mxu0
      %v2845 = vadd.f32 0.0, %v2844
      %v2846 = vpop.f32.mrf.mxu0
      %v2847 = vadd.f32 0.0, %v2846
      %2848 = vmatmul.bf16.gmra.mxu0 %v2782
      %v2849 = vpop.f32.mrf.mxu0
      %v2850 = vadd.f32 0.0, %v2849
      %v2851 = vpop.f32.mrf.mxu0
      %v2852 = vadd.f32 0.0, %v2851
      %2853 = vmatmul.bf16.gmra.mxu0 %v2785
      %v2854 = vpop.f32.mrf.mxu0
      %v2855 = vadd.f32 0.0, %v2854
      %v2856 = vpop.f32.mrf.mxu0
      %v2857 = vadd.f32 0.0, %v2856
      %2858 = vmatmul.bf16.gmra.mxu0 %v2788
      %v2859 = vpop.f32.mrf.mxu0
      %v2860 = vadd.f32 0.0, %v2859
      %v2861 = vpop.f32.mrf.mxu0
      %v2862 = vadd.f32 0.0, %v2861
      %2863 = vmatmul.bf16.gmra.mxu0 %v2791
      %v2864 = vpop.f32.mrf.mxu0
      %v2865 = vadd.f32 0.0, %v2864
      %v2866 = vpop.f32.mrf.mxu0
      %v2867 = vadd.f32 0.0, %v2866
      %2868 = vmatmul.bf16.gmra.mxu0 %v2794
      %v2869 = vpop.f32.mrf.mxu0
      %v2870 = vadd.f32 0.0, %v2869
      %v2871 = vpop.f32.mrf.mxu0
      %v2872 = vadd.f32 0.0, %v2871
      %2873 = vmatmul.bf16.gmra.mxu0 %v2797
      %v2874 = vpop.f32.mrf.mxu0
      %v2875 = vadd.f32 0.0, %v2874
      %v2876 = vpop.f32.mrf.mxu0
      %v2877 = vadd.f32 0.0, %v2876
      %2878 = vmatmul.bf16.gmra.mxu0 %v2800
      %v2879 = vpop.f32.mrf.mxu0
      %v2880 = vadd.f32 0.0, %v2879
      %v2881 = vpop.f32.mrf.mxu0
      %v2882 = vadd.f32 0.0, %v2881
      %2883 = vmatmul.bf16.gmra.mxu0 %v2803
      %v2884 = vpop.f32.mrf.mxu0
      %v2885 = vadd.f32 0.0, %v2884
      %v2886 = vpop.f32.mrf.mxu0
      %v2887 = vadd.f32 0.0, %v2886
      %2888 = vmatmul.bf16.gmra.mxu0 %v2806
      %v2889 = vpop.f32.mrf.mxu0
      %v2890 = vadd.f32 0.0, %v2889
      %v2891 = vpop.f32.mrf.mxu0
      %v2892 = vadd.f32 0.0, %v2891
      %2893 = vmatmul.bf16.gmra.mxu0 %v2809
      %v2894 = vpop.f32.mrf.mxu0
      %v2895 = vadd.f32 0.0, %v2894
      %v2896 = vpop.f32.mrf.mxu0
      %v2897 = vadd.f32 0.0, %v2896
      %2898 = vmatmul.bf16.gmra.mxu0 %v2812
      %v2899 = vpop.f32.mrf.mxu0
      %v2900 = vadd.f32 0.0, %v2899
      %v2901 = vpop.f32.mrf.mxu0
      %v2902 = vadd.f32 0.0, %v2901
      %2903 = vmatmul.bf16.gmra.mxu0 %v2815
      %v2904 = vpop.f32.mrf.mxu0
      %v2905 = vadd.f32 0.0, %v2904
      %v2906 = vpop.f32.mrf.mxu0
      %v2907 = vadd.f32 0.0, %v2906
      %2908 = vdwg.mxu0
      %v2909 = vadd.f32 %v2255, %v2830
      %v2910 = vadd.f32 %v2256, %v2832
      %v2911 = vadd.f32 %v2257, %v2835
      %v2912 = vadd.f32 %v2258, %v2837
      %v2913 = vadd.f32 %v2259, %v2840
      %v2914 = vadd.f32 %v2260, %v2842
      %v2915 = vadd.f32 %v2261, %v2845
      %v2916 = vadd.f32 %v2262, %v2847
      %v2917 = vadd.f32 %v2263, %v2850
      %v2918 = vadd.f32 %v2264, %v2852
      %v2919 = vadd.f32 %v2265, %v2855
      %v2920 = vadd.f32 %v2266, %v2857
      %v2921 = vadd.f32 %v2267, %v2860
      %v2922 = vadd.f32 %v2268, %v2862
      %v2923 = vadd.f32 %v2269, %v2865
      %v2924 = vadd.f32 %v2270, %v2867
      %v2925 = vadd.f32 %v2271, %v2870
      %v2926 = vadd.f32 %v2272, %v2872
      %v2927 = vadd.f32 %v2273, %v2875
      %v2928 = vadd.f32 %v2274, %v2877
      %v2929 = vadd.f32 %v2275, %v2880
      %v2930 = vadd.f32 %v2276, %v2882
      %v2931 = vadd.f32 %v2277, %v2885
      %v2932 = vadd.f32 %v2278, %v2887
      %v2933 = vadd.f32 %v2279, %v2890
      %v2934 = vadd.f32 %v2280, %v2892
      %v2935 = vadd.f32 %v2281, %v2895
      %v2936 = vadd.f32 %v2282, %v2897
      %v2937 = vadd.f32 %v2283, %v2900
      %v2938 = vadd.f32 %v2284, %v2902
      %v2939 = vadd.f32 %v2285, %v2905
      %v2940 = vadd.f32 %v2286, %v2907
      %v2941 = vld [vmem:[%s521] sm:$0xf]
      %v2942 = vld [vmem:[%s521 + $0x4] sm:$0xf]
      %v2943 = vld [vmem:[%s521 + $0xc] sm:$0xf]
      %v2944 = vld [vmem:[%s521 + $0x10] sm:$0xf]
      %v2945 = vld [vmem:[%s521 + $0x18] sm:$0xf]
      %v2946 = vld [vmem:[%s521 + $0x1c] sm:$0xf]
      %v2947 = vld [vmem:[%s521 + $0x24] sm:$0xf]
      %v2948 = vld [vmem:[%s521 + $0x28] sm:$0xf]
      %v2949 = vld [vmem:[%s521 + $0x30] sm:$0xf]
      %v2950 = vld [vmem:[%s521 + $0x34] sm:$0xf]
      %v2951 = vld [vmem:[%s521 + $0x3c] sm:$0xf]
      %v2952 = vld [vmem:[%s521 + $0x40] sm:$0xf]
      %v2953 = vld [vmem:[%s521 + $0x48] sm:$0xf]
      %v2954 = vld [vmem:[%s521 + $0x4c] sm:$0xf]
      %v2955 = vld [vmem:[%s521 + $0x54] sm:$0xf]
      %v2956 = vld [vmem:[%s521 + $0x58] sm:$0xf]
      %v2957 = vld [vmem:[%s521 + $0x60] sm:$0xf]
      %v2958 = vld [vmem:[%s521 + $0x64] sm:$0xf]
      %v2959 = vld [vmem:[%s521 + $0x6c] sm:$0xf]
      %v2960 = vld [vmem:[%s521 + $0x70] sm:$0xf]
      %v2961 = vld [vmem:[%s521 + $0x78] sm:$0xf]
      %v2962 = vld [vmem:[%s521 + $0x7c] sm:$0xf]
      %v2963 = vld [vmem:[%s521 + $0x84] sm:$0xf]
      %v2964 = vld [vmem:[%s521 + $0x88] sm:$0xf]
      %v2965 = vld [vmem:[%s521 + $0x90] sm:$0xf]
      %v2966 = vld [vmem:[%s521 + $0x94] sm:$0xf]
      %v2967 = vld [vmem:[%s521 + $0x9c] sm:$0xf]
      %v2968 = vld [vmem:[%s521 + $0xa0] sm:$0xf]
      %v2969 = vld [vmem:[%s521 + $0xa8] sm:$0xf]
      %v2970 = vld [vmem:[%s521 + $0xac] sm:$0xf]
      %v2971 = vld [vmem:[%s521 + $0xb4] sm:$0xf]
      %v2972 = vld [vmem:[%s521 + $0xb8] sm:$0xf]
      %s2973 = scalar_lea.vmem %s6, 12
      %v2974 = vld [vmem:[%s2973] sm:$0x3]
      %v3007 = vunpack.c.l.b16 %v2941
      %v3008 = vunpack.c.l.b16 %v2942
      %v3009 = vunpack.c.l.b16 %v2943
      %v3010 = vunpack.c.l.b16 %v2944
      %v3011 = vunpack.c.l.b16 %v2945
      %v3012 = vunpack.c.l.b16 %v2946
      %v3013 = vunpack.c.l.b16 %v2947
      %v3014 = vunpack.c.l.b16 %v2948
      %v3015 = vunpack.c.l.b16 %v2949
      %v3016 = vunpack.c.l.b16 %v2950
      %v3017 = vunpack.c.l.b16 %v2951
      %v3018 = vunpack.c.l.b16 %v2952
      %v3019 = vunpack.c.l.b16 %v2953
      %v3020 = vunpack.c.l.b16 %v2954
      %v3021 = vunpack.c.l.b16 %v2955
      %v3022 = vunpack.c.l.b16 %v2956
      %v3023 = vunpack.c.l.b16 %v2957
      %v3024 = vunpack.c.l.b16 %v2958
      %v3025 = vunpack.c.l.b16 %v2959
      %v3026 = vunpack.c.l.b16 %v2960
      %v3027 = vunpack.c.l.b16 %v2961
      %v3028 = vunpack.c.l.b16 %v2962
      %v3029 = vunpack.c.l.b16 %v2963
      %v3030 = vunpack.c.l.b16 %v2964
      %v3031 = vunpack.c.l.b16 %v2965
      %v3032 = vunpack.c.l.b16 %v2966
      %v3033 = vunpack.c.l.b16 %v2967
      %v3034 = vunpack.c.l.b16 %v2968
      %v3035 = vunpack.c.l.b16 %v2969
      %v3036 = vunpack.c.l.b16 %v2970
      %v3037 = vunpack.c.l.b16 %v2971
      %v3038 = vunpack.c.l.b16 %v2972
      %v3039 = vpack.c.b16 %v3008, %v3007
      %v3040 = vpack.c.b16 %v3010, %v3009
      %v3041 = vpack.c.b16 %v3012, %v3011
      %v3042 = vpack.c.b16 %v3014, %v3013
      %v3043 = vpack.c.b16 %v3016, %v3015
      %v3044 = vpack.c.b16 %v3018, %v3017
      %v3045 = vpack.c.b16 %v3020, %v3019
      %v3046 = vpack.c.b16 %v3022, %v3021
      %v3047 = vpack.c.b16 %v3024, %v3023
      %v3048 = vpack.c.b16 %v3026, %v3025
      %v3049 = vpack.c.b16 %v3028, %v3027
      %v3050 = vpack.c.b16 %v3030, %v3029
      %v3051 = vpack.c.b16 %v3032, %v3031
      %v3052 = vpack.c.b16 %v3034, %v3033
      %v3053 = vpack.c.b16 %v3036, %v3035
      %v3054 = vpack.c.b16 %v3038, %v3037
      %v3056 = vsel %vm693, %v3039, 0
      %v3059 = vsel %vm693, %v3040, 0
      %v3062 = vsel %vm693, %v3041, 0
      %v3065 = vsel %vm693, %v3042, 0
      %v3068 = vsel %vm693, %v3043, 0
      %v3071 = vsel %vm693, %v3044, 0
      %v3074 = vsel %vm693, %v3045, 0
      %v3077 = vsel %vm693, %v3046, 0
      %v3080 = vsel %vm693, %v3047, 0
      %v3083 = vsel %vm693, %v3048, 0
      %v3086 = vsel %vm693, %v3049, 0
      %v3089 = vsel %vm693, %v3050, 0
      %v3092 = vsel %vm693, %v3051, 0
      %v3095 = vsel %vm693, %v3052, 0
      %v3098 = vsel %vm693, %v3053, 0
      %v3101 = vsel %vm693, %v3054, 0
      %v3104 = vand.u32 %v2974, %v745
      %3106 = vmatpush.bf16.msra.mxu0 0
      %3107 = vmatpush.bf16.msra.mxu0 0
      %3108 = vmatpush.bf16.msra.mxu0 0
      %3109 = vmatpush.bf16.msra.mxu0 0
      %3110 = vmatpush.bf16.msra.mxu0 0
      %3111 = vmatpush.bf16.msra.mxu0 0
      %3112 = vmatpush.bf16.msra.mxu0 0
      %3113 = vmatpush.bf16.msra.mxu0 %v3104
      %3114 = vmatmul.bf16.gmra.mxu0 %v3056
      %v3115 = vpop.f32.mrf.mxu0
      %v3116 = vadd.f32 0.0, %v3115
      %v3117 = vpop.f32.mrf.mxu0
      %v3118 = vadd.f32 0.0, %v3117
      %3119 = vmatmul.bf16.gmra.mxu0 %v3059
      %v3120 = vpop.f32.mrf.mxu0
      %v3121 = vadd.f32 0.0, %v3120
      %v3122 = vpop.f32.mrf.mxu0
      %v3123 = vadd.f32 0.0, %v3122
      %3124 = vmatmul.bf16.gmra.mxu0 %v3062
      %v3125 = vpop.f32.mrf.mxu0
      %v3126 = vadd.f32 0.0, %v3125
      %v3127 = vpop.f32.mrf.mxu0
      %v3128 = vadd.f32 0.0, %v3127
      %3129 = vmatmul.bf16.gmra.mxu0 %v3065
      %v3130 = vpop.f32.mrf.mxu0
      %v3131 = vadd.f32 0.0, %v3130
      %v3132 = vpop.f32.mrf.mxu0
      %v3133 = vadd.f32 0.0, %v3132
      %3134 = vmatmul.bf16.gmra.mxu0 %v3068
      %v3135 = vpop.f32.mrf.mxu0
      %v3136 = vadd.f32 0.0, %v3135
      %v3137 = vpop.f32.mrf.mxu0
      %v3138 = vadd.f32 0.0, %v3137
      %3139 = vmatmul.bf16.gmra.mxu0 %v3071
      %v3140 = vpop.f32.mrf.mxu0
      %v3141 = vadd.f32 0.0, %v3140
      %v3142 = vpop.f32.mrf.mxu0
      %v3143 = vadd.f32 0.0, %v3142
      %3144 = vmatmul.bf16.gmra.mxu0 %v3074
      %v3145 = vpop.f32.mrf.mxu0
      %v3146 = vadd.f32 0.0, %v3145
      %v3147 = vpop.f32.mrf.mxu0
      %v3148 = vadd.f32 0.0, %v3147
      %3149 = vmatmul.bf16.gmra.mxu0 %v3077
      %v3150 = vpop.f32.mrf.mxu0
      %v3151 = vadd.f32 0.0, %v3150
      %v3152 = vpop.f32.mrf.mxu0
      %v3153 = vadd.f32 0.0, %v3152
      %3154 = vmatmul.bf16.gmra.mxu0 %v3080
      %v3155 = vpop.f32.mrf.mxu0
      %v3156 = vadd.f32 0.0, %v3155
      %v3157 = vpop.f32.mrf.mxu0
      %v3158 = vadd.f32 0.0, %v3157
      %3159 = vmatmul.bf16.gmra.mxu0 %v3083
      %v3160 = vpop.f32.mrf.mxu0
      %v3161 = vadd.f32 0.0, %v3160
      %v3162 = vpop.f32.mrf.mxu0
      %v3163 = vadd.f32 0.0, %v3162
      %3164 = vmatmul.bf16.gmra.mxu0 %v3086
      %v3165 = vpop.f32.mrf.mxu0
      %v3166 = vadd.f32 0.0, %v3165
      %v3167 = vpop.f32.mrf.mxu0
      %v3168 = vadd.f32 0.0, %v3167
      %3169 = vmatmul.bf16.gmra.mxu0 %v3089
      %v3170 = vpop.f32.mrf.mxu0
      %v3171 = vadd.f32 0.0, %v3170
      %v3172 = vpop.f32.mrf.mxu0
      %v3173 = vadd.f32 0.0, %v3172
      %3174 = vmatmul.bf16.gmra.mxu0 %v3092
      %v3175 = vpop.f32.mrf.mxu0
      %v3176 = vadd.f32 0.0, %v3175
      %v3177 = vpop.f32.mrf.mxu0
      %v3178 = vadd.f32 0.0, %v3177
      %3179 = vmatmul.bf16.gmra.mxu0 %v3095
      %v3180 = vpop.f32.mrf.mxu0
      %v3181 = vadd.f32 0.0, %v3180
      %v3182 = vpop.f32.mrf.mxu0
      %v3183 = vadd.f32 0.0, %v3182
      %3184 = vmatmul.bf16.gmra.mxu0 %v3098
      %v3185 = vpop.f32.mrf.mxu0
      %v3186 = vadd.f32 0.0, %v3185
      %v3187 = vpop.f32.mrf.mxu0
      %v3188 = vadd.f32 0.0, %v3187
      %3189 = vmatmul.bf16.gmra.mxu0 %v3101
      %v3190 = vpop.f32.mrf.mxu0
      %v3191 = vadd.f32 0.0, %v3190
      %v3192 = vpop.f32.mrf.mxu0
      %v3193 = vadd.f32 0.0, %v3192
      %3194 = vdwg.mxu0
      %v3195 = vadd.f32 %v2909, %v3116
      %v3196 = vadd.f32 %v2910, %v3118
      %v3197 = vadd.f32 %v2911, %v3121
      %v3198 = vadd.f32 %v2912, %v3123
      %v3199 = vadd.f32 %v2913, %v3126
      %v3200 = vadd.f32 %v2914, %v3128
      %v3201 = vadd.f32 %v2915, %v3131
      %v3202 = vadd.f32 %v2916, %v3133
      %v3203 = vadd.f32 %v2917, %v3136
      %v3204 = vadd.f32 %v2918, %v3138
      %v3205 = vadd.f32 %v2919, %v3141
      %v3206 = vadd.f32 %v2920, %v3143
      %v3207 = vadd.f32 %v2921, %v3146
      %v3208 = vadd.f32 %v2922, %v3148
      %v3209 = vadd.f32 %v2923, %v3151
      %v3210 = vadd.f32 %v2924, %v3153
      %v3211 = vadd.f32 %v2925, %v3156
      %v3212 = vadd.f32 %v2926, %v3158
      %v3213 = vadd.f32 %v2927, %v3161
      %v3214 = vadd.f32 %v2928, %v3163
      %v3215 = vadd.f32 %v2929, %v3166
      %v3216 = vadd.f32 %v2930, %v3168
      %v3217 = vadd.f32 %v2931, %v3171
      %v3218 = vadd.f32 %v2932, %v3173
      %v3219 = vadd.f32 %v2933, %v3176
      %v3220 = vadd.f32 %v2934, %v3178
      %v3221 = vadd.f32 %v2935, %v3181
      %v3222 = vadd.f32 %v2936, %v3183
      %v3223 = vadd.f32 %v2937, %v3186
      %v3224 = vadd.f32 %v2938, %v3188
      %v3225 = vadd.f32 %v2939, %v3191
      %v3226 = vadd.f32 %v2940, %v3193
      %v3227 = vld [vmem:[%s532] sm:$0xf]
      %v3228 = vld [vmem:[%s532 + $0x4] sm:$0xf]
      %v3229 = vld [vmem:[%s532 + $0xc] sm:$0xf]
      %v3230 = vld [vmem:[%s532 + $0x10] sm:$0xf]
      %v3231 = vld [vmem:[%s532 + $0x18] sm:$0xf]
      %v3232 = vld [vmem:[%s532 + $0x1c] sm:$0xf]
      %v3233 = vld [vmem:[%s532 + $0x24] sm:$0xf]
      %v3234 = vld [vmem:[%s532 + $0x28] sm:$0xf]
      %v3235 = vld [vmem:[%s532 + $0x30] sm:$0xf]
      %v3236 = vld [vmem:[%s532 + $0x34] sm:$0xf]
      %v3237 = vld [vmem:[%s532 + $0x3c] sm:$0xf]
      %v3238 = vld [vmem:[%s532 + $0x40] sm:$0xf]
      %v3239 = vld [vmem:[%s532 + $0x48] sm:$0xf]
      %v3240 = vld [vmem:[%s532 + $0x4c] sm:$0xf]
      %v3241 = vld [vmem:[%s532 + $0x54] sm:$0xf]
      %v3242 = vld [vmem:[%s532 + $0x58] sm:$0xf]
      %v3243 = vld [vmem:[%s532 + $0x60] sm:$0xf]
      %v3244 = vld [vmem:[%s532 + $0x64] sm:$0xf]
      %v3245 = vld [vmem:[%s532 + $0x6c] sm:$0xf]
      %v3246 = vld [vmem:[%s532 + $0x70] sm:$0xf]
      %v3247 = vld [vmem:[%s532 + $0x78] sm:$0xf]
      %v3248 = vld [vmem:[%s532 + $0x7c] sm:$0xf]
      %v3249 = vld [vmem:[%s532 + $0x84] sm:$0xf]
      %v3250 = vld [vmem:[%s532 + $0x88] sm:$0xf]
      %v3251 = vld [vmem:[%s532 + $0x90] sm:$0xf]
      %v3252 = vld [vmem:[%s532 + $0x94] sm:$0xf]
      %v3253 = vld [vmem:[%s532 + $0x9c] sm:$0xf]
      %v3254 = vld [vmem:[%s532 + $0xa0] sm:$0xf]
      %v3255 = vld [vmem:[%s532 + $0xa8] sm:$0xf]
      %v3256 = vld [vmem:[%s532 + $0xac] sm:$0xf]
      %v3257 = vld [vmem:[%s532 + $0xb4] sm:$0xf]
      %v3258 = vld [vmem:[%s532 + $0xb8] sm:$0xf]
      %s3259 = scalar_lea.vmem %s6, 14
      %v3260 = vld [vmem:[%s3259] sm:$0x3]
      %v3293 = vunpack.c.l.b16 %v3227
      %v3294 = vunpack.c.l.b16 %v3228
      %v3295 = vunpack.c.l.b16 %v3229
      %v3296 = vunpack.c.l.b16 %v3230
      %v3297 = vunpack.c.l.b16 %v3231
      %v3298 = vunpack.c.l.b16 %v3232
      %v3299 = vunpack.c.l.b16 %v3233
      %v3300 = vunpack.c.l.b16 %v3234
      %v3301 = vunpack.c.l.b16 %v3235
      %v3302 = vunpack.c.l.b16 %v3236
      %v3303 = vunpack.c.l.b16 %v3237
      %v3304 = vunpack.c.l.b16 %v3238
      %v3305 = vunpack.c.l.b16 %v3239
      %v3306 = vunpack.c.l.b16 %v3240
      %v3307 = vunpack.c.l.b16 %v3241
      %v3308 = vunpack.c.l.b16 %v3242
      %v3309 = vunpack.c.l.b16 %v3243
      %v3310 = vunpack.c.l.b16 %v3244
      %v3311 = vunpack.c.l.b16 %v3245
      %v3312 = vunpack.c.l.b16 %v3246
      %v3313 = vunpack.c.l.b16 %v3247
      %v3314 = vunpack.c.l.b16 %v3248
      %v3315 = vunpack.c.l.b16 %v3249
      %v3316 = vunpack.c.l.b16 %v3250
      %v3317 = vunpack.c.l.b16 %v3251
      %v3318 = vunpack.c.l.b16 %v3252
      %v3319 = vunpack.c.l.b16 %v3253
      %v3320 = vunpack.c.l.b16 %v3254
      %v3321 = vunpack.c.l.b16 %v3255
      %v3322 = vunpack.c.l.b16 %v3256
      %v3323 = vunpack.c.l.b16 %v3257
      %v3324 = vunpack.c.l.b16 %v3258
      %v3325 = vpack.c.b16 %v3294, %v3293
      %v3326 = vpack.c.b16 %v3296, %v3295
      %v3327 = vpack.c.b16 %v3298, %v3297
      %v3328 = vpack.c.b16 %v3300, %v3299
      %v3329 = vpack.c.b16 %v3302, %v3301
      %v3330 = vpack.c.b16 %v3304, %v3303
      %v3331 = vpack.c.b16 %v3306, %v3305
      %v3332 = vpack.c.b16 %v3308, %v3307
      %v3333 = vpack.c.b16 %v3310, %v3309
      %v3334 = vpack.c.b16 %v3312, %v3311
      %v3335 = vpack.c.b16 %v3314, %v3313
      %v3336 = vpack.c.b16 %v3316, %v3315
      %v3337 = vpack.c.b16 %v3318, %v3317
      %v3338 = vpack.c.b16 %v3320, %v3319
      %v3339 = vpack.c.b16 %v3322, %v3321
      %v3340 = vpack.c.b16 %v3324, %v3323
      %v3342 = vsel %vm693, %v3325, 0
      %v3345 = vsel %vm693, %v3326, 0
      %v3348 = vsel %vm693, %v3327, 0
      %v3351 = vsel %vm693, %v3328, 0
      %v3354 = vsel %vm693, %v3329, 0
      %v3357 = vsel %vm693, %v3330, 0
      %v3360 = vsel %vm693, %v3331, 0
      %v3363 = vsel %vm693, %v3332, 0
      %v3366 = vsel %vm693, %v3333, 0
      %v3369 = vsel %vm693, %v3334, 0
      %v3372 = vsel %vm693, %v3335, 0
      %v3375 = vsel %vm693, %v3336, 0
      %v3378 = vsel %vm693, %v3337, 0
      %v3381 = vsel %vm693, %v3338, 0
      %v3384 = vsel %vm693, %v3339, 0
      %v3387 = vsel %vm693, %v3340, 0
      %v3390 = vand.u32 %v3260, %v745
      %3392 = vmatpush.bf16.msra.mxu0 0
      %3393 = vmatpush.bf16.msra.mxu0 0
      %3394 = vmatpush.bf16.msra.mxu0 0
      %3395 = vmatpush.bf16.msra.mxu0 0
      %3396 = vmatpush.bf16.msra.mxu0 0
      %3397 = vmatpush.bf16.msra.mxu0 0
      %3398 = vmatpush.bf16.msra.mxu0 0
      %3399 = vmatpush.bf16.msra.mxu0 %v3390
      %3400 = vmatmul.bf16.gmra.mxu0 %v3342
      %v3401 = vpop.f32.mrf.mxu0
      %v3402 = vadd.f32 0.0, %v3401
      %v3403 = vpop.f32.mrf.mxu0
      %v3404 = vadd.f32 0.0, %v3403
      %3405 = vmatmul.bf16.gmra.mxu0 %v3345
      %v3406 = vpop.f32.mrf.mxu0
      %v3407 = vadd.f32 0.0, %v3406
      %v3408 = vpop.f32.mrf.mxu0
      %v3409 = vadd.f32 0.0, %v3408
      %3410 = vmatmul.bf16.gmra.mxu0 %v3348
      %v3411 = vpop.f32.mrf.mxu0
      %v3412 = vadd.f32 0.0, %v3411
      %v3413 = vpop.f32.mrf.mxu0
      %v3414 = vadd.f32 0.0, %v3413
      %3415 = vmatmul.bf16.gmra.mxu0 %v3351
      %v3416 = vpop.f32.mrf.mxu0
      %v3417 = vadd.f32 0.0, %v3416
      %v3418 = vpop.f32.mrf.mxu0
      %v3419 = vadd.f32 0.0, %v3418
      %3420 = vmatmul.bf16.gmra.mxu0 %v3354
      %v3421 = vpop.f32.mrf.mxu0
      %v3422 = vadd.f32 0.0, %v3421
      %v3423 = vpop.f32.mrf.mxu0
      %v3424 = vadd.f32 0.0, %v3423
      %3425 = vmatmul.bf16.gmra.mxu0 %v3357
      %v3426 = vpop.f32.mrf.mxu0
      %v3427 = vadd.f32 0.0, %v3426
      %v3428 = vpop.f32.mrf.mxu0
      %v3429 = vadd.f32 0.0, %v3428
      %3430 = vmatmul.bf16.gmra.mxu0 %v3360
      %v3431 = vpop.f32.mrf.mxu0
      %v3432 = vadd.f32 0.0, %v3431
      %v3433 = vpop.f32.mrf.mxu0
      %v3434 = vadd.f32 0.0, %v3433
      %3435 = vmatmul.bf16.gmra.mxu0 %v3363
      %v3436 = vpop.f32.mrf.mxu0
      %v3437 = vadd.f32 0.0, %v3436
      %v3438 = vpop.f32.mrf.mxu0
      %v3439 = vadd.f32 0.0, %v3438
      %3440 = vmatmul.bf16.gmra.mxu0 %v3366
      %v3441 = vpop.f32.mrf.mxu0
      %v3442 = vadd.f32 0.0, %v3441
      %v3443 = vpop.f32.mrf.mxu0
      %v3444 = vadd.f32 0.0, %v3443
      %3445 = vmatmul.bf16.gmra.mxu0 %v3369
      %v3446 = vpop.f32.mrf.mxu0
      %v3447 = vadd.f32 0.0, %v3446
      %v3448 = vpop.f32.mrf.mxu0
      %v3449 = vadd.f32 0.0, %v3448
      %3450 = vmatmul.bf16.gmra.mxu0 %v3372
      %v3451 = vpop.f32.mrf.mxu0
      %v3452 = vadd.f32 0.0, %v3451
      %v3453 = vpop.f32.mrf.mxu0
      %v3454 = vadd.f32 0.0, %v3453
      %3455 = vmatmul.bf16.gmra.mxu0 %v3375
      %v3456 = vpop.f32.mrf.mxu0
      %v3457 = vadd.f32 0.0, %v3456
      %v3458 = vpop.f32.mrf.mxu0
      %v3459 = vadd.f32 0.0, %v3458
      %3460 = vmatmul.bf16.gmra.mxu0 %v3378
      %v3461 = vpop.f32.mrf.mxu0
      %v3462 = vadd.f32 0.0, %v3461
      %v3463 = vpop.f32.mrf.mxu0
      %v3464 = vadd.f32 0.0, %v3463
      %3465 = vmatmul.bf16.gmra.mxu0 %v3381
      %v3466 = vpop.f32.mrf.mxu0
      %v3467 = vadd.f32 0.0, %v3466
      %v3468 = vpop.f32.mrf.mxu0
      %v3469 = vadd.f32 0.0, %v3468
      %3470 = vmatmul.bf16.gmra.mxu0 %v3384
      %v3471 = vpop.f32.mrf.mxu0
      %v3472 = vadd.f32 0.0, %v3471
      %v3473 = vpop.f32.mrf.mxu0
      %v3474 = vadd.f32 0.0, %v3473
      %3475 = vmatmul.bf16.gmra.mxu0 %v3387
      %v3476 = vpop.f32.mrf.mxu0
      %v3477 = vadd.f32 0.0, %v3476
      %v3478 = vpop.f32.mrf.mxu0
      %v3479 = vadd.f32 0.0, %v3478
      %3480 = vdwg.mxu0
      %v3481 = vadd.f32 %v3195, %v3402
      %v3482 = vadd.f32 %v3196, %v3404
      %v3483 = vadd.f32 %v3197, %v3407
      %v3484 = vadd.f32 %v3198, %v3409
      %v3485 = vadd.f32 %v3199, %v3412
      %v3486 = vadd.f32 %v3200, %v3414
      %v3487 = vadd.f32 %v3201, %v3417
      %v3488 = vadd.f32 %v3202, %v3419
      %v3489 = vadd.f32 %v3203, %v3422
      %v3490 = vadd.f32 %v3204, %v3424
      %v3491 = vadd.f32 %v3205, %v3427
      %v3492 = vadd.f32 %v3206, %v3429
      %v3493 = vadd.f32 %v3207, %v3432
      %v3494 = vadd.f32 %v3208, %v3434
      %v3495 = vadd.f32 %v3209, %v3437
      %v3496 = vadd.f32 %v3210, %v3439
      %v3497 = vadd.f32 %v3211, %v3442
      %v3498 = vadd.f32 %v3212, %v3444
      %v3499 = vadd.f32 %v3213, %v3447
      %v3500 = vadd.f32 %v3214, %v3449
      %v3501 = vadd.f32 %v3215, %v3452
      %v3502 = vadd.f32 %v3216, %v3454
      %v3503 = vadd.f32 %v3217, %v3457
      %v3504 = vadd.f32 %v3218, %v3459
      %v3505 = vadd.f32 %v3219, %v3462
      %v3506 = vadd.f32 %v3220, %v3464
      %v3507 = vadd.f32 %v3221, %v3467
      %v3508 = vadd.f32 %v3222, %v3469
      %v3509 = vadd.f32 %v3223, %v3472
      %v3510 = vadd.f32 %v3224, %v3474
      %v3511 = vadd.f32 %v3225, %v3477
      %v3512 = vadd.f32 %v3226, %v3479
      %v3513 = vld [vmem:[%s521] sm:$0xf]
      %v3514 = vld [vmem:[%s521 + $0x4] sm:$0xf]
      %v3515 = vld [vmem:[%s521 + $0x8] sm:$0x1]
      %v3516 = vld [vmem:[%s521 + $0xc] sm:$0xf]
      %v3517 = vld [vmem:[%s521 + $0x10] sm:$0xf]
      %v3518 = vld [vmem:[%s521 + $0x14] sm:$0x1]
      %v3519 = vld [vmem:[%s521 + $0x18] sm:$0xf]
      %v3520 = vld [vmem:[%s521 + $0x1c] sm:$0xf]
      %v3521 = vld [vmem:[%s521 + $0x20] sm:$0x1]
      %v3522 = vld [vmem:[%s521 + $0x24] sm:$0xf]
      %v3523 = vld [vmem:[%s521 + $0x28] sm:$0xf]
      %v3524 = vld [vmem:[%s521 + $0x2c] sm:$0x1]
      %v3525 = vld [vmem:[%s521 + $0x30] sm:$0xf]
      %v3526 = vld [vmem:[%s521 + $0x34] sm:$0xf]
      %v3527 = vld [vmem:[%s521 + $0x38] sm:$0x1]
      %v3528 = vld [vmem:[%s521 + $0x3c] sm:$0xf]
      %v3529 = vld [vmem:[%s521 + $0x40] sm:$0xf]
      %v3530 = vld [vmem:[%s521 + $0x44] sm:$0x1]
      %v3531 = vld [vmem:[%s521 + $0x48] sm:$0xf]
      %v3532 = vld [vmem:[%s521 + $0x4c] sm:$0xf]
      %v3533 = vld [vmem:[%s521 + $0x50] sm:$0x1]
      %v3534 = vld [vmem:[%s521 + $0x54] sm:$0xf]
      %v3535 = vld [vmem:[%s521 + $0x58] sm:$0xf]
      %v3536 = vld [vmem:[%s521 + $0x5c] sm:$0x1]
      %v3537 = vld [vmem:[%s521 + $0x60] sm:$0xf]
      %v3538 = vld [vmem:[%s521 + $0x64] sm:$0xf]
      %v3539 = vld [vmem:[%s521 + $0x68] sm:$0x1]
      %v3540 = vld [vmem:[%s521 + $0x6c] sm:$0xf]
      %v3541 = vld [vmem:[%s521 + $0x70] sm:$0xf]
      %v3542 = vld [vmem:[%s521 + $0x74] sm:$0x1]
      %v3543 = vld [vmem:[%s521 + $0x78] sm:$0xf]
      %v3544 = vld [vmem:[%s521 + $0x7c] sm:$0xf]
      %v3545 = vld [vmem:[%s521 + $0x80] sm:$0x1]
      %v3546 = vld [vmem:[%s521 + $0x84] sm:$0xf]
      %v3547 = vld [vmem:[%s521 + $0x88] sm:$0xf]
      %v3548 = vld [vmem:[%s521 + $0x8c] sm:$0x1]
      %v3549 = vld [vmem:[%s521 + $0x90] sm:$0xf]
      %v3550 = vld [vmem:[%s521 + $0x94] sm:$0xf]
      %v3551 = vld [vmem:[%s521 + $0x98] sm:$0x1]
      %v3552 = vld [vmem:[%s521 + $0x9c] sm:$0xf]
      %v3553 = vld [vmem:[%s521 + $0xa0] sm:$0xf]
      %v3554 = vld [vmem:[%s521 + $0xa4] sm:$0x1]
      %v3555 = vld [vmem:[%s521 + $0xa8] sm:$0xf]
      %v3556 = vld [vmem:[%s521 + $0xac] sm:$0xf]
      %v3557 = vld [vmem:[%s521 + $0xb0] sm:$0x1]
      %v3558 = vld [vmem:[%s521 + $0xb4] sm:$0xf]
      %v3559 = vld [vmem:[%s521 + $0xb8] sm:$0xf]
      %v3560 = vld [vmem:[%s521 + $0xbc] sm:$0x1]
      %v3562 = vshrl.u32 %v3513, 16
      %v3564 = vrot.slane %v3562, 4
      %v3565 = vshll.u32 %v3513, 16
      %v3567 = vrot.slane %v3565, 5
      %v3568 = vor.u32 %v3564, %v3567
      %v3569 = vrot.slane %v3568, 4
      %v3571 = vshll.u32 %v3514, 16
      %v3573 = vrot.slane %v3571, 5
      %v3574 = vsel %vm1108, %v3569, %v3573
      %v3575 = vshrl.u32 %v3514, 16
      %v3577 = vrot.slane %v3575, 4
      %v3578 = vor.u32 %v3577, %v3573
      %v3579 = vrot.slane %v3578, 4
      %v3581 = vshll.u32 %v3515, 16
      %v3583 = vrot.slane %v3581, 5
      %v3584 = vsel %vm1108, %v3579, %v3583
      %v3586 = vshrl.u32 %v3516, 16
      %v3588 = vrot.slane %v3586, 4
      %v3589 = vshll.u32 %v3516, 16
      %v3591 = vrot.slane %v3589, 5
      %v3592 = vor.u32 %v3588, %v3591
      %v3593 = vrot.slane %v3592, 4
      %v3595 = vshll.u32 %v3517, 16
      %v3597 = vrot.slane %v3595, 5
      %v3598 = vsel %vm1108, %v3593, %v3597
      %v3599 = vshrl.u32 %v3517, 16
      %v3601 = vrot.slane %v3599, 4
      %v3602 = vor.u32 %v3601, %v3597
      %v3603 = vrot.slane %v3602, 4
      %v3605 = vshll.u32 %v3518, 16
      %v3607 = vrot.slane %v3605, 5
      %v3608 = vsel %vm1108, %v3603, %v3607
      %v3610 = vshrl.u32 %v3519, 16
      %v3612 = vrot.slane %v3610, 4
      %v3613 = vshll.u32 %v3519, 16
      %v3615 = vrot.slane %v3613, 5
      %v3616 = vor.u32 %v3612, %v3615
      %v3617 = vrot.slane %v3616, 4
      %v3619 = vshll.u32 %v3520, 16
      %v3621 = vrot.slane %v3619, 5
      %v3622 = vsel %vm1108, %v3617, %v3621
      %v3623 = vshrl.u32 %v3520, 16
      %v3625 = vrot.slane %v3623, 4
      %v3626 = vor.u32 %v3625, %v3621
      %v3627 = vrot.slane %v3626, 4
      %v3629 = vshll.u32 %v3521, 16
      %v3631 = vrot.slane %v3629, 5
      %v3632 = vsel %vm1108, %v3627, %v3631
      %v3634 = vshrl.u32 %v3522, 16
      %v3636 = vrot.slane %v3634, 4
      %v3637 = vshll.u32 %v3522, 16
      %v3639 = vrot.slane %v3637, 5
      %v3640 = vor.u32 %v3636, %v3639
      %v3641 = vrot.slane %v3640, 4
      %v3643 = vshll.u32 %v3523, 16
      %v3645 = vrot.slane %v3643, 5
      %v3646 = vsel %vm1108, %v3641, %v3645
      %v3647 = vshrl.u32 %v3523, 16
      %v3649 = vrot.slane %v3647, 4
      %v3650 = vor.u32 %v3649, %v3645
      %v3651 = vrot.slane %v3650, 4
      %v3653 = vshll.u32 %v3524, 16
      %v3655 = vrot.slane %v3653, 5
      %v3656 = vsel %vm1108, %v3651, %v3655
      %v3658 = vshrl.u32 %v3525, 16
      %v3660 = vrot.slane %v3658, 4
      %v3661 = vshll.u32 %v3525, 16
      %v3663 = vrot.slane %v3661, 5
      %v3664 = vor.u32 %v3660, %v3663
      %v3665 = vrot.slane %v3664, 4
      %v3667 = vshll.u32 %v3526, 16
      %v3669 = vrot.slane %v3667, 5
      %v3670 = vsel %vm1108, %v3665, %v3669
      %v3671 = vshrl.u32 %v3526, 16
      %v3673 = vrot.slane %v3671, 4
      %v3674 = vor.u32 %v3673, %v3669
      %v3675 = vrot.slane %v3674, 4
      %v3677 = vshll.u32 %v3527, 16
      %v3679 = vrot.slane %v3677, 5
      %v3680 = vsel %vm1108, %v3675, %v3679
      %v3682 = vshrl.u32 %v3528, 16
      %v3684 = vrot.slane %v3682, 4
      %v3685 = vshll.u32 %v3528, 16
      %v3687 = vrot.slane %v3685, 5
      %v3688 = vor.u32 %v3684, %v3687
      %v3689 = vrot.slane %v3688, 4
      %v3691 = vshll.u32 %v3529, 16
      %v3693 = vrot.slane %v3691, 5
      %v3694 = vsel %vm1108, %v3689, %v3693
      %v3695 = vshrl.u32 %v3529, 16
      %v3697 = vrot.slane %v3695, 4
      %v3698 = vor.u32 %v3697, %v3693
      %v3699 = vrot.slane %v3698, 4
      %v3701 = vshll.u32 %v3530, 16
      %v3703 = vrot.slane %v3701, 5
      %v3704 = vsel %vm1108, %v3699, %v3703
      %v3706 = vshrl.u32 %v3531, 16
      %v3708 = vrot.slane %v3706, 4
      %v3709 = vshll.u32 %v3531, 16
      %v3711 = vrot.slane %v3709, 5
      %v3712 = vor.u32 %v3708, %v3711
      %v3713 = vrot.slane %v3712, 4
      %v3715 = vshll.u32 %v3532, 16
      %v3717 = vrot.slane %v3715, 5
      %v3718 = vsel %vm1108, %v3713, %v3717
      %v3719 = vshrl.u32 %v3532, 16
      %v3721 = vrot.slane %v3719, 4
      %v3722 = vor.u32 %v3721, %v3717
      %v3723 = vrot.slane %v3722, 4
      %v3725 = vshll.u32 %v3533, 16
      %v3727 = vrot.slane %v3725, 5
      %v3728 = vsel %vm1108, %v3723, %v3727
      %v3730 = vshrl.u32 %v3534, 16
      %v3732 = vrot.slane %v3730, 4
      %v3733 = vshll.u32 %v3534, 16
      %v3735 = vrot.slane %v3733, 5
      %v3736 = vor.u32 %v3732, %v3735
      %v3737 = vrot.slane %v3736, 4
      %v3739 = vshll.u32 %v3535, 16
      %v3741 = vrot.slane %v3739, 5
      %v3742 = vsel %vm1108, %v3737, %v3741
      %v3743 = vshrl.u32 %v3535, 16
      %v3745 = vrot.slane %v3743, 4
      %v3746 = vor.u32 %v3745, %v3741
      %v3747 = vrot.slane %v3746, 4
      %v3749 = vshll.u32 %v3536, 16
      %v3751 = vrot.slane %v3749, 5
      %v3752 = vsel %vm1108, %v3747, %v3751
      %v3754 = vshrl.u32 %v3537, 16
      %v3756 = vrot.slane %v3754, 4
      %v3757 = vshll.u32 %v3537, 16
      %v3759 = vrot.slane %v3757, 5
      %v3760 = vor.u32 %v3756, %v3759
      %v3761 = vrot.slane %v3760, 4
      %v3763 = vshll.u32 %v3538, 16
      %v3765 = vrot.slane %v3763, 5
      %v3766 = vsel %vm1108, %v3761, %v3765
      %v3767 = vshrl.u32 %v3538, 16
      %v3769 = vrot.slane %v3767, 4
      %v3770 = vor.u32 %v3769, %v3765
      %v3771 = vrot.slane %v3770, 4
      %v3773 = vshll.u32 %v3539, 16
      %v3775 = vrot.slane %v3773, 5
      %v3776 = vsel %vm1108, %v3771, %v3775
      %v3778 = vshrl.u32 %v3540, 16
      %v3780 = vrot.slane %v3778, 4
      %v3781 = vshll.u32 %v3540, 16
      %v3783 = vrot.slane %v3781, 5
      %v3784 = vor.u32 %v3780, %v3783
      %v3785 = vrot.slane %v3784, 4
      %v3787 = vshll.u32 %v3541, 16
      %v3789 = vrot.slane %v3787, 5
      %v3790 = vsel %vm1108, %v3785, %v3789
      %v3791 = vshrl.u32 %v3541, 16
      %v3793 = vrot.slane %v3791, 4
      %v3794 = vor.u32 %v3793, %v3789
      %v3795 = vrot.slane %v3794, 4
      %v3797 = vshll.u32 %v3542, 16
      %v3799 = vrot.slane %v3797, 5
      %v3800 = vsel %vm1108, %v3795, %v3799
      %v3802 = vshrl.u32 %v3543, 16
      %v3804 = vrot.slane %v3802, 4
      %v3805 = vshll.u32 %v3543, 16
      %v3807 = vrot.slane %v3805, 5
      %v3808 = vor.u32 %v3804, %v3807
      %v3809 = vrot.slane %v3808, 4
      %v3811 = vshll.u32 %v3544, 16
      %v3813 = vrot.slane %v3811, 5
      %v3814 = vsel %vm1108, %v3809, %v3813
      %v3815 = vshrl.u32 %v3544, 16
      %v3817 = vrot.slane %v3815, 4
      %v3818 = vor.u32 %v3817, %v3813
      %v3819 = vrot.slane %v3818, 4
      %v3821 = vshll.u32 %v3545, 16
      %v3823 = vrot.slane %v3821, 5
      %v3824 = vsel %vm1108, %v3819, %v3823
      %v3826 = vshrl.u32 %v3546, 16
      %v3828 = vrot.slane %v3826, 4
      %v3829 = vshll.u32 %v3546, 16
      %v3831 = vrot.slane %v3829, 5
      %v3832 = vor.u32 %v3828, %v3831
      %v3833 = vrot.slane %v3832, 4
      %v3835 = vshll.u32 %v3547, 16
      %v3837 = vrot.slane %v3835, 5
      %v3838 = vsel %vm1108, %v3833, %v3837
      %v3839 = vshrl.u32 %v3547, 16
      %v3841 = vrot.slane %v3839, 4
      %v3842 = vor.u32 %v3841, %v3837
      %v3843 = vrot.slane %v3842, 4
      %v3845 = vshll.u32 %v3548, 16
      %v3847 = vrot.slane %v3845, 5
      %v3848 = vsel %vm1108, %v3843, %v3847
      %v3850 = vshrl.u32 %v3549, 16
      %v3852 = vrot.slane %v3850, 4
      %v3853 = vshll.u32 %v3549, 16
      %v3855 = vrot.slane %v3853, 5
      %v3856 = vor.u32 %v3852, %v3855
      %v3857 = vrot.slane %v3856, 4
      %v3859 = vshll.u32 %v3550, 16
      %v3861 = vrot.slane %v3859, 5
      %v3862 = vsel %vm1108, %v3857, %v3861
      %v3863 = vshrl.u32 %v3550, 16
      %v3865 = vrot.slane %v3863, 4
      %v3866 = vor.u32 %v3865, %v3861
      %v3867 = vrot.slane %v3866, 4
      %v3869 = vshll.u32 %v3551, 16
      %v3871 = vrot.slane %v3869, 5
      %v3872 = vsel %vm1108, %v3867, %v3871
      %v3874 = vshrl.u32 %v3552, 16
      %v3876 = vrot.slane %v3874, 4
      %v3877 = vshll.u32 %v3552, 16
      %v3879 = vrot.slane %v3877, 5
      %v3880 = vor.u32 %v3876, %v3879
      %v3881 = vrot.slane %v3880, 4
      %v3883 = vshll.u32 %v3553, 16
      %v3885 = vrot.slane %v3883, 5
      %v3886 = vsel %vm1108, %v3881, %v3885
      %v3887 = vshrl.u32 %v3553, 16
      %v3889 = vrot.slane %v3887, 4
      %v3890 = vor.u32 %v3889, %v3885
      %v3891 = vrot.slane %v3890, 4
      %v3893 = vshll.u32 %v3554, 16
      %v3895 = vrot.slane %v3893, 5
      %v3896 = vsel %vm1108, %v3891, %v3895
      %v3898 = vshrl.u32 %v3555, 16
      %v3900 = vrot.slane %v3898, 4
      %v3901 = vshll.u32 %v3555, 16
      %v3903 = vrot.slane %v3901, 5
      %v3904 = vor.u32 %v3900, %v3903
      %v3905 = vrot.slane %v3904, 4
      %v3907 = vshll.u32 %v3556, 16
      %v3909 = vrot.slane %v3907, 5
      %v3910 = vsel %vm1108, %v3905, %v3909
      %v3911 = vshrl.u32 %v3556, 16
      %v3913 = vrot.slane %v3911, 4
      %v3914 = vor.u32 %v3913, %v3909
      %v3915 = vrot.slane %v3914, 4
      %v3917 = vshll.u32 %v3557, 16
      %v3919 = vrot.slane %v3917, 5
      %v3920 = vsel %vm1108, %v3915, %v3919
      %v3922 = vshrl.u32 %v3558, 16
      %v3924 = vrot.slane %v3922, 4
      %v3925 = vshll.u32 %v3558, 16
      %v3927 = vrot.slane %v3925, 5
      %v3928 = vor.u32 %v3924, %v3927
      %v3929 = vrot.slane %v3928, 4
      %v3931 = vshll.u32 %v3559, 16
      %v3933 = vrot.slane %v3931, 5
      %v3934 = vsel %vm1108, %v3929, %v3933
      %v3935 = vshrl.u32 %v3559, 16
      %v3937 = vrot.slane %v3935, 4
      %v3938 = vor.u32 %v3937, %v3933
      %v3939 = vrot.slane %v3938, 4
      %v3941 = vshll.u32 %v3560, 16
      %v3943 = vrot.slane %v3941, 5
      %v3944 = vsel %vm1108, %v3939, %v3943
      %s3945 = scalar_lea.vmem %s6, 16
      %v3946 = vld [vmem:[%s3945] sm:$0x3]
      %v3947 = vunpack.c.l.b16 %v3574
      %v3948 = vunpack.c.l.b16 %v3584
      %v3949 = vunpack.c.l.b16 %v3598
      %v3950 = vunpack.c.l.b16 %v3608
      %v3951 = vunpack.c.l.b16 %v3622
      %v3952 = vunpack.c.l.b16 %v3632
      %v3953 = vunpack.c.l.b16 %v3646
      %v3954 = vunpack.c.l.b16 %v3656
      %v3955 = vunpack.c.l.b16 %v3670
      %v3956 = vunpack.c.l.b16 %v3680
      %v3957 = vunpack.c.l.b16 %v3694
      %v3958 = vunpack.c.l.b16 %v3704
      %v3959 = vunpack.c.l.b16 %v3718
      %v3960 = vunpack.c.l.b16 %v3728
      %v3961 = vunpack.c.l.b16 %v3742
      %v3962 = vunpack.c.l.b16 %v3752
      %v3963 = vunpack.c.l.b16 %v3766
      %v3964 = vunpack.c.l.b16 %v3776
      %v3965 = vunpack.c.l.b16 %v3790
      %v3966 = vunpack.c.l.b16 %v3800
      %v3967 = vunpack.c.l.b16 %v3814
      %v3968 = vunpack.c.l.b16 %v3824
      %v3969 = vunpack.c.l.b16 %v3838
      %v3970 = vunpack.c.l.b16 %v3848
      %v3971 = vunpack.c.l.b16 %v3862
      %v3972 = vunpack.c.l.b16 %v3872
      %v3973 = vunpack.c.l.b16 %v3886
      %v3974 = vunpack.c.l.b16 %v3896
      %v3975 = vunpack.c.l.b16 %v3910
      %v3976 = vunpack.c.l.b16 %v3920
      %v3977 = vunpack.c.l.b16 %v3934
      %v3978 = vunpack.c.l.b16 %v3944
      %v3979 = vpack.c.b16 %v3948, %v3947
      %v3980 = vpack.c.b16 %v3950, %v3949
      %v3981 = vpack.c.b16 %v3952, %v3951
      %v3982 = vpack.c.b16 %v3954, %v3953
      %v3983 = vpack.c.b16 %v3956, %v3955
      %v3984 = vpack.c.b16 %v3958, %v3957
      %v3985 = vpack.c.b16 %v3960, %v3959
      %v3986 = vpack.c.b16 %v3962, %v3961
      %v3987 = vpack.c.b16 %v3964, %v3963
      %v3988 = vpack.c.b16 %v3966, %v3965
      %v3989 = vpack.c.b16 %v3968, %v3967
      %v3990 = vpack.c.b16 %v3970, %v3969
      %v3991 = vpack.c.b16 %v3972, %v3971
      %v3992 = vpack.c.b16 %v3974, %v3973
      %v3993 = vpack.c.b16 %v3976, %v3975
      %v3994 = vpack.c.b16 %v3978, %v3977
      %v3996 = vsel %vm693, %v3979, 0
      %v3999 = vsel %vm693, %v3980, 0
      %v4002 = vsel %vm693, %v3981, 0
      %v4005 = vsel %vm693, %v3982, 0
      %v4008 = vsel %vm693, %v3983, 0
      %v4011 = vsel %vm693, %v3984, 0
      %v4014 = vsel %vm693, %v3985, 0
      %v4017 = vsel %vm693, %v3986, 0
      %v4020 = vsel %vm693, %v3987, 0
      %v4023 = vsel %vm693, %v3988, 0
      %v4026 = vsel %vm693, %v3989, 0
      %v4029 = vsel %vm693, %v3990, 0
      %v4032 = vsel %vm693, %v3991, 0
      %v4035 = vsel %vm693, %v3992, 0
      %v4038 = vsel %vm693, %v3993, 0
      %v4041 = vsel %vm693, %v3994, 0
      %v4044 = vand.u32 %v3946, %v745
      %4046 = vmatpush.bf16.msra.mxu0 0
      %4047 = vmatpush.bf16.msra.mxu0 0
      %4048 = vmatpush.bf16.msra.mxu0 0
      %4049 = vmatpush.bf16.msra.mxu0 0
      %4050 = vmatpush.bf16.msra.mxu0 0
      %4051 = vmatpush.bf16.msra.mxu0 0
      %4052 = vmatpush.bf16.msra.mxu0 0
      %4053 = vmatpush.bf16.msra.mxu0 %v4044
      %4054 = vmatmul.bf16.gmra.mxu0 %v3996
      %v4055 = vpop.f32.mrf.mxu0
      %v4056 = vadd.f32 0.0, %v4055
      %v4057 = vpop.f32.mrf.mxu0
      %v4058 = vadd.f32 0.0, %v4057
      %4059 = vmatmul.bf16.gmra.mxu0 %v3999
      %v4060 = vpop.f32.mrf.mxu0
      %v4061 = vadd.f32 0.0, %v4060
      %v4062 = vpop.f32.mrf.mxu0
      %v4063 = vadd.f32 0.0, %v4062
      %4064 = vmatmul.bf16.gmra.mxu0 %v4002
      %v4065 = vpop.f32.mrf.mxu0
      %v4066 = vadd.f32 0.0, %v4065
      %v4067 = vpop.f32.mrf.mxu0
      %v4068 = vadd.f32 0.0, %v4067
      %4069 = vmatmul.bf16.gmra.mxu0 %v4005
      %v4070 = vpop.f32.mrf.mxu0
      %v4071 = vadd.f32 0.0, %v4070
      %v4072 = vpop.f32.mrf.mxu0
      %v4073 = vadd.f32 0.0, %v4072
      %4074 = vmatmul.bf16.gmra.mxu0 %v4008
      %v4075 = vpop.f32.mrf.mxu0
      %v4076 = vadd.f32 0.0, %v4075
      %v4077 = vpop.f32.mrf.mxu0
      %v4078 = vadd.f32 0.0, %v4077
      %4079 = vmatmul.bf16.gmra.mxu0 %v4011
      %v4080 = vpop.f32.mrf.mxu0
      %v4081 = vadd.f32 0.0, %v4080
      %v4082 = vpop.f32.mrf.mxu0
      %v4083 = vadd.f32 0.0, %v4082
      %4084 = vmatmul.bf16.gmra.mxu0 %v4014
      %v4085 = vpop.f32.mrf.mxu0
      %v4086 = vadd.f32 0.0, %v4085
      %v4087 = vpop.f32.mrf.mxu0
      %v4088 = vadd.f32 0.0, %v4087
      %4089 = vmatmul.bf16.gmra.mxu0 %v4017
      %v4090 = vpop.f32.mrf.mxu0
      %v4091 = vadd.f32 0.0, %v4090
      %v4092 = vpop.f32.mrf.mxu0
      %v4093 = vadd.f32 0.0, %v4092
      %4094 = vmatmul.bf16.gmra.mxu0 %v4020
      %v4095 = vpop.f32.mrf.mxu0
      %v4096 = vadd.f32 0.0, %v4095
      %v4097 = vpop.f32.mrf.mxu0
      %v4098 = vadd.f32 0.0, %v4097
      %4099 = vmatmul.bf16.gmra.mxu0 %v4023
      %v4100 = vpop.f32.mrf.mxu0
      %v4101 = vadd.f32 0.0, %v4100
      %v4102 = vpop.f32.mrf.mxu0
      %v4103 = vadd.f32 0.0, %v4102
      %4104 = vmatmul.bf16.gmra.mxu0 %v4026
      %v4105 = vpop.f32.mrf.mxu0
      %v4106 = vadd.f32 0.0, %v4105
      %v4107 = vpop.f32.mrf.mxu0
      %v4108 = vadd.f32 0.0, %v4107
      %4109 = vmatmul.bf16.gmra.mxu0 %v4029
      %v4110 = vpop.f32.mrf.mxu0
      %v4111 = vadd.f32 0.0, %v4110
      %v4112 = vpop.f32.mrf.mxu0
      %v4113 = vadd.f32 0.0, %v4112
      %4114 = vmatmul.bf16.gmra.mxu0 %v4032
      %v4115 = vpop.f32.mrf.mxu0
      %v4116 = vadd.f32 0.0, %v4115
      %v4117 = vpop.f32.mrf.mxu0
      %v4118 = vadd.f32 0.0, %v4117
      %4119 = vmatmul.bf16.gmra.mxu0 %v4035
      %v4120 = vpop.f32.mrf.mxu0
      %v4121 = vadd.f32 0.0, %v4120
      %v4122 = vpop.f32.mrf.mxu0
      %v4123 = vadd.f32 0.0, %v4122
      %4124 = vmatmul.bf16.gmra.mxu0 %v4038
      %v4125 = vpop.f32.mrf.mxu0
      %v4126 = vadd.f32 0.0, %v4125
      %v4127 = vpop.f32.mrf.mxu0
      %v4128 = vadd.f32 0.0, %v4127
      %4129 = vmatmul.bf16.gmra.mxu0 %v4041
      %v4130 = vpop.f32.mrf.mxu0
      %v4131 = vadd.f32 0.0, %v4130
      %v4132 = vpop.f32.mrf.mxu0
      %v4133 = vadd.f32 0.0, %v4132
      %4134 = vdwg.mxu0
      %v4135 = vadd.f32 %v3481, %v4056
      %v4136 = vadd.f32 %v3482, %v4058
      %v4137 = vadd.f32 %v3483, %v4061
      %v4138 = vadd.f32 %v3484, %v4063
      %v4139 = vadd.f32 %v3485, %v4066
      %v4140 = vadd.f32 %v3486, %v4068
      %v4141 = vadd.f32 %v3487, %v4071
      %v4142 = vadd.f32 %v3488, %v4073
      %v4143 = vadd.f32 %v3489, %v4076
      %v4144 = vadd.f32 %v3490, %v4078
      %v4145 = vadd.f32 %v3491, %v4081
      %v4146 = vadd.f32 %v3492, %v4083
      %v4147 = vadd.f32 %v3493, %v4086
      %v4148 = vadd.f32 %v3494, %v4088
      %v4149 = vadd.f32 %v3495, %v4091
      %v4150 = vadd.f32 %v3496, %v4093
      %v4151 = vadd.f32 %v3497, %v4096
      %v4152 = vadd.f32 %v3498, %v4098
      %v4153 = vadd.f32 %v3499, %v4101
      %v4154 = vadd.f32 %v3500, %v4103
      %v4155 = vadd.f32 %v3501, %v4106
      %v4156 = vadd.f32 %v3502, %v4108
      %v4157 = vadd.f32 %v3503, %v4111
      %v4158 = vadd.f32 %v3504, %v4113
      %v4159 = vadd.f32 %v3505, %v4116
      %v4160 = vadd.f32 %v3506, %v4118
      %v4161 = vadd.f32 %v3507, %v4121
      %v4162 = vadd.f32 %v3508, %v4123
      %v4163 = vadd.f32 %v3509, %v4126
      %v4164 = vadd.f32 %v3510, %v4128
      %v4165 = vadd.f32 %v3511, %v4131
      %v4166 = vadd.f32 %v3512, %v4133
      %v4167 = vld [vmem:[%s7] sm:$0x1]
      %v4169 = vperm.slane %v4167, 0
      %v4171 = vadd.f32 %v4135, %v4169
      %v4172 = vadd.f32 %v4136, %v4169
      %v4173 = vadd.f32 %v4137, %v4169
      %v4174 = vadd.f32 %v4138, %v4169
      %v4175 = vadd.f32 %v4139, %v4169
      %v4176 = vadd.f32 %v4140, %v4169
      %v4177 = vadd.f32 %v4141, %v4169
      %v4178 = vadd.f32 %v4142, %v4169
      %v4179 = vadd.f32 %v4143, %v4169
      %v4180 = vadd.f32 %v4144, %v4169
      %v4181 = vadd.f32 %v4145, %v4169
      %v4182 = vadd.f32 %v4146, %v4169
      %v4183 = vadd.f32 %v4147, %v4169
      %v4184 = vadd.f32 %v4148, %v4169
      %v4185 = vadd.f32 %v4149, %v4169
      %v4186 = vadd.f32 %v4150, %v4169
      %v4187 = vadd.f32 %v4151, %v4169
      %v4188 = vadd.f32 %v4152, %v4169
      %v4189 = vadd.f32 %v4153, %v4169
      %v4190 = vadd.f32 %v4154, %v4169
      %v4191 = vadd.f32 %v4155, %v4169
      %v4192 = vadd.f32 %v4156, %v4169
      %v4193 = vadd.f32 %v4157, %v4169
      %v4194 = vadd.f32 %v4158, %v4169
      %v4195 = vadd.f32 %v4159, %v4169
      %v4196 = vadd.f32 %v4160, %v4169
      %v4197 = vadd.f32 %v4161, %v4169
      %v4198 = vadd.f32 %v4162, %v4169
      %v4199 = vadd.f32 %v4163, %v4169
      %v4200 = vadd.f32 %v4164, %v4169
      %v4201 = vadd.f32 %v4165, %v4169
      %v4202 = vadd.f32 %v4166, %v4169
      %v4203 = vpack.c.bf16 %v4171, %v4171
      %v4204 = vpack.c.bf16 %v4172, %v4172
      %v4205 = vpack.c.bf16 %v4173, %v4173
      %v4206 = vpack.c.bf16 %v4174, %v4174
      %v4207 = vpack.c.bf16 %v4175, %v4175
      %v4208 = vpack.c.bf16 %v4176, %v4176
      %v4209 = vpack.c.bf16 %v4177, %v4177
      %v4210 = vpack.c.bf16 %v4178, %v4178
      %v4211 = vpack.c.bf16 %v4179, %v4179
      %v4212 = vpack.c.bf16 %v4180, %v4180
      %v4213 = vpack.c.bf16 %v4181, %v4181
      %v4214 = vpack.c.bf16 %v4182, %v4182
      %v4215 = vpack.c.bf16 %v4183, %v4183
      %v4216 = vpack.c.bf16 %v4184, %v4184
      %v4217 = vpack.c.bf16 %v4185, %v4185
      %v4218 = vpack.c.bf16 %v4186, %v4186
      %v4219 = vpack.c.bf16 %v4187, %v4187
      %v4220 = vpack.c.bf16 %v4188, %v4188
      %v4221 = vpack.c.bf16 %v4189, %v4189
      %v4222 = vpack.c.bf16 %v4190, %v4190
      %v4223 = vpack.c.bf16 %v4191, %v4191
      %v4224 = vpack.c.bf16 %v4192, %v4192
      %v4225 = vpack.c.bf16 %v4193, %v4193
      %v4226 = vpack.c.bf16 %v4194, %v4194
      %v4227 = vpack.c.bf16 %v4195, %v4195
      %v4228 = vpack.c.bf16 %v4196, %v4196
      %v4229 = vpack.c.bf16 %v4197, %v4197
      %v4230 = vpack.c.bf16 %v4198, %v4198
      %v4231 = vpack.c.bf16 %v4199, %v4199
      %v4232 = vpack.c.bf16 %v4200, %v4200
      %v4233 = vpack.c.bf16 %v4201, %v4201
      %v4234 = vpack.c.bf16 %v4202, %v4202
      %vm4235 = vcmask 125952
      %4236 = vst.msk [vmem:[%s543] sm:$0xf] %vm4235, %v4203
      %4237 = vst.msk [vmem:[%s543 + $0x4] sm:$0xf] %vm4235, %v4204
      %4238 = vst.msk [vmem:[%s543 + $0x8] sm:$0xf] %vm4235, %v4205
      %4239 = vst.msk [vmem:[%s543 + $0xc] sm:$0xf] %vm4235, %v4206
      %4240 = vst.msk [vmem:[%s543 + $0x10] sm:$0xf] %vm4235, %v4207
      %4241 = vst.msk [vmem:[%s543 + $0x14] sm:$0xf] %vm4235, %v4208
      %4242 = vst.msk [vmem:[%s543 + $0x18] sm:$0xf] %vm4235, %v4209
      %4243 = vst.msk [vmem:[%s543 + $0x1c] sm:$0xf] %vm4235, %v4210
      %4244 = vst.msk [vmem:[%s543 + $0x20] sm:$0xf] %vm4235, %v4211
      %4245 = vst.msk [vmem:[%s543 + $0x24] sm:$0xf] %vm4235, %v4212
      %4246 = vst.msk [vmem:[%s543 + $0x28] sm:$0xf] %vm4235, %v4213
      %4247 = vst.msk [vmem:[%s543 + $0x2c] sm:$0xf] %vm4235, %v4214
      %4248 = vst.msk [vmem:[%s543 + $0x30] sm:$0xf] %vm4235, %v4215
      %4249 = vst.msk [vmem:[%s543 + $0x34] sm:$0xf] %vm4235, %v4216
      %4250 = vst.msk [vmem:[%s543 + $0x38] sm:$0xf] %vm4235, %v4217
      %4251 = vst.msk [vmem:[%s543 + $0x3c] sm:$0xf] %vm4235, %v4218
      %4252 = vst.msk [vmem:[%s543 + $0x40] sm:$0xf] %vm4235, %v4219
      %4253 = vst.msk [vmem:[%s543 + $0x44] sm:$0xf] %vm4235, %v4220
      %4254 = vst.msk [vmem:[%s543 + $0x48] sm:$0xf] %vm4235, %v4221
      %4255 = vst.msk [vmem:[%s543 + $0x4c] sm:$0xf] %vm4235, %v4222
      %4256 = vst.msk [vmem:[%s543 + $0x50] sm:$0xf] %vm4235, %v4223
      %4257 = vst.msk [vmem:[%s543 + $0x54] sm:$0xf] %vm4235, %v4224
      %4258 = vst.msk [vmem:[%s543 + $0x58] sm:$0xf] %vm4235, %v4225
      %4259 = vst.msk [vmem:[%s543 + $0x5c] sm:$0xf] %vm4235, %v4226
      %4260 = vst.msk [vmem:[%s543 + $0x60] sm:$0xf] %vm4235, %v4227
      %4261 = vst.msk [vmem:[%s543 + $0x64] sm:$0xf] %vm4235, %v4228
      %4262 = vst.msk [vmem:[%s543 + $0x68] sm:$0xf] %vm4235, %v4229
      %4263 = vst.msk [vmem:[%s543 + $0x6c] sm:$0xf] %vm4235, %v4230
      %4264 = vst.msk [vmem:[%s543 + $0x70] sm:$0xf] %vm4235, %v4231
      %4265 = vst.msk [vmem:[%s543 + $0x74] sm:$0xf] %vm4235, %v4232
      %4266 = vst.msk [vmem:[%s543 + $0x78] sm:$0xf] %vm4235, %v4233
      %4267 = vst.msk [vmem:[%s543 + $0x7c] sm:$0xf] %vm4235, %v4234
      %s4268 = smul.u32 16, %s24
      %p4269 = scmp.lt.s32.totalorder %s23, 1
      %s4270 = scalar_select %p4269, %s23, 1
      %p4271 = scmp.lt.s32.totalorder %s4268, 15
      %s4272 = scalar_select %p4271, %s4268, 15
      %s4273 = smul.addr %s4272, 2
      %s4274 = smul.addr %s4270, 32
      %s4275 = sadd.s32 %s4273, %s4274
      %s4276 = smul.addr %s4275, 4
      %s4277 = scalar_lea.vmem %s8, %s4276
      // Predicated region
      $region53: #{stem_conv_forward.2} parent=51 // pred_check
        %p4278 = pneg %p261
      $region54: #{stem_conv_forward.2} parent=51 // pred_check_branch
        %4280 = sbr.rel (%p4278) target = $region56
      $region55: #{stem_conv_forward.2} parent=51 // pred_region
        %s4281 = smul.u32 16, %s24
      $region56: #{stem_conv_forward.2} parent=51 // pred_fallthru
        _
    $region52: #{stem_conv_forward.2} parent=5 // pred_fallthru
      _
    %p4282 = scmp.le.s32.totalorder 2, %s14
    // Predicated region
    $region57: #{stem_conv_forward.2} parent=5 // pred_check
      %p4283 = pneg %p4282
    $region58: #{stem_conv_forward.2} parent=5 // pred_check_branch
      %4285 = sbr.rel (%p4283) target = $region60
    $region59: #{stem_conv_forward.2} parent=5 // pred_region
      %s4286 = ssub.s32 %s14, 2
      // Predicated region
      $region61: #{stem_conv_forward.2} parent=59 // pred_check
        %p4287 = pneg %p267
      $region62: #{stem_conv_forward.2} parent=59 // pred_check_branch
        %4289 = sbr.rel (%p4287) target = $region64
      $region63: #{stem_conv_forward.2} parent=59 // pred_region
        %s4290 = smul.u32 16, %s26
        %p4291 = scmp.lt.s32.totalorder %s25, 1
        %s4292 = scalar_select %p4291, %s25, 1
        %p4293 = scmp.lt.s32.totalorder %s4290, 15
        %s4294 = scalar_select %p4293, %s4290, 15
        %s4295 = smul.addr %s4294, 2
        %s4296 = smul.addr %s4292, 32
        %s4297 = sadd.s32 %s4295, %s4296
        %s4298 = smul.addr %s4297, 4
        %s4299 = scalar_lea.vmem %s8, %s4298
      $region64: #{stem_conv_forward.2} parent=59 // pred_fallthru
        _
    $region60: #{stem_conv_forward.2} parent=5 // pred_fallthru
      _
  $region6: #{stem_conv_forward.2} parent=0 // loop_footer
    %s18 = sadd.s32 1, %s14
  $region7: #{stem_conv_forward.2} parent=0 // loop_footer_branch
    %13 = sbr.rel target = $region3
  $region8: #{stem_conv_forward.2} parent=0 // loop_exit
    _

</llo_original>
